<compile_context>
chip_gen: v6e
topology: v6e:2x2x1
jax: 0.10.0
libtpu: 0.0.40
codegen_flags: <defaults>
</compile_context>

<pallas_src>
import functools

import jax
import jax.numpy as jnp
from jax.experimental import pallas as pl
from jax.experimental.pallas import tpu as pltpu


# ---------------------------------------------------------------------------
# small helpers (host-side padding / tiling choices)
# ---------------------------------------------------------------------------

def _round_up(x, m):
    return ((x + m - 1) // m) * m


def _pad2d(a, rows, cols):
    r, c = a.shape
    return jnp.pad(a, ((0, rows - r), (0, cols - c)))


def _choose_tile_m(m, max_tm):
    tm = min(max_tm, _round_up(m, 16))
    mp = _round_up(m, tm)
    return tm, mp


# ---------------------------------------------------------------------------
# Pallas kernels
# ---------------------------------------------------------------------------

def _mm_bias_kernel(x_ref, w_ref, b_ref, o_ref, *, relu):
    # x: [TM, Kp] bf16, w: [Kp, Np] bf16, b: [1, Np] f32 -> o: [TM, Np]
    acc = jnp.dot(x_ref[...], w_ref[...], preferred_element_type=jnp.float32)
    acc = acc + b_ref[...]
    if relu:
        acc = jnp.maximum(acc, 0.0)
    o_ref[...] = acc.astype(o_ref.dtype)


def matmul_bias(x, w, b, *, relu, out_dtype=jnp.float32, max_tile_m=512):
    """y = relu?(x @ w + b). M-tiled ('parallel'), K/N zero-padded to multiples
    of 128, bf16 operands with f32 MXU accumulation. Returns the (Mp, Np)
    padded result; callers trim rows / lanes as needed."""
    m, k = x.shape
    k2, n = w.shape
    assert k == k2
    kp = _round_up(k, 128)
    np_ = _round_up(n, 128)
    tm, mp = _choose_tile_m(m, max_tile_m)

    xp = _pad2d(x, mp, kp).astype(jnp.bfloat16)
    wp = _pad2d(w, kp, np_).astype(jnp.bfloat16)
    bp = jnp.pad(b.astype(jnp.float32), (0, np_ - n)).reshape(1, np_)

    return pl.pallas_call(
        functools.partial(_mm_bias_kernel, relu=relu),
        out_shape=jax.ShapeDtypeStruct((mp, np_), out_dtype),
        grid=(mp // tm,),
        in_specs=[
            pl.BlockSpec((tm, kp), lambda i: (i, 0)),
            pl.BlockSpec((kp, np_), lambda i: (0, 0)),   # weights stay resident
            pl.BlockSpec((1, np_), lambda i: (0, 0)),    # bias stays resident
        ],
        out_specs=pl.BlockSpec((tm, np_), lambda i: (i, 0)),
        compiler_params=pltpu.CompilerParams(
            dimension_semantics=("parallel",)),
    )(xp, wp, bp)


def _max4_kernel(a_ref, b_ref, c_ref, d_ref, o_ref):
    o_ref[...] = jnp.maximum(
        jnp.maximum(a_ref[...], b_ref[...]),
        jnp.maximum(c_ref[...], d_ref[...]),
    )


def maxpool2x2_rows(y, batch, oh, ow, *, max_tile_m=256):
    """2x2 / stride-2 max pool on a conv output kept in matmul-row layout:
    y is [batch*oh*ow, Np] (Np = lane-padded channel dim, multiple of 128).
    Returns [batch*(oh//2)*(ow//2), Np]. Lane-dense, M-tiled Pallas kernel."""
    np_ = y.shape[1]
    y6 = y.reshape(batch, oh // 2, 2, ow // 2, 2, np_)
    views = [
        y6[:, :, di, :, dj, :].reshape(-1, np_)
        for di in (0, 1) for dj in (0, 1)
    ]
    m = views[0].shape[0]
    tm, mp = _choose_tile_m(m, max_tile_m)
    views = [jnp.pad(v, ((0, mp - m), (0, 0))) for v in views]

    spec = pl.BlockSpec((tm, np_), lambda i: (i, 0))
    out = pl.pallas_call(
        _max4_kernel,
        out_shape=jax.ShapeDtypeStruct((mp, np_), y.dtype),
        grid=(mp // tm,),
        in_specs=[spec, spec, spec, spec],
        out_specs=spec,
        compiler_params=pltpu.CompilerParams(
            dimension_semantics=("parallel",)),
    )(*views)
    return out[:m]


def _fc_fused_kernel(x_ref, w1_ref, b1_ref, w2_ref, b2_ref, w3_ref, b3_ref,
                     o_ref):
    # fc1 -> relu -> fc2 -> relu -> fc3 in one kernel; intermediates never
    # leave VMEM/vregs (no HBM round trips, one launch).
    h = jnp.dot(x_ref[...], w1_ref[...], preferred_element_type=jnp.float32)
    h = jnp.maximum(h + b1_ref[...], 0.0).astype(jnp.bfloat16)
    h = jnp.dot(h, w2_ref[...], preferred_element_type=jnp.float32)
    h = jnp.maximum(h + b2_ref[...], 0.0).astype(jnp.bfloat16)
    o = jnp.dot(h, w3_ref[...], preferred_element_type=jnp.float32)
    o_ref[...] = (o + b3_ref[...]).astype(o_ref.dtype)


def fc_head(x, params, *, max_tile_m=256):
    """Fused fc1->relu->fc2->relu->fc3. x: [B, 400]."""
    b_, k1 = x.shape
    w1, bias1 = params["fc1_w"], params["fc1_b"]
    w2, bias2 = params["fc2_w"], params["fc2_b"]
    w3, bias3 = params["fc3_w"], params["fc3_b"]
    n1, n2, n3 = w1.shape[1], w2.shape[1], w3.shape[1]

    k1p = _round_up(k1, 128)
    n1p = _round_up(n1, 128)
    n2p = _round_up(n2, 128)
    n3p = _round_up(n3, 128)
    tm, mp = _choose_tile_m(b_, max_tile_m)

    xp = _pad2d(x, mp, k1p).astype(jnp.bfloat16)
    w1p = _pad2d(w1, k1p, n1p).astype(jnp.bfloat16)
    w2p = _pad2d(w2, n1p, n2p).astype(jnp.bfloat16)
    w3p = _pad2d(w3, n2p, n3p).astype(jnp.bfloat16)
    b1p = jnp.pad(bias1.astype(jnp.float32), (0, n1p - n1)).reshape(1, n1p)
    b2p = jnp.pad(bias2.astype(jnp.float32), (0, n2p - n2)).reshape(1, n2p)
    b3p = jnp.pad(bias3.astype(jnp.float32), (0, n3p - n3)).reshape(1, n3p)

    out = pl.pallas_call(
        _fc_fused_kernel,
        out_shape=jax.ShapeDtypeStruct((mp, n3p), jnp.float32),
        grid=(mp // tm,),
        in_specs=[
            pl.BlockSpec((tm, k1p), lambda i: (i, 0)),
            pl.BlockSpec((k1p, n1p), lambda i: (0, 0)),
            pl.BlockSpec((1, n1p), lambda i: (0, 0)),
            pl.BlockSpec((n1p, n2p), lambda i: (0, 0)),
            pl.BlockSpec((1, n2p), lambda i: (0, 0)),
            pl.BlockSpec((n2p, n3p), lambda i: (0, 0)),
            pl.BlockSpec((1, n3p), lambda i: (0, 0)),
        ],
        out_specs=pl.BlockSpec((tm, n3p), lambda i: (i, 0)),
        compiler_params=pltpu.CompilerParams(
            dimension_semantics=("parallel",)),
    )(xp, w1p, b1p, w2p, b2p, w3p, b3p)
    return out[:b_, :n3]


# ---------------------------------------------------------------------------
# Conv layer: im2col (NHWC, plain-JAX glue) + Pallas matmul(+relu) + Pallas pool
# ---------------------------------------------------------------------------

def conv2d_relu_pool(x_nhwc, weight, bias):
    """Valid (no-pad) conv with PyTorch weight layout [OC, C, kh, kw], ReLU
    fused into the matmul epilogue, then 2x2 maxpool on the lane-padded
    matmul output. Activations stay NHWC (no activation transposes)."""
    b_, h, w, c = x_nhwc.shape
    oc, c2, kh, kw = weight.shape
    assert c == c2
    oh, ow = h - kh + 1, w - kw + 1

    # im2col -> [B*OH*OW, kh*kw*C], feature order (i, j, c); the weight is
    # reordered once below to match, so no big-activation transpose is needed.
    cols = [x_nhwc[:, i:i + oh, j:j + ow, :]
            for i in range(kh) for j in range(kw)]
    patches = jnp.concatenate(cols, axis=-1).reshape(b_ * oh * ow, kh * kw * c)
    w2d = jnp.transpose(weight, (2, 3, 1, 0)).reshape(kh * kw * c, oc)

    y = matmul_bias(patches, w2d, bias, relu=True, out_dtype=jnp.bfloat16)
    y = y[:b_ * oh * ow]                        # trim padded rows, keep lane pad
    p = maxpool2x2_rows(y, b_, oh, ow)          # [B*(OH/2)*(OW/2), Np]
    return p[:, :oc].reshape(b_, oh // 2, ow // 2, oc)


# ---------------------------------------------------------------------------
# Parameter init (deterministic, PyTorch-style uniform bounds)
# ---------------------------------------------------------------------------

def _uniform(key, shape, bound):
    return jax.random.uniform(key, shape, jnp.float32, -bound, bound)


def init_params(key, num_classes=10):
    ks = jax.random.split(key, 10)
    params = {}
    fan = 3 * 5 * 5
    params["conv1_w"] = _uniform(ks[0], (6, 3, 5, 5), 1.0 / jnp.sqrt(fan))
    params["conv1_b"] = _uniform(ks[1], (6,), 1.0 / jnp.sqrt(fan))
    fan = 6 * 5 * 5
    params["conv2_w"] = _uniform(ks[2], (16, 6, 5, 5), 1.0 / jnp.sqrt(fan))
    params["conv2_b"] = _uniform(ks[3], (16,), 1.0 / jnp.sqrt(fan))
    fan = 16 * 5 * 5   # flatten size implied by forward on 32x32 input
    params["fc1_w"] = _uniform(ks[4], (fan, 120), 1.0 / jnp.sqrt(fan))
    params["fc1_b"] = _uniform(ks[5], (120,), 1.0 / jnp.sqrt(fan))
    params["fc2_w"] = _uniform(ks[6], (120, 84), 1.0 / jnp.sqrt(120))
    params["fc2_b"] = _uniform(ks[7], (84,), 1.0 / jnp.sqrt(120))
    params["fc3_w"] = _uniform(ks[8], (84, num_classes), 1.0 / jnp.sqrt(84))
    params["fc3_b"] = _uniform(ks[9], (num_classes,), 1.0 / jnp.sqrt(84))
    return params


# ---------------------------------------------------------------------------
# Forward pass (mirrors CNNClassifier.forward)
# ---------------------------------------------------------------------------

def cnn_classifier_forward(params, x_nchw):
    # One cheap layout change at the boundary; everything after is NHWC.
    x = jnp.transpose(x_nchw, (0, 2, 3, 1))                        # [B,32,32,3]
    x = conv2d_relu_pool(x, params["conv1_w"], params["conv1_b"])  # [B,14,14,6]
    x = conv2d_relu_pool(x, params["conv2_w"], params["conv2_b"])  # [B,5,5,16]
    # Flatten in PyTorch NCHW (c, h, w) order to match x.view(-1, C*H*W).
    b_ = x.shape[0]
    x = jnp.transpose(x, (0, 3, 1, 2)).reshape(b_, -1)             # [B, 400]
    return fc_head(x, params)                                      # [B, 10]


if __name__ == "__main__":
    key = jax.random.PRNGKey(0)
    k_params, k_x = jax.random.split(key)
    params = init_params(k_params, num_classes=10)
    # Input: NCHW, 32x32 spatial (required so flatten size = 16*5*5 = 400).
    x = jax.random.normal(k_x, (2, 3, 32, 32), jnp.float32)

    fwd = jax.jit(cnn_classifier_forward)
    out = fwd(params, x)
    out = jax.block_until_ready(out)
    assert out.shape == (2, 10), out.shape
    print("KERNEL_OK")
</pallas_src>

<mosaic_0001>
module attributes {stable_mosaic.version = 11 : i64} {
  func.func @_mm_bias_kernel(%arg0: i32, %arg1: memref<512x128xbf16, #tpu.memory_space<vmem>>, %arg2: memref<128x128xbf16, #tpu.memory_space<vmem>>, %arg3: memref<1x128xf32, #tpu.memory_space<vmem>>, %arg4: memref<512x128xbf16, #tpu.memory_space<vmem>>) attributes {dimension_semantics = [#tpu.dimension_semantics<parallel>], iteration_bounds = array<i64: 4>, scalar_prefetch = 0 : i64, scratch_operands = 0 : i64, tpu.core_type = #tpu.core_type<tc>, window_params = [{transform_indices = @transform_0, window_bounds = array<i64: 512, 128>}, {pipeline_mode = #tpu.pipeline_mode<synchronous>, transform_indices = @transform_1, window_bounds = array<i64: 128, 128>}, {pipeline_mode = #tpu.pipeline_mode<synchronous>, transform_indices = @transform_2, window_bounds = array<i64: 1, 128>}, {transform_indices = @transform_3, window_bounds = array<i64: 512, 128>}]} {
    %c0 = arith.constant 0 : index
    %c0_0 = arith.constant 0 : index
    %0 = vector.load %arg1[%c0, %c0_0] : memref<512x128xbf16, #tpu.memory_space<vmem>>, vector<512x128xbf16>
    %c0_1 = arith.constant 0 : index
    %c0_2 = arith.constant 0 : index
    %1 = vector.load %arg2[%c0_1, %c0_2] : memref<128x128xbf16, #tpu.memory_space<vmem>>, vector<128x128xbf16>
    %cst = arith.constant dense<0.000000e+00> : vector<512x128xf32>
    %2 = tpu.matmul %0, %1, %cst {dimension_numbers = #tpu.dot_dimension_numbers<[1], [0], [0], [1], [0, 0, 1, 1], [], []>} : vector<512x128xbf16>, vector<128x128xbf16>, vector<512x128xf32> -> vector<512x128xf32>
    %c0_3 = arith.constant 0 : index
    %c0_4 = arith.constant 0 : index
    %3 = vector.load %arg3[%c0_3, %c0_4] : memref<1x128xf32, #tpu.memory_space<vmem>>, vector<1x128xf32>
    %4 = vector.broadcast %3 : vector<1x128xf32> to vector<512x128xf32>
    %5 = arith.addf %2, %4 : vector<512x128xf32>
    %cst_5 = arith.constant 0.000000e+00 : f32
    %6 = vector.broadcast %cst_5 : f32 to vector<512x128xf32>
    %7 = arith.maximumf %5, %6 : vector<512x128xf32>
    %8 = arith.truncf %7 : vector<512x128xf32> to vector<512x128xbf16>
    %c0_6 = arith.constant 0 : index
    %c0_7 = arith.constant 0 : index
    %9 = vector.load %arg4[%c0_6, %c0_7] : memref<512x128xbf16, #tpu.memory_space<vmem>>, vector<512x128xbf16>
    tpu.vector_store %arg4[%c0_6, %c0_7], %8 {strides = array<i32>} : memref<512x128xbf16, #tpu.memory_space<vmem>>, vector<512x128xbf16>,
    return
  }
  func.func @transform_0(%arg0: i32) -> (i32, i32) {
    %c0_i32 = arith.constant 0 : i32
    %c0_i32_0 = arith.constant 0 : i32
    return %arg0, %c0_i32 : i32, i32
  }
  func.func @transform_1(%arg0: i32) -> (i32, i32) {
    %c0_i32 = arith.constant 0 : i32
    %c0_i32_0 = arith.constant 0 : i32
    %c0_i32_1 = arith.constant 0 : i32
    return %c0_i32, %c0_i32_0 : i32, i32
  }
  func.func @transform_2(%arg0: i32) -> (i32, i32) {
    %c0_i32 = arith.constant 0 : i32
    %c0_i32_0 = arith.constant 0 : i32
    %c0_i32_1 = arith.constant 0 : i32
    return %c0_i32, %c0_i32_0 : i32, i32
  }
  func.func @transform_3(%arg0: i32) -> (i32, i32) {
    %c0_i32 = arith.constant 0 : i32
    %c0_i32_0 = arith.constant 0 : i32
    return %arg0, %c0_i32 : i32, i32
  }
}

module attributes {stable_mosaic.version = 11 : i64} {
  func.func @_max4_kernel(%arg0: i32, %arg1: memref<256x128xbf16, #tpu.memory_space<vmem>>, %arg2: memref<256x128xbf16, #tpu.memory_space<vmem>>, %arg3: memref<256x128xbf16, #tpu.memory_space<vmem>>, %arg4: memref<256x128xbf16, #tpu.memory_space<vmem>>, %arg5: memref<256x128xbf16, #tpu.memory_space<vmem>>) attributes {dimension_semantics = [#tpu.dimension_semantics<parallel>], iteration_bounds = array<i64: 2>, scalar_prefetch = 0 : i64, scratch_operands = 0 : i64, tpu.core_type = #tpu.core_type<tc>, window_params = [{transform_indices = @transform_0, window_bounds = array<i64: 256, 128>}, {transform_indices = @transform_1, window_bounds = array<i64: 256, 128>}, {transform_indices = @transform_2, window_bounds = array<i64: 256, 128>}, {transform_indices = @transform_3, window_bounds = array<i64: 256, 128>}, {transform_indices = @transform_4, window_bounds = array<i64: 256, 128>}]} {
    %c0 = arith.constant 0 : index
    %c0_0 = arith.constant 0 : index
    %0 = vector.load %arg1[%c0, %c0_0] : memref<256x128xbf16, #tpu.memory_space<vmem>>, vector<256x128xbf16>
    %c0_1 = arith.constant 0 : index
    %c0_2 = arith.constant 0 : index
    %1 = vector.load %arg2[%c0_1, %c0_2] : memref<256x128xbf16, #tpu.memory_space<vmem>>, vector<256x128xbf16>
    %2 = arith.maximumf %0, %1 : vector<256x128xbf16>
    %c0_3 = arith.constant 0 : index
    %c0_4 = arith.constant 0 : index
    %3 = vector.load %arg3[%c0_3, %c0_4] : memref<256x128xbf16, #tpu.memory_space<vmem>>, vector<256x128xbf16>
    %c0_5 = arith.constant 0 : index
    %c0_6 = arith.constant 0 : index
    %4 = vector.load %arg4[%c0_5, %c0_6] : memref<256x128xbf16, #tpu.memory_space<vmem>>, vector<256x128xbf16>
    %5 = arith.maximumf %3, %4 : vector<256x128xbf16>
    %6 = arith.maximumf %2, %5 : vector<256x128xbf16>
    %c0_7 = arith.constant 0 : index
    %c0_8 = arith.constant 0 : index
    %7 = vector.load %arg5[%c0_7, %c0_8] : memref<256x128xbf16, #tpu.memory_space<vmem>>, vector<256x128xbf16>
    tpu.vector_store %arg5[%c0_7, %c0_8], %6 {strides = array<i32>} : memref<256x128xbf16, #tpu.memory_space<vmem>>, vector<256x128xbf16>,
    return
  }
  func.func @transform_0(%arg0: i32) -> (i32, i32) {
    %c0_i32 = arith.constant 0 : i32
    %c0_i32_0 = arith.constant 0 : i32
    return %arg0, %c0_i32 : i32, i32
  }
  func.func @transform_1(%arg0: i32) -> (i32, i32) {
    %c0_i32 = arith.constant 0 : i32
    %c0_i32_0 = arith.constant 0 : i32
    return %arg0, %c0_i32 : i32, i32
  }
  func.func @transform_2(%arg0: i32) -> (i32, i32) {
    %c0_i32 = arith.constant 0 : i32
    %c0_i32_0 = arith.constant 0 : i32
    return %arg0, %c0_i32 : i32, i32
  }
  func.func @transform_3(%arg0: i32) -> (i32, i32) {
    %c0_i32 = arith.constant 0 : i32
    %c0_i32_0 = arith.constant 0 : i32
    return %arg0, %c0_i32 : i32, i32
  }
  func.func @transform_4(%arg0: i32) -> (i32, i32) {
    %c0_i32 = arith.constant 0 : i32
    %c0_i32_0 = arith.constant 0 : i32
    return %arg0, %c0_i32 : i32, i32
  }
}

module attributes {stable_mosaic.version = 11 : i64} {
  func.func @_mm_bias_kernel(%arg0: i32, %arg1: memref<208x256xbf16, #tpu.memory_space<vmem>>, %arg2: memref<256x128xbf16, #tpu.memory_space<vmem>>, %arg3: memref<1x128xf32, #tpu.memory_space<vmem>>, %arg4: memref<208x128xbf16, #tpu.memory_space<vmem>>) attributes {dimension_semantics = [#tpu.dimension_semantics<parallel>], iteration_bounds = array<i64: 1>, scalar_prefetch = 0 : i64, scratch_operands = 0 : i64, tpu.core_type = #tpu.core_type<tc>, window_params = [{transform_indices = @transform_0, window_bounds = array<i64: 208, 256>}, {pipeline_mode = #tpu.pipeline_mode<synchronous>, transform_indices = @transform_1, window_bounds = array<i64: 256, 128>}, {pipeline_mode = #tpu.pipeline_mode<synchronous>, transform_indices = @transform_2, window_bounds = array<i64: 1, 128>}, {transform_indices = @transform_3, window_bounds = array<i64: 208, 128>}]} {
    %c0 = arith.constant 0 : index
    %c0_0 = arith.constant 0 : index
    %0 = vector.load %arg1[%c0, %c0_0] : memref<208x256xbf16, #tpu.memory_space<vmem>>, vector<208x256xbf16>
    %c0_1 = arith.constant 0 : index
    %c0_2 = arith.constant 0 : index
    %1 = vector.load %arg2[%c0_1, %c0_2] : memref<256x128xbf16, #tpu.memory_space<vmem>>, vector<256x128xbf16>
    %cst = arith.constant dense<0.000000e+00> : vector<208x128xf32>
    %2 = tpu.matmul %0, %1, %cst {dimension_numbers = #tpu.dot_dimension_numbers<[1], [0], [0], [1], [0, 0, 1, 1], [], []>} : vector<208x256xbf16>, vector<256x128xbf16>, vector<208x128xf32> -> vector<208x128xf32>
    %c0_3 = arith.constant 0 : index
    %c0_4 = arith.constant 0 : index
    %3 = vector.load %arg3[%c0_3, %c0_4] : memref<1x128xf32, #tpu.memory_space<vmem>>, vector<1x128xf32>
    %4 = vector.broadcast %3 : vector<1x128xf32> to vector<208x128xf32>
    %5 = arith.addf %2, %4 : vector<208x128xf32>
    %cst_5 = arith.constant 0.000000e+00 : f32
    %6 = vector.broadcast %cst_5 : f32 to vector<208x128xf32>
    %7 = arith.maximumf %5, %6 : vector<208x128xf32>
    %8 = arith.truncf %7 : vector<208x128xf32> to vector<208x128xbf16>
    %c0_6 = arith.constant 0 : index
    %c0_7 = arith.constant 0 : index
    %9 = vector.load %arg4[%c0_6, %c0_7] : memref<208x128xbf16, #tpu.memory_space<vmem>>, vector<208x128xbf16>
    tpu.vector_store %arg4[%c0_6, %c0_7], %8 {strides = array<i32>} : memref<208x128xbf16, #tpu.memory_space<vmem>>, vector<208x128xbf16>,
    return
  }
  func.func @transform_0(%arg0: i32) -> (i32, i32) {
    %c0_i32 = arith.constant 0 : i32
    %c0_i32_0 = arith.constant 0 : i32
    return %arg0, %c0_i32 : i32, i32
  }
  func.func @transform_1(%arg0: i32) -> (i32, i32) {
    %c0_i32 = arith.constant 0 : i32
    %c0_i32_0 = arith.constant 0 : i32
    %c0_i32_1 = arith.constant 0 : i32
    return %c0_i32, %c0_i32_0 : i32, i32
  }
  func.func @transform_2(%arg0: i32) -> (i32, i32) {
    %c0_i32 = arith.constant 0 : i32
    %c0_i32_0 = arith.constant 0 : i32
    %c0_i32_1 = arith.constant 0 : i32
    return %c0_i32, %c0_i32_0 : i32, i32
  }
  func.func @transform_3(%arg0: i32) -> (i32, i32) {
    %c0_i32 = arith.constant 0 : i32
    %c0_i32_0 = arith.constant 0 : i32
    return %arg0, %c0_i32 : i32, i32
  }
}

module attributes {stable_mosaic.version = 11 : i64} {
  func.func @_max4_kernel(%arg0: i32, %arg1: memref<64x128xbf16, #tpu.memory_space<vmem>>, %arg2: memref<64x128xbf16, #tpu.memory_space<vmem>>, %arg3: memref<64x128xbf16, #tpu.memory_space<vmem>>, %arg4: memref<64x128xbf16, #tpu.memory_space<vmem>>, %arg5: memref<64x128xbf16, #tpu.memory_space<vmem>>) attributes {dimension_semantics = [#tpu.dimension_semantics<parallel>], iteration_bounds = array<i64: 1>, scalar_prefetch = 0 : i64, scratch_operands = 0 : i64, tpu.core_type = #tpu.core_type<tc>, window_params = [{transform_indices = @transform_0, window_bounds = array<i64: 64, 128>}, {transform_indices = @transform_1, window_bounds = array<i64: 64, 128>}, {transform_indices = @transform_2, window_bounds = array<i64: 64, 128>}, {transform_indices = @transform_3, window_bounds = array<i64: 64, 128>}, {transform_indices = @transform_4, window_bounds = array<i64: 64, 128>}]} {
    %c0 = arith.constant 0 : index
    %c0_0 = arith.constant 0 : index
    %0 = vector.load %arg1[%c0, %c0_0] : memref<64x128xbf16, #tpu.memory_space<vmem>>, vector<64x128xbf16>
    %c0_1 = arith.constant 0 : index
    %c0_2 = arith.constant 0 : index
    %1 = vector.load %arg2[%c0_1, %c0_2] : memref<64x128xbf16, #tpu.memory_space<vmem>>, vector<64x128xbf16>
    %2 = arith.maximumf %0, %1 : vector<64x128xbf16>
    %c0_3 = arith.constant 0 : index
    %c0_4 = arith.constant 0 : index
    %3 = vector.load %arg3[%c0_3, %c0_4] : memref<64x128xbf16, #tpu.memory_space<vmem>>, vector<64x128xbf16>
    %c0_5 = arith.constant 0 : index
    %c0_6 = arith.constant 0 : index
    %4 = vector.load %arg4[%c0_5, %c0_6] : memref<64x128xbf16, #tpu.memory_space<vmem>>, vector<64x128xbf16>
    %5 = arith.maximumf %3, %4 : vector<64x128xbf16>
    %6 = arith.maximumf %2, %5 : vector<64x128xbf16>
    %c0_7 = arith.constant 0 : index
    %c0_8 = arith.constant 0 : index
    %7 = vector.load %arg5[%c0_7, %c0_8] : memref<64x128xbf16, #tpu.memory_space<vmem>>, vector<64x128xbf16>
    tpu.vector_store %arg5[%c0_7, %c0_8], %6 {strides = array<i32>} : memref<64x128xbf16, #tpu.memory_space<vmem>>, vector<64x128xbf16>,
    return
  }
  func.func @transform_0(%arg0: i32) -> (i32, i32) {
    %c0_i32 = arith.constant 0 : i32
    %c0_i32_0 = arith.constant 0 : i32
    return %arg0, %c0_i32 : i32, i32
  }
  func.func @transform_1(%arg0: i32) -> (i32, i32) {
    %c0_i32 = arith.constant 0 : i32
    %c0_i32_0 = arith.constant 0 : i32
    return %arg0, %c0_i32 : i32, i32
  }
  func.func @transform_2(%arg0: i32) -> (i32, i32) {
    %c0_i32 = arith.constant 0 : i32
    %c0_i32_0 = arith.constant 0 : i32
    return %arg0, %c0_i32 : i32, i32
  }
  func.func @transform_3(%arg0: i32) -> (i32, i32) {
    %c0_i32 = arith.constant 0 : i32
    %c0_i32_0 = arith.constant 0 : i32
    return %arg0, %c0_i32 : i32, i32
  }
  func.func @transform_4(%arg0: i32) -> (i32, i32) {
    %c0_i32 = arith.constant 0 : i32
    %c0_i32_0 = arith.constant 0 : i32
    return %arg0, %c0_i32 : i32, i32
  }
}

module attributes {stable_mosaic.version = 11 : i64} {
  func.func @_fc_fused_kernel(%arg0: i32, %arg1: memref<16x512xbf16, #tpu.memory_space<vmem>>, %arg2: memref<512x128xbf16, #tpu.memory_space<vmem>>, %arg3: memref<1x128xf32, #tpu.memory_space<vmem>>, %arg4: memref<128x128xbf16, #tpu.memory_space<vmem>>, %arg5: memref<1x128xf32, #tpu.memory_space<vmem>>, %arg6: memref<128x128xbf16, #tpu.memory_space<vmem>>, %arg7: memref<1x128xf32, #tpu.memory_space<vmem>>, %arg8: memref<16x128xf32, #tpu.memory_space<vmem>>) attributes {dimension_semantics = [#tpu.dimension_semantics<parallel>], iteration_bounds = array<i64: 1>, scalar_prefetch = 0 : i64, scratch_operands = 0 : i64, tpu.core_type = #tpu.core_type<tc>, window_params = [{transform_indices = @transform_0, window_bounds = array<i64: 16, 512>}, {pipeline_mode = #tpu.pipeline_mode<synchronous>, transform_indices = @transform_1, window_bounds = array<i64: 512, 128>}, {pipeline_mode = #tpu.pipeline_mode<synchronous>, transform_indices = @transform_2, window_bounds = array<i64: 1, 128>}, {pipeline_mode = #tpu.pipeline_mode<synchronous>, transform_indices = @transform_3, window_bounds = array<i64: 128, 128>}, {pipeline_mode = #tpu.pipeline_mode<synchronous>, transform_indices = @transform_4, window_bounds = array<i64: 1, 128>}, {pipeline_mode = #tpu.pipeline_mode<synchronous>, transform_indices = @transform_5, window_bounds = array<i64: 128, 128>}, {pipeline_mode = #tpu.pipeline_mode<synchronous>, transform_indices = @transform_6, window_bounds = array<i64: 1, 128>}, {transform_indices = @transform_7, window_bounds = array<i64: 16, 128>}]} {
    %c0 = arith.constant 0 : index
    %c0_0 = arith.constant 0 : index
    %0 = vector.load %arg1[%c0, %c0_0] : memref<16x512xbf16, #tpu.memory_space<vmem>>, vector<16x512xbf16>
    %c0_1 = arith.constant 0 : index
    %c0_2 = arith.constant 0 : index
    %1 = vector.load %arg2[%c0_1, %c0_2] : memref<512x128xbf16, #tpu.memory_space<vmem>>, vector<512x128xbf16>
    %cst = arith.constant dense<0.000000e+00> : vector<16x128xf32>
    %2 = tpu.matmul %0, %1, %cst {dimension_numbers = #tpu.dot_dimension_numbers<[1], [0], [0], [1], [0, 0, 1, 1], [], []>} : vector<16x512xbf16>, vector<512x128xbf16>, vector<16x128xf32> -> vector<16x128xf32>
    %c0_3 = arith.constant 0 : index
    %c0_4 = arith.constant 0 : index
    %3 = vector.load %arg3[%c0_3, %c0_4] : memref<1x128xf32, #tpu.memory_space<vmem>>, vector<1x128xf32>
    %4 = vector.broadcast %3 : vector<1x128xf32> to vector<16x128xf32>
    %5 = arith.addf %2, %4 : vector<16x128xf32>
    %cst_5 = arith.constant 0.000000e+00 : f32
    %6 = vector.broadcast %cst_5 : f32 to vector<16x128xf32>
    %7 = arith.maximumf %5, %6 : vector<16x128xf32>
    %8 = arith.truncf %7 : vector<16x128xf32> to vector<16x128xbf16>
    %c0_6 = arith.constant 0 : index
    %c0_7 = arith.constant 0 : index
    %9 = vector.load %arg4[%c0_6, %c0_7] : memref<128x128xbf16, #tpu.memory_space<vmem>>, vector<128x128xbf16>
    %cst_8 = arith.constant dense<0.000000e+00> : vector<16x128xf32>
    %10 = tpu.matmul %8, %9, %cst_8 {dimension_numbers = #tpu.dot_dimension_numbers<[1], [0], [0], [1], [0, 0, 1, 1], [], []>} : vector<16x128xbf16>, vector<128x128xbf16>, vector<16x128xf32> -> vector<16x128xf32>
    %c0_9 = arith.constant 0 : index
    %c0_10 = arith.constant 0 : index
    %11 = vector.load %arg5[%c0_9, %c0_10] : memref<1x128xf32, #tpu.memory_space<vmem>>, vector<1x128xf32>
    %12 = vector.broadcast %11 : vector<1x128xf32> to vector<16x128xf32>
    %13 = arith.addf %10, %12 : vector<16x128xf32>
    %cst_11 = arith.constant 0.000000e+00 : f32
    %14 = vector.broadcast %cst_11 : f32 to vector<16x128xf32>
    %15 = arith.maximumf %13, %14 : vector<16x128xf32>
    %16 = arith.truncf %15 : vector<16x128xf32> to vector<16x128xbf16>
    %c0_12 = arith.constant 0 : index
    %c0_13 = arith.constant 0 : index
    %17 = vector.load %arg6[%c0_12, %c0_13] : memref<128x128xbf16, #tpu.memory_space<vmem>>, vector<128x128xbf16>
    %cst_14 = arith.constant dense<0.000000e+00> : vector<16x128xf32>
    %18 = tpu.matmul %16, %17, %cst_14 {dimension_numbers = #tpu.dot_dimension_numbers<[1], [0], [0], [1], [0, 0, 1, 1], [], []>} : vector<16x128xbf16>, vector<128x128xbf16>, vector<16x128xf32> -> vector<16x128xf32>
    %c0_15 = arith.constant 0 : index
    %c0_16 = arith.constant 0 : index
    %19 = vector.load %arg7[%c0_15, %c0_16] : memref<1x128xf32, #tpu.memory_space<vmem>>, vector<1x128xf32>
    %20 = vector.broadcast %19 : vector<1x128xf32> to vector<16x128xf32>
    %21 = arith.addf %18, %20 : vector<16x128xf32>
    %c0_17 = arith.constant 0 : index
    %c0_18 = arith.constant 0 : index
    %22 = vector.load %arg8[%c0_17, %c0_18] : memref<16x128xf32, #tpu.memory_space<vmem>>, vector<16x128xf32>
    tpu.vector_store %arg8[%c0_17, %c0_18], %21 {strides = array<i32>} : memref<16x128xf32, #tpu.memory_space<vmem>>, vector<16x128xf32>,
    return
  }
  func.func @transform_0(%arg0: i32) -> (i32, i32) {
    %c0_i32 = arith.constant 0 : i32
    %c0_i32_0 = arith.constant 0 : i32
    return %arg0, %c0_i32 : i32, i32
  }
  func.func @transform_1(%arg0: i32) -> (i32, i32) {
    %c0_i32 = arith.constant 0 : i32
    %c0_i32_0 = arith.constant 0 : i32
    %c0_i32_1 = arith.constant 0 : i32
    return %c0_i32, %c0_i32_0 : i32, i32
  }
  func.func @transform_2(%arg0: i32) -> (i32, i32) {
    %c0_i32 = arith.constant 0 : i32
    %c0_i32_0 = arith.constant 0 : i32
    %c0_i32_1 = arith.constant 0 : i32
    return %c0_i32, %c0_i32_0 : i32, i32
  }
  func.func @transform_3(%arg0: i32) -> (i32, i32) {
    %c0_i32 = arith.constant 0 : i32
    %c0_i32_0 = arith.constant 0 : i32
    %c0_i32_1 = arith.constant 0 : i32
    return %c0_i32, %c0_i32_0 : i32, i32
  }
  func.func @transform_4(%arg0: i32) -> (i32, i32) {
    %c0_i32 = arith.constant 0 : i32
    %c0_i32_0 = arith.constant 0 : i32
    %c0_i32_1 = arith.constant 0 : i32
    return %c0_i32, %c0_i32_0 : i32, i32
  }
  func.func @transform_5(%arg0: i32) -> (i32, i32) {
    %c0_i32 = arith.constant 0 : i32
    %c0_i32_0 = arith.constant 0 : i32
    %c0_i32_1 = arith.constant 0 : i32
    return %c0_i32, %c0_i32_0 : i32, i32
  }
  func.func @transform_6(%arg0: i32) -> (i32, i32) {
    %c0_i32 = arith.constant 0 : i32
    %c0_i32_0 = arith.constant 0 : i32
    %c0_i32_1 = arith.constant 0 : i32
    return %c0_i32, %c0_i32_0 : i32, i32
  }
  func.func @transform_7(%arg0: i32) -> (i32, i32) {
    %c0_i32 = arith.constant 0 : i32
    %c0_i32_0 = arith.constant 0 : i32
    return %arg0, %c0_i32 : i32, i32
  }
}

</mosaic_0001>

<llo_original>
// kernel: cnn_classifier_forward.5
$region0: #{cnn_classifier_forward.5}
  #allocation0 [shape = 'u32[]', space=smem, size = 0x4, offset = 0x4, fixed_abs, tag = 'smem constant byte address 0x4 - core index']
  #allocation1 [shape = 'u32[144,128]{1,0:T(1,128)}', space=vmem, size = 0x12000, scoped, tag = 'internal scratch']
  %s0 = inlined_call_operand.vmem [shape: bf16[2048,128], index: 0, kind: input, shape index: {}]
  %s1 = inlined_call_operand.vmem [shape: bf16[128,128], index: 1, kind: input, shape index: {}]
  %s2 = inlined_call_operand.vmem [shape: f32[1,128], index: 2, kind: input, shape index: {}]
  %s3 = inlined_call_operand.vmem [shape: bf16[2048,128], index: 3, kind: output, shape index: {}]
  %s4 = sld [smem:[#allocation0]]
  $region45: #{cnn_classifier_forward.5} parent=0
    _
  %s6 = ssub.s32 1, %s4
  %s7 = scalar_select 0, %s6, %s4
  loop: start=0, step=1, limit=6
  $region2: #{cnn_classifier_forward.5} parent=0 // loop_pre_header
    _
  $region3: #{cnn_classifier_forward.5} parent=0 // loop_header
    %s9 = sphi 0, %s13
    %p10 = scmp.ge.s32.totalorder %s9, 6
    %s19 = sphi 0, %s21
    %s22 = sphi 0, %s19
    %s23 = sphi 0, %s22
    %s39 = sphi 0, %s23
    %s43 = sphi 0, %s43
    %s45 = sphi 0, %s43
    %s46 = sphi 0, %s45
    %s60 = sphi 0, %s46
    %s64 = sphi 0, %s64
    %s66 = sphi 0, %s64
    %s67 = sphi 0, %s66
    %s81 = sphi 0, %s67
    %s87 = sphi 0, %s89
    %s90 = sphi 0, %s87
    %s91 = sphi 0, %s90
    %s107 = sphi 0, %s91
  $region4: #{cnn_classifier_forward.5} parent=0 // loop_header_branch
    %12 = sbr.rel (%p10) target = $region8
  $region5: #{cnn_classifier_forward.5} parent=0 // loop_body
    %s14 = ssub.s32 %s9, 1
    %s15 = ssub.s32 %s9, 2
    %s16 = sadd.s32 %s9, 1
    %s17 = ssub.s32 %s9, %s16
    %p18 = scmp.eq.s32.totalorder %s17, 0
    %s20 = sadd.s32 %s19, 1
    %s21 = scalar_select %p18, %s19, %s20
    %p24 = pneg %p18
    %p25 = scmp.eq.s32.totalorder %s9, 3
    %p26 = por %p24, %p25
    %p27 = scmp.ne.s32.totalorder %s19, %s22
    %p28 = scmp.eq.s32.totalorder %s9, 0
    %p29 = por %p27, %p28
    %p30 = scmp.ne.s32.totalorder %s19, %s22
    %p31 = scmp.eq.s32.totalorder %s14, 3
    %p32 = por %p30, %p31
    %p33 = scmp.ne.s32.totalorder %s22, %s23
    %p34 = scmp.eq.s32.totalorder %s14, 0
    %p35 = por %p33, %p34
    %p36 = scmp.ne.s32.totalorder %s22, %s23
    %p37 = scmp.eq.s32.totalorder %s15, 3
    %p38 = por %p36, %p37
    %p40 = scmp.ne.s32.totalorder %s23, %s39
    %p41 = scmp.eq.s32.totalorder %s15, 0
    %p42 = por %p40, %p41
    %s44 = sadd.s32 %s43, 1
    %p47 = scmp.eq.s32.totalorder %s9, 3
    %p48 = scmp.ne.s32.totalorder %s43, %s45
    %p49 = scmp.eq.s32.totalorder %s9, 0
    %p50 = por %p48, %p49
    %p51 = scmp.ne.s32.totalorder %s43, %s45
    %p52 = scmp.eq.s32.totalorder %s14, 3
    %p53 = por %p51, %p52
    %p54 = scmp.ne.s32.totalorder %s45, %s46
    %p55 = scmp.eq.s32.totalorder %s14, 0
    %p56 = por %p54, %p55
    %p57 = scmp.ne.s32.totalorder %s45, %s46
    %p58 = scmp.eq.s32.totalorder %s15, 3
    %p59 = por %p57, %p58
    %p61 = scmp.ne.s32.totalorder %s46, %s60
    %p62 = scmp.eq.s32.totalorder %s15, 0
    %p63 = por %p61, %p62
    %s65 = sadd.s32 %s64, 1
    %p68 = scmp.eq.s32.totalorder %s9, 3
    %p69 = scmp.ne.s32.totalorder %s64, %s66
    %p70 = scmp.eq.s32.totalorder %s9, 0
    %p71 = por %p69, %p70
    %p72 = scmp.ne.s32.totalorder %s64, %s66
    %p73 = scmp.eq.s32.totalorder %s14, 3
    %p74 = por %p72, %p73
    %p75 = scmp.ne.s32.totalorder %s66, %s67
    %p76 = scmp.eq.s32.totalorder %s14, 0
    %p77 = por %p75, %p76
    %p78 = scmp.ne.s32.totalorder %s66, %s67
    %p79 = scmp.eq.s32.totalorder %s15, 3
    %p80 = por %p78, %p79
    %p82 = scmp.ne.s32.totalorder %s67, %s81
    %p83 = scmp.eq.s32.totalorder %s15, 0
    %p84 = por %p82, %p83
    %s85 = ssub.s32 %s9, %s16
    %p86 = scmp.eq.s32.totalorder %s85, 0
    %s88 = sadd.s32 %s87, 1
    %s89 = scalar_select %p86, %s87, %s88
    %p92 = pneg %p86
    %p93 = scmp.eq.s32.totalorder %s9, 3
    %p94 = por %p92, %p93
    %p95 = scmp.ne.s32.totalorder %s87, %s90
    %p96 = scmp.eq.s32.totalorder %s9, 0
    %p97 = por %p95, %p96
    %p98 = scmp.ne.s32.totalorder %s87, %s90
    %p99 = scmp.eq.s32.totalorder %s14, 3
    %p100 = por %p98, %p99
    %p101 = scmp.ne.s32.totalorder %s90, %s91
    %p102 = scmp.eq.s32.totalorder %s14, 0
    %p103 = por %p101, %p102
    %p104 = scmp.ne.s32.totalorder %s90, %s91
    %p105 = scmp.eq.s32.totalorder %s15, 3
    %p106 = por %p104, %p105
    %p108 = scmp.ne.s32.totalorder %s91, %s107
    %p109 = scmp.eq.s32.totalorder %s15, 0
    %p110 = por %p108, %p109
    %p111 = scmp.le.s32.totalorder 1, %s9
    %p112 = scmp.lt.s32.totalorder %s9, 5
    %p113 = pnand %p111, %p112
    %p114 = pneg %p113
    // Predicated region
    $region9: #{cnn_classifier_forward.5} parent=5 // pred_check
      _
    $region10: #{cnn_classifier_forward.5} parent=5 // pred_check_branch
      %116 = sbr.rel (%p113) target = $region12
    $region11: #{cnn_classifier_forward.5} parent=5 // pred_region
      %s117 = ssub.s32 %s9, 1
      // Predicated region
      $region13: #{cnn_classifier_forward.5} parent=11 // pred_check
        %p118 = pneg %p56
      $region14: #{cnn_classifier_forward.5} parent=11 // pred_check_branch
        %120 = sbr.rel (%p118) target = $region16
      $region15: #{cnn_classifier_forward.5} parent=11 // pred_region
        _
      $region16: #{cnn_classifier_forward.5} parent=11 // pred_fallthru
        _
      // Predicated region
      $region17: #{cnn_classifier_forward.5} parent=11 // pred_check
        %p121 = pneg %p77
      $region18: #{cnn_classifier_forward.5} parent=11 // pred_check_branch
        %123 = sbr.rel (%p121) target = $region20
      $region19: #{cnn_classifier_forward.5} parent=11 // pred_region
        _
      $region20: #{cnn_classifier_forward.5} parent=11 // pred_fallthru
        _
    $region12: #{cnn_classifier_forward.5} parent=5 // pred_fallthru
      _
    %p124 = scmp.lt.s32.totalorder %s9, 4
    // Predicated region
    $region21: #{cnn_classifier_forward.5} parent=5 // pred_check
      %p125 = pneg %p124
    $region22: #{cnn_classifier_forward.5} parent=5 // pred_check_branch
      %127 = sbr.rel (%p125) target = $region24
    $region23: #{cnn_classifier_forward.5} parent=5 // pred_region
      // Predicated region
      $region25: #{cnn_classifier_forward.5} parent=23 // pred_check
        %p128 = pneg %p29
      $region26: #{cnn_classifier_forward.5} parent=23 // pred_check_branch
        %130 = sbr.rel (%p128) target = $region28
      $region27: #{cnn_classifier_forward.5} parent=23 // pred_region
        %s131 = smul.u32 64, %s9
        %p132 = scmp.lt.s32.totalorder %s131, 255
        %s133 = scalar_select %p132, %s131, 255
        %s134 = smul.addr %s133, 4
        %s135 = scalar_lea.vmem %s0, %s134
        %s136 = smul.u32 64, %s9
      $region28: #{cnn_classifier_forward.5} parent=23 // pred_fallthru
        _
    $region24: #{cnn_classifier_forward.5} parent=5 // pred_fallthru
      _
    %p137 = scmp.le.s32.totalorder 1, %s9
    %p138 = scmp.lt.s32.totalorder %s9, 5
    %p139 = pnand %p137, %p138
    %p140 = pneg %p139
    // Predicated region
    $region29: #{cnn_classifier_forward.5} parent=5 // pred_check
      _
    $region30: #{cnn_classifier_forward.5} parent=5 // pred_check_branch
      %142 = sbr.rel (%p139) target = $region32
    $region31: #{cnn_classifier_forward.5} parent=5 // pred_region
      %s143 = ssub.s32 %s9, 1
      %s144 = smul.u32 64, %s14
      %p145 = scmp.lt.s32.totalorder %s144, 255
      %s146 = scalar_select %p145, %s144, 255
      %s147 = smul.addr %s146, 4
      %s148 = scalar_lea.vmem %s0, %s147
      %p149 = pneg %p35
      %p150 = pneg %p32
      %p151 = pneg %p56
      %p152 = pneg %p53
      %p153 = pneg %p77
      %p154 = pneg %p74
      %p155 = pneg %p103
      %p156 = pneg %p100
      %s157 = smul.u32 64, %s14
      %p158 = scmp.lt.s32.totalorder %s157, 255
      %s159 = scalar_select %p158, %s157, 255
      %s160 = smul.addr %s159, 4
      %s161 = scalar_lea.vmem %s3, %s160
      %s162 = smul.u32 64, %s14
      %p163 = scmp.lt.s32.totalorder %s162, 255
      %s164 = scalar_select %p163, %s162, 255
      %s165 = smul.addr %s164, 4
      %s166 = scalar_lea.vmem %s0, %s165
      %s167 = smul.u32 64, %s14
      %s168 = smul.u32 64, %s14
      %p169 = scmp.lt.s32.totalorder %s168, 255
      %s170 = scalar_select %p169, %s168, 255
      %s171 = smul.addr %s170, 4
      %s172 = scalar_lea.vmem %s3, %s171
      %s173 = smul.u32 64, %s14
      %v175 = vld [vmem:[%s166] sm:$0xf]
      %v176 = vld [vmem:[%s166 + $0x4] sm:$0xf]
      %v177 = vld [vmem:[%s166 + $0x8] sm:$0xf]
      %v178 = vld [vmem:[%s166 + $0xc] sm:$0xf]
      %v179 = vld [vmem:[%s166 + $0x10] sm:$0xf]
      %v180 = vld [vmem:[%s166 + $0x14] sm:$0xf]
      %v181 = vld [vmem:[%s166 + $0x18] sm:$0xf]
      %v182 = vld [vmem:[%s166 + $0x1c] sm:$0xf]
      %v183 = vld [vmem:[%s166 + $0x20] sm:$0xf]
      %v184 = vld [vmem:[%s166 + $0x24] sm:$0xf]
      %v185 = vld [vmem:[%s166 + $0x28] sm:$0xf]
      %v186 = vld [vmem:[%s166 + $0x2c] sm:$0xf]
      %v187 = vld [vmem:[%s166 + $0x30] sm:$0xf]
      %v188 = vld [vmem:[%s166 + $0x34] sm:$0xf]
      %v189 = vld [vmem:[%s166 + $0x38] sm:$0xf]
      %v190 = vld [vmem:[%s166 + $0x3c] sm:$0xf]
      %v191 = vld [vmem:[%s166 + $0x40] sm:$0xf]
      %v192 = vld [vmem:[%s166 + $0x44] sm:$0xf]
      %v193 = vld [vmem:[%s166 + $0x48] sm:$0xf]
      %v194 = vld [vmem:[%s166 + $0x4c] sm:$0xf]
      %v195 = vld [vmem:[%s166 + $0x50] sm:$0xf]
      %v196 = vld [vmem:[%s166 + $0x54] sm:$0xf]
      %v197 = vld [vmem:[%s166 + $0x58] sm:$0xf]
      %v198 = vld [vmem:[%s166 + $0x5c] sm:$0xf]
      %v199 = vld [vmem:[%s166 + $0x60] sm:$0xf]
      %v200 = vld [vmem:[%s166 + $0x64] sm:$0xf]
      %v201 = vld [vmem:[%s166 + $0x68] sm:$0xf]
      %v202 = vld [vmem:[%s166 + $0x6c] sm:$0xf]
      %v203 = vld [vmem:[%s166 + $0x70] sm:$0xf]
      %v204 = vld [vmem:[%s166 + $0x74] sm:$0xf]
      %v205 = vld [vmem:[%s166 + $0x78] sm:$0xf]
      %v206 = vld [vmem:[%s166 + $0x7c] sm:$0xf]
      %v207 = vld [vmem:[%s166 + $0x80] sm:$0xf]
      %v208 = vld [vmem:[%s166 + $0x84] sm:$0xf]
      %v209 = vld [vmem:[%s166 + $0x88] sm:$0xf]
      %v210 = vld [vmem:[%s166 + $0x8c] sm:$0xf]
      %v211 = vld [vmem:[%s166 + $0x90] sm:$0xf]
      %v212 = vld [vmem:[%s166 + $0x94] sm:$0xf]
      %v213 = vld [vmem:[%s166 + $0x98] sm:$0xf]
      %v214 = vld [vmem:[%s166 + $0x9c] sm:$0xf]
      %v215 = vld [vmem:[%s166 + $0xa0] sm:$0xf]
      %v216 = vld [vmem:[%s166 + $0xa4] sm:$0xf]
      %v217 = vld [vmem:[%s166 + $0xa8] sm:$0xf]
      %v218 = vld [vmem:[%s166 + $0xac] sm:$0xf]
      %v219 = vld [vmem:[%s166 + $0xb0] sm:$0xf]
      %v220 = vld [vmem:[%s166 + $0xb4] sm:$0xf]
      %v221 = vld [vmem:[%s166 + $0xb8] sm:$0xf]
      %v222 = vld [vmem:[%s166 + $0xbc] sm:$0xf]
      %v223 = vld [vmem:[%s166 + $0xc0] sm:$0xf]
      %v224 = vld [vmem:[%s166 + $0xc4] sm:$0xf]
      %v225 = vld [vmem:[%s166 + $0xc8] sm:$0xf]
      %v226 = vld [vmem:[%s166 + $0xcc] sm:$0xf]
      %v227 = vld [vmem:[%s166 + $0xd0] sm:$0xf]
      %v228 = vld [vmem:[%s166 + $0xd4] sm:$0xf]
      %v229 = vld [vmem:[%s166 + $0xd8] sm:$0xf]
      %v230 = vld [vmem:[%s166 + $0xdc] sm:$0xf]
      %v231 = vld [vmem:[%s166 + $0xe0] sm:$0xf]
      %v232 = vld [vmem:[%s166 + $0xe4] sm:$0xf]
      %v233 = vld [vmem:[%s166 + $0xe8] sm:$0xf]
      %v234 = vld [vmem:[%s166 + $0xec] sm:$0xf]
      %v235 = vld [vmem:[%s166 + $0xf0] sm:$0xf]
      %v236 = vld [vmem:[%s166 + $0xf4] sm:$0xf]
      %v237 = vld [vmem:[%s166 + $0xf8] sm:$0xf]
      %v238 = vld [vmem:[%s166 + $0xfc] sm:$0xf]
      %v239 = vld [vmem:[%s1] sm:$0xf]
      %v240 = vld [vmem:[%s1 + $0x4] sm:$0xf]
      %v241 = vld [vmem:[%s1 + $0x8] sm:$0xf]
      %v242 = vld [vmem:[%s1 + $0xc] sm:$0xf]
      %v243 = vld [vmem:[%s1 + $0x10] sm:$0xf]
      %v244 = vld [vmem:[%s1 + $0x14] sm:$0xf]
      %v245 = vld [vmem:[%s1 + $0x18] sm:$0xf]
      %v246 = vld [vmem:[%s1 + $0x1c] sm:$0xf]
      %v247 = vld [vmem:[%s1 + $0x20] sm:$0xf]
      %v248 = vld [vmem:[%s1 + $0x24] sm:$0xf]
      %v249 = vld [vmem:[%s1 + $0x28] sm:$0xf]
      %v250 = vld [vmem:[%s1 + $0x2c] sm:$0xf]
      %v251 = vld [vmem:[%s1 + $0x30] sm:$0xf]
      %v252 = vld [vmem:[%s1 + $0x34] sm:$0xf]
      %v253 = vld [vmem:[%s1 + $0x38] sm:$0xf]
      %v254 = vld [vmem:[%s1 + $0x3c] sm:$0xf]
      %v255 = vld [vmem:[%s2] sm:$0x1]
      %v257 = vlaneseq
      %v258 = vshrl.u32 %v257, 7
      %v259 = vsub.s32 0, %v258
      %v260 = vrot.slane %v255, %v259
      %v326 = vunpack.c.l.b16 %v175
      %v327 = vunpack.c.l.b16 %v176
      %v328 = vunpack.c.l.b16 %v177
      %v329 = vunpack.c.l.b16 %v178
      %v330 = vunpack.c.l.b16 %v179
      %v331 = vunpack.c.l.b16 %v180
      %v332 = vunpack.c.l.b16 %v181
      %v333 = vunpack.c.l.b16 %v182
      %v334 = vunpack.c.l.b16 %v183
      %v335 = vunpack.c.l.b16 %v184
      %v336 = vunpack.c.l.b16 %v185
      %v337 = vunpack.c.l.b16 %v186
      %v338 = vunpack.c.l.b16 %v187
      %v339 = vunpack.c.l.b16 %v188
      %v340 = vunpack.c.l.b16 %v189
      %v341 = vunpack.c.l.b16 %v190
      %v342 = vunpack.c.l.b16 %v191
      %v343 = vunpack.c.l.b16 %v192
      %v344 = vunpack.c.l.b16 %v193
      %v345 = vunpack.c.l.b16 %v194
      %v346 = vunpack.c.l.b16 %v195
      %v347 = vunpack.c.l.b16 %v196
      %v348 = vunpack.c.l.b16 %v197
      %v349 = vunpack.c.l.b16 %v198
      %v350 = vunpack.c.l.b16 %v199
      %v351 = vunpack.c.l.b16 %v200
      %v352 = vunpack.c.l.b16 %v201
      %v353 = vunpack.c.l.b16 %v202
      %v354 = vunpack.c.l.b16 %v203
      %v355 = vunpack.c.l.b16 %v204
      %v356 = vunpack.c.l.b16 %v205
      %v357 = vunpack.c.l.b16 %v206
      %v358 = vunpack.c.l.b16 %v207
      %v359 = vunpack.c.l.b16 %v208
      %v360 = vunpack.c.l.b16 %v209
      %v361 = vunpack.c.l.b16 %v210
      %v362 = vunpack.c.l.b16 %v211
      %v363 = vunpack.c.l.b16 %v212
      %v364 = vunpack.c.l.b16 %v213
      %v365 = vunpack.c.l.b16 %v214
      %v366 = vunpack.c.l.b16 %v215
      %v367 = vunpack.c.l.b16 %v216
      %v368 = vunpack.c.l.b16 %v217
      %v369 = vunpack.c.l.b16 %v218
      %v370 = vunpack.c.l.b16 %v219
      %v371 = vunpack.c.l.b16 %v220
      %v372 = vunpack.c.l.b16 %v221
      %v373 = vunpack.c.l.b16 %v222
      %v374 = vunpack.c.l.b16 %v223
      %v375 = vunpack.c.l.b16 %v224
      %v376 = vunpack.c.l.b16 %v225
      %v377 = vunpack.c.l.b16 %v226
      %v378 = vunpack.c.l.b16 %v227
      %v379 = vunpack.c.l.b16 %v228
      %v380 = vunpack.c.l.b16 %v229
      %v381 = vunpack.c.l.b16 %v230
      %v382 = vunpack.c.l.b16 %v231
      %v383 = vunpack.c.l.b16 %v232
      %v384 = vunpack.c.l.b16 %v233
      %v385 = vunpack.c.l.b16 %v234
      %v386 = vunpack.c.l.b16 %v235
      %v387 = vunpack.c.l.b16 %v236
      %v388 = vunpack.c.l.b16 %v237
      %v389 = vunpack.c.l.b16 %v238
      %v390 = vpack.c.b16 %v327, %v326
      %v391 = vpack.c.b16 %v329, %v328
      %v392 = vpack.c.b16 %v331, %v330
      %v393 = vpack.c.b16 %v333, %v332
      %v394 = vpack.c.b16 %v335, %v334
      %v395 = vpack.c.b16 %v337, %v336
      %v396 = vpack.c.b16 %v339, %v338
      %v397 = vpack.c.b16 %v341, %v340
      %v398 = vpack.c.b16 %v343, %v342
      %v399 = vpack.c.b16 %v345, %v344
      %v400 = vpack.c.b16 %v347, %v346
      %v401 = vpack.c.b16 %v349, %v348
      %v402 = vpack.c.b16 %v351, %v350
      %v403 = vpack.c.b16 %v353, %v352
      %v404 = vpack.c.b16 %v355, %v354
      %v405 = vpack.c.b16 %v357, %v356
      %v406 = vpack.c.b16 %v359, %v358
      %v407 = vpack.c.b16 %v361, %v360
      %v408 = vpack.c.b16 %v363, %v362
      %v409 = vpack.c.b16 %v365, %v364
      %v410 = vpack.c.b16 %v367, %v366
      %v411 = vpack.c.b16 %v369, %v368
      %v412 = vpack.c.b16 %v371, %v370
      %v413 = vpack.c.b16 %v373, %v372
      %v414 = vpack.c.b16 %v375, %v374
      %v415 = vpack.c.b16 %v377, %v376
      %v416 = vpack.c.b16 %v379, %v378
      %v417 = vpack.c.b16 %v381, %v380
      %v418 = vpack.c.b16 %v383, %v382
      %v419 = vpack.c.b16 %v385, %v384
      %v420 = vpack.c.b16 %v387, %v386
      %v421 = vpack.c.b16 %v389, %v388
      %v470 = vunpack.c.l.b16 %v239
      %v471 = vunpack.c.l.b16 %v240
      %v472 = vunpack.c.l.b16 %v241
      %v473 = vunpack.c.l.b16 %v242
      %v474 = vunpack.c.l.b16 %v243
      %v475 = vunpack.c.l.b16 %v244
      %v476 = vunpack.c.l.b16 %v245
      %v477 = vunpack.c.l.b16 %v246
      %v478 = vunpack.c.l.b16 %v247
      %v479 = vunpack.c.l.b16 %v248
      %v480 = vunpack.c.l.b16 %v249
      %v481 = vunpack.c.l.b16 %v250
      %v482 = vunpack.c.l.b16 %v251
      %v483 = vunpack.c.l.b16 %v252
      %v484 = vunpack.c.l.b16 %v253
      %v485 = vunpack.c.l.b16 %v254
      %v486 = vpack.c.b16 %v471, %v470
      %v487 = vpack.c.b16 %v473, %v472
      %v488 = vpack.c.b16 %v475, %v474
      %v489 = vpack.c.b16 %v477, %v476
      %v490 = vpack.c.b16 %v479, %v478
      %v491 = vpack.c.b16 %v481, %v480
      %v492 = vpack.c.b16 %v483, %v482
      %v493 = vpack.c.b16 %v485, %v484
      %502 = vmatprep.subr.bf16.mxu0 0
      %503 = vmatpush1.bf16.msra.mxu0 %v493
      %504 = vmatprep.subr.bf16.mxu0 0
      %505 = vmatpush1.bf16.msra.mxu0 %v492
      %506 = vmatprep.subr.bf16.mxu0 0
      %507 = vmatpush1.bf16.msra.mxu0 %v491
      %508 = vmatprep.subr.bf16.mxu0 0
      %509 = vmatpush1.bf16.msra.mxu0 %v490
      %510 = vmatprep.subr.bf16.mxu0 0
      %511 = vmatpush1.bf16.msra.mxu0 %v489
      %512 = vmatprep.subr.bf16.mxu0 0
      %513 = vmatpush1.bf16.msra.mxu0 %v488
      %514 = vmatprep.subr.bf16.mxu0 0
      %515 = vmatpush1.bf16.msra.mxu0 %v487
      %516 = vmatprep.subr.bf16.mxu0 0
      %517 = vmatpush1.bf16.msra.mxu0 %v486
      %518 = vmatprep.subr.bf16.mxu0 0
      %519 = vmatpush2.bf16.msra.mxu0 0
      %520 = vmatprep.subr.bf16.mxu0 0
      %521 = vmatpush2.bf16.msra.mxu0 0
      %522 = vmatprep.subr.bf16.mxu0 0
      %523 = vmatpush2.bf16.msra.mxu0 0
      %524 = vmatprep.subr.bf16.mxu0 0
      %525 = vmatpush2.bf16.msra.mxu0 0
      %526 = vmatprep.subr.bf16.mxu0 0
      %527 = vmatpush2.bf16.msra.mxu0 0
      %528 = vmatprep.subr.bf16.mxu0 0
      %529 = vmatpush2.bf16.msra.mxu0 0
      %530 = vmatprep.subr.bf16.mxu0 0
      %531 = vmatpush2.bf16.msra.mxu0 0
      %532 = vmatprep.subr.bf16.mxu0 0
      %533 = vmatpush2.bf16.msra.mxu0 0
      %534 = vmatprep.mubr.bf16.mxu0 0
      %535 = vmatmul.mubr.bf16.gmra.mxu0 %v390
      %v536 = vpop.f32.mrf.mxu0
      %v537 = vadd.f32 %v260, %v536
      %v538 = vpop.f32.mrf.mxu0
      %v539 = vpop.f32.mrf.mxu0
      %v540 = vadd.f32 %v260, %v539
      %v541 = vpop.f32.mrf.mxu0
      %542 = vmatprep.mubr.bf16.mxu0 0
      %543 = vmatmul.mubr.bf16.gmra.mxu0 %v391
      %v544 = vpop.f32.mrf.mxu0
      %v545 = vadd.f32 %v260, %v544
      %v546 = vpop.f32.mrf.mxu0
      %v547 = vpop.f32.mrf.mxu0
      %v548 = vadd.f32 %v260, %v547
      %v549 = vpop.f32.mrf.mxu0
      %550 = vmatprep.mubr.bf16.mxu0 0
      %551 = vmatmul.mubr.bf16.gmra.mxu0 %v392
      %v552 = vpop.f32.mrf.mxu0
      %v553 = vadd.f32 %v260, %v552
      %v554 = vpop.f32.mrf.mxu0
      %v555 = vpop.f32.mrf.mxu0
      %v556 = vadd.f32 %v260, %v555
      %v557 = vpop.f32.mrf.mxu0
      %558 = vmatprep.mubr.bf16.mxu0 0
      %559 = vmatmul.mubr.bf16.gmra.mxu0 %v393
      %v560 = vpop.f32.mrf.mxu0
      %v561 = vadd.f32 %v260, %v560
      %v562 = vpop.f32.mrf.mxu0
      %v563 = vpop.f32.mrf.mxu0
      %v564 = vadd.f32 %v260, %v563
      %v565 = vpop.f32.mrf.mxu0
      %566 = vmatprep.mubr.bf16.mxu0 0
      %567 = vmatmul.mubr.bf16.gmra.mxu0 %v394
      %v568 = vpop.f32.mrf.mxu0
      %v569 = vadd.f32 %v260, %v568
      %v570 = vpop.f32.mrf.mxu0
      %v571 = vpop.f32.mrf.mxu0
      %v572 = vadd.f32 %v260, %v571
      %v573 = vpop.f32.mrf.mxu0
      %574 = vmatprep.mubr.bf16.mxu0 0
      %575 = vmatmul.mubr.bf16.gmra.mxu0 %v395
      %v576 = vpop.f32.mrf.mxu0
      %v577 = vadd.f32 %v260, %v576
      %v578 = vpop.f32.mrf.mxu0
      %v579 = vpop.f32.mrf.mxu0
      %v580 = vadd.f32 %v260, %v579
      %v581 = vpop.f32.mrf.mxu0
      %582 = vmatprep.mubr.bf16.mxu0 0
      %583 = vmatmul.mubr.bf16.gmra.mxu0 %v396
      %v584 = vpop.f32.mrf.mxu0
      %v585 = vadd.f32 %v260, %v584
      %v586 = vpop.f32.mrf.mxu0
      %v587 = vpop.f32.mrf.mxu0
      %v588 = vadd.f32 %v260, %v587
      %v589 = vpop.f32.mrf.mxu0
      %590 = vmatprep.mubr.bf16.mxu0 0
      %591 = vmatmul.mubr.bf16.gmra.mxu0 %v397
      %v592 = vpop.f32.mrf.mxu0
      %v593 = vadd.f32 %v260, %v592
      %v594 = vpop.f32.mrf.mxu0
      %v595 = vpop.f32.mrf.mxu0
      %v596 = vadd.f32 %v260, %v595
      %v597 = vpop.f32.mrf.mxu0
      %598 = vmatprep.mubr.bf16.mxu0 0
      %599 = vmatmul.mubr.bf16.gmra.mxu0 %v398
      %v600 = vpop.f32.mrf.mxu0
      %v601 = vadd.f32 %v260, %v600
      %v602 = vpop.f32.mrf.mxu0
      %v603 = vpop.f32.mrf.mxu0
      %v604 = vadd.f32 %v260, %v603
      %v605 = vpop.f32.mrf.mxu0
      %606 = vmatprep.mubr.bf16.mxu0 0
      %607 = vmatmul.mubr.bf16.gmra.mxu0 %v399
      %v608 = vpop.f32.mrf.mxu0
      %v609 = vadd.f32 %v260, %v608
      %v610 = vpop.f32.mrf.mxu0
      %v611 = vpop.f32.mrf.mxu0
      %v612 = vadd.f32 %v260, %v611
      %v613 = vpop.f32.mrf.mxu0
      %614 = vmatprep.mubr.bf16.mxu0 0
      %615 = vmatmul.mubr.bf16.gmra.mxu0 %v400
      %v616 = vpop.f32.mrf.mxu0
      %v617 = vadd.f32 %v260, %v616
      %v618 = vpop.f32.mrf.mxu0
      %v619 = vpop.f32.mrf.mxu0
      %v620 = vadd.f32 %v260, %v619
      %v621 = vpop.f32.mrf.mxu0
      %622 = vmatprep.mubr.bf16.mxu0 0
      %623 = vmatmul.mubr.bf16.gmra.mxu0 %v401
      %v624 = vpop.f32.mrf.mxu0
      %v625 = vadd.f32 %v260, %v624
      %v626 = vpop.f32.mrf.mxu0
      %v627 = vpop.f32.mrf.mxu0
      %v628 = vadd.f32 %v260, %v627
      %v629 = vpop.f32.mrf.mxu0
      %630 = vmatprep.mubr.bf16.mxu0 0
      %631 = vmatmul.mubr.bf16.gmra.mxu0 %v402
      %v632 = vpop.f32.mrf.mxu0
      %v633 = vadd.f32 %v260, %v632
      %v634 = vpop.f32.mrf.mxu0
      %v635 = vpop.f32.mrf.mxu0
      %v636 = vadd.f32 %v260, %v635
      %v637 = vpop.f32.mrf.mxu0
      %638 = vmatprep.mubr.bf16.mxu0 0
      %639 = vmatmul.mubr.bf16.gmra.mxu0 %v403
      %v640 = vpop.f32.mrf.mxu0
      %v641 = vadd.f32 %v260, %v640
      %v642 = vpop.f32.mrf.mxu0
      %v643 = vpop.f32.mrf.mxu0
      %v644 = vadd.f32 %v260, %v643
      %v645 = vpop.f32.mrf.mxu0
      %646 = vmatprep.mubr.bf16.mxu0 0
      %647 = vmatmul.mubr.bf16.gmra.mxu0 %v404
      %v648 = vpop.f32.mrf.mxu0
      %v649 = vadd.f32 %v260, %v648
      %v650 = vpop.f32.mrf.mxu0
      %v651 = vpop.f32.mrf.mxu0
      %v652 = vadd.f32 %v260, %v651
      %v653 = vpop.f32.mrf.mxu0
      %654 = vmatprep.mubr.bf16.mxu0 0
      %655 = vmatmul.mubr.bf16.gmra.mxu0 %v405
      %v656 = vpop.f32.mrf.mxu0
      %v657 = vadd.f32 %v260, %v656
      %v658 = vpop.f32.mrf.mxu0
      %v659 = vpop.f32.mrf.mxu0
      %v660 = vadd.f32 %v260, %v659
      %v661 = vpop.f32.mrf.mxu0
      %662 = vmatprep.mubr.bf16.mxu0 0
      %663 = vmatmul.mubr.bf16.gmra.mxu0 %v406
      %v664 = vpop.f32.mrf.mxu0
      %v665 = vadd.f32 %v260, %v664
      %v666 = vpop.f32.mrf.mxu0
      %v667 = vpop.f32.mrf.mxu0
      %v668 = vadd.f32 %v260, %v667
      %v669 = vpop.f32.mrf.mxu0
      %670 = vmatprep.mubr.bf16.mxu0 0
      %671 = vmatmul.mubr.bf16.gmra.mxu0 %v407
      %v672 = vpop.f32.mrf.mxu0
      %v673 = vadd.f32 %v260, %v672
      %v674 = vpop.f32.mrf.mxu0
      %v675 = vpop.f32.mrf.mxu0
      %v676 = vadd.f32 %v260, %v675
      %v677 = vpop.f32.mrf.mxu0
      %678 = vmatprep.mubr.bf16.mxu0 0
      %679 = vmatmul.mubr.bf16.gmra.mxu0 %v408
      %v680 = vpop.f32.mrf.mxu0
      %v681 = vadd.f32 %v260, %v680
      %v682 = vpop.f32.mrf.mxu0
      %v683 = vpop.f32.mrf.mxu0
      %v684 = vadd.f32 %v260, %v683
      %v685 = vpop.f32.mrf.mxu0
      %686 = vmatprep.mubr.bf16.mxu0 0
      %687 = vmatmul.mubr.bf16.gmra.mxu0 %v409
      %v688 = vpop.f32.mrf.mxu0
      %v689 = vadd.f32 %v260, %v688
      %v690 = vpop.f32.mrf.mxu0
      %v691 = vpop.f32.mrf.mxu0
      %v692 = vadd.f32 %v260, %v691
      %v693 = vpop.f32.mrf.mxu0
      %694 = vmatprep.mubr.bf16.mxu0 0
      %695 = vmatmul.mubr.bf16.gmra.mxu0 %v410
      %v696 = vpop.f32.mrf.mxu0
      %v697 = vadd.f32 %v260, %v696
      %v698 = vpop.f32.mrf.mxu0
      %v699 = vpop.f32.mrf.mxu0
      %v700 = vadd.f32 %v260, %v699
      %v701 = vpop.f32.mrf.mxu0
      %702 = vmatprep.mubr.bf16.mxu0 0
      %703 = vmatmul.mubr.bf16.gmra.mxu0 %v411
      %v704 = vpop.f32.mrf.mxu0
      %v705 = vadd.f32 %v260, %v704
      %v706 = vpop.f32.mrf.mxu0
      %v707 = vpop.f32.mrf.mxu0
      %v708 = vadd.f32 %v260, %v707
      %v709 = vpop.f32.mrf.mxu0
      %710 = vmatprep.mubr.bf16.mxu0 0
      %711 = vmatmul.mubr.bf16.gmra.mxu0 %v412
      %v712 = vpop.f32.mrf.mxu0
      %v713 = vadd.f32 %v260, %v712
      %v714 = vpop.f32.mrf.mxu0
      %v715 = vpop.f32.mrf.mxu0
      %v716 = vadd.f32 %v260, %v715
      %v717 = vpop.f32.mrf.mxu0
      %718 = vmatprep.mubr.bf16.mxu0 0
      %719 = vmatmul.mubr.bf16.gmra.mxu0 %v413
      %v720 = vpop.f32.mrf.mxu0
      %v721 = vadd.f32 %v260, %v720
      %v722 = vpop.f32.mrf.mxu0
      %v723 = vpop.f32.mrf.mxu0
      %v724 = vadd.f32 %v260, %v723
      %v725 = vpop.f32.mrf.mxu0
      %726 = vmatprep.mubr.bf16.mxu0 0
      %727 = vmatmul.mubr.bf16.gmra.mxu0 %v414
      %v728 = vpop.f32.mrf.mxu0
      %v729 = vadd.f32 %v260, %v728
      %v730 = vpop.f32.mrf.mxu0
      %v731 = vpop.f32.mrf.mxu0
      %v732 = vadd.f32 %v260, %v731
      %v733 = vpop.f32.mrf.mxu0
      %734 = vmatprep.mubr.bf16.mxu0 0
      %735 = vmatmul.mubr.bf16.gmra.mxu0 %v415
      %v736 = vpop.f32.mrf.mxu0
      %v737 = vadd.f32 %v260, %v736
      %v738 = vpop.f32.mrf.mxu0
      %v739 = vpop.f32.mrf.mxu0
      %v740 = vadd.f32 %v260, %v739
      %v741 = vpop.f32.mrf.mxu0
      %742 = vmatprep.mubr.bf16.mxu0 0
      %743 = vmatmul.mubr.bf16.gmra.mxu0 %v416
      %v744 = vpop.f32.mrf.mxu0
      %v745 = vadd.f32 %v260, %v744
      %v746 = vpop.f32.mrf.mxu0
      %v747 = vpop.f32.mrf.mxu0
      %v748 = vadd.f32 %v260, %v747
      %v749 = vpop.f32.mrf.mxu0
      %750 = vmatprep.mubr.bf16.mxu0 0
      %751 = vmatmul.mubr.bf16.gmra.mxu0 %v417
      %v752 = vpop.f32.mrf.mxu0
      %v753 = vadd.f32 %v260, %v752
      %v754 = vpop.f32.mrf.mxu0
      %v755 = vpop.f32.mrf.mxu0
      %v756 = vadd.f32 %v260, %v755
      %v757 = vpop.f32.mrf.mxu0
      %758 = vmatprep.mubr.bf16.mxu0 0
      %759 = vmatmul.mubr.bf16.gmra.mxu0 %v418
      %v760 = vpop.f32.mrf.mxu0
      %v761 = vadd.f32 %v260, %v760
      %v762 = vpop.f32.mrf.mxu0
      %v763 = vpop.f32.mrf.mxu0
      %v764 = vadd.f32 %v260, %v763
      %v765 = vpop.f32.mrf.mxu0
      %766 = vmatprep.mubr.bf16.mxu0 0
      %767 = vmatmul.mubr.bf16.gmra.mxu0 %v419
      %v768 = vpop.f32.mrf.mxu0
      %v769 = vadd.f32 %v260, %v768
      %v770 = vpop.f32.mrf.mxu0
      %v771 = vpop.f32.mrf.mxu0
      %v772 = vadd.f32 %v260, %v771
      %v773 = vpop.f32.mrf.mxu0
      %774 = vmatprep.mubr.bf16.mxu0 0
      %775 = vmatmul.mubr.bf16.gmra.mxu0 %v420
      %v776 = vpop.f32.mrf.mxu0
      %v777 = vadd.f32 %v260, %v776
      %v778 = vpop.f32.mrf.mxu0
      %v779 = vpop.f32.mrf.mxu0
      %v780 = vadd.f32 %v260, %v779
      %v781 = vpop.f32.mrf.mxu0
      %782 = vmatprep.mubr.bf16.mxu0 0
      %783 = vmatmul.mubr.bf16.gmra.mxu0 %v421
      %v784 = vpop.f32.mrf.mxu0
      %v785 = vadd.f32 %v260, %v784
      %v786 = vpop.f32.mrf.mxu0
      %v787 = vpop.f32.mrf.mxu0
      %v788 = vadd.f32 %v260, %v787
      %v789 = vpop.f32.mrf.mxu0
      %790 = vdwg.mxu0
      %v791 = vmax.f32 %v537, 0.0
      %v792 = vmax.f32 %v540, 0.0
      %v793 = vmax.f32 %v545, 0.0
      %v794 = vmax.f32 %v548, 0.0
      %v795 = vmax.f32 %v553, 0.0
      %v796 = vmax.f32 %v556, 0.0
      %v797 = vmax.f32 %v561, 0.0
      %v798 = vmax.f32 %v564, 0.0
      %v799 = vmax.f32 %v569, 0.0
      %v800 = vmax.f32 %v572, 0.0
      %v801 = vmax.f32 %v577, 0.0
      %v802 = vmax.f32 %v580, 0.0
      %v803 = vmax.f32 %v585, 0.0
      %v804 = vmax.f32 %v588, 0.0
      %v805 = vmax.f32 %v593, 0.0
      %v806 = vmax.f32 %v596, 0.0
      %v807 = vmax.f32 %v601, 0.0
      %v808 = vmax.f32 %v604, 0.0
      %v809 = vmax.f32 %v609, 0.0
      %v810 = vmax.f32 %v612, 0.0
      %v811 = vmax.f32 %v617, 0.0
      %v812 = vmax.f32 %v620, 0.0
      %v813 = vmax.f32 %v625, 0.0
      %v814 = vmax.f32 %v628, 0.0
      %v815 = vmax.f32 %v633, 0.0
      %v816 = vmax.f32 %v636, 0.0
      %v817 = vmax.f32 %v641, 0.0
      %v818 = vmax.f32 %v644, 0.0
      %v819 = vmax.f32 %v649, 0.0
      %v820 = vmax.f32 %v652, 0.0
      %v821 = vmax.f32 %v657, 0.0
      %v822 = vmax.f32 %v660, 0.0
      %v823 = vmax.f32 %v665, 0.0
      %v824 = vmax.f32 %v668, 0.0
      %v825 = vmax.f32 %v673, 0.0
      %v826 = vmax.f32 %v676, 0.0
      %v827 = vmax.f32 %v681, 0.0
      %v828 = vmax.f32 %v684, 0.0
      %v829 = vmax.f32 %v689, 0.0
      %v830 = vmax.f32 %v692, 0.0
      %v831 = vmax.f32 %v697, 0.0
      %v832 = vmax.f32 %v700, 0.0
      %v833 = vmax.f32 %v705, 0.0
      %v834 = vmax.f32 %v708, 0.0
      %v835 = vmax.f32 %v713, 0.0
      %v836 = vmax.f32 %v716, 0.0
      %v837 = vmax.f32 %v721, 0.0
      %v838 = vmax.f32 %v724, 0.0
      %v839 = vmax.f32 %v729, 0.0
      %v840 = vmax.f32 %v732, 0.0
      %v841 = vmax.f32 %v737, 0.0
      %v842 = vmax.f32 %v740, 0.0
      %v843 = vmax.f32 %v745, 0.0
      %v844 = vmax.f32 %v748, 0.0
      %v845 = vmax.f32 %v753, 0.0
      %v846 = vmax.f32 %v756, 0.0
      %v847 = vmax.f32 %v761, 0.0
      %v848 = vmax.f32 %v764, 0.0
      %v849 = vmax.f32 %v769, 0.0
      %v850 = vmax.f32 %v772, 0.0
      %v851 = vmax.f32 %v777, 0.0
      %v852 = vmax.f32 %v780, 0.0
      %v853 = vmax.f32 %v785, 0.0
      %v854 = vmax.f32 %v788, 0.0
      %v855 = vpack.c.bf16 %v792, %v791
      %v856 = vpack.c.bf16 %v794, %v793
      %v857 = vpack.c.bf16 %v796, %v795
      %v858 = vpack.c.bf16 %v798, %v797
      %v859 = vpack.c.bf16 %v800, %v799
      %v860 = vpack.c.bf16 %v802, %v801
      %v861 = vpack.c.bf16 %v804, %v803
      %v862 = vpack.c.bf16 %v806, %v805
      %v863 = vpack.c.bf16 %v808, %v807
      %v864 = vpack.c.bf16 %v810, %v809
      %v865 = vpack.c.bf16 %v812, %v811
      %v866 = vpack.c.bf16 %v814, %v813
      %v867 = vpack.c.bf16 %v816, %v815
      %v868 = vpack.c.bf16 %v818, %v817
      %v869 = vpack.c.bf16 %v820, %v819
      %v870 = vpack.c.bf16 %v822, %v821
      %v871 = vpack.c.bf16 %v824, %v823
      %v872 = vpack.c.bf16 %v826, %v825
      %v873 = vpack.c.bf16 %v828, %v827
      %v874 = vpack.c.bf16 %v830, %v829
      %v875 = vpack.c.bf16 %v832, %v831
      %v876 = vpack.c.bf16 %v834, %v833
      %v877 = vpack.c.bf16 %v836, %v835
      %v878 = vpack.c.bf16 %v838, %v837
      %v879 = vpack.c.bf16 %v840, %v839
      %v880 = vpack.c.bf16 %v842, %v841
      %v881 = vpack.c.bf16 %v844, %v843
      %v882 = vpack.c.bf16 %v846, %v845
      %v883 = vpack.c.bf16 %v848, %v847
      %v884 = vpack.c.bf16 %v850, %v849
      %v885 = vpack.c.bf16 %v852, %v851
      %v886 = vpack.c.bf16 %v854, %v853
      %v919 = vunpack.c.l.b16 %v855
      %v920 = vunpack.c.h.b16 %v855
      %v921 = vunpack.c.l.b16 %v856
      %v922 = vunpack.c.h.b16 %v856
      %v923 = vunpack.c.l.b16 %v857
      %v924 = vunpack.c.h.b16 %v857
      %v925 = vunpack.c.l.b16 %v858
      %v926 = vunpack.c.h.b16 %v858
      %v927 = vunpack.c.l.b16 %v859
      %v928 = vunpack.c.h.b16 %v859
      %v929 = vunpack.c.l.b16 %v860
      %v930 = vunpack.c.h.b16 %v860
      %v931 = vunpack.c.l.b16 %v861
      %v932 = vunpack.c.h.b16 %v861
      %v933 = vunpack.c.l.b16 %v862
      %v934 = vunpack.c.h.b16 %v862
      %v935 = vunpack.c.l.b16 %v863
      %v936 = vunpack.c.h.b16 %v863
      %v937 = vunpack.c.l.b16 %v864
      %v938 = vunpack.c.h.b16 %v864
      %v939 = vunpack.c.l.b16 %v865
      %v940 = vunpack.c.h.b16 %v865
      %v941 = vunpack.c.l.b16 %v866
      %v942 = vunpack.c.h.b16 %v866
      %v943 = vunpack.c.l.b16 %v867
      %v944 = vunpack.c.h.b16 %v867
      %v945 = vunpack.c.l.b16 %v868
      %v946 = vunpack.c.h.b16 %v868
      %v947 = vunpack.c.l.b16 %v869
      %v948 = vunpack.c.h.b16 %v869
      %v949 = vunpack.c.l.b16 %v870
      %v950 = vunpack.c.h.b16 %v870
      %v951 = vunpack.c.l.b16 %v871
      %v952 = vunpack.c.h.b16 %v871
      %v953 = vunpack.c.l.b16 %v872
      %v954 = vunpack.c.h.b16 %v872
      %v955 = vunpack.c.l.b16 %v873
      %v956 = vunpack.c.h.b16 %v873
      %v957 = vunpack.c.l.b16 %v874
      %v958 = vunpack.c.h.b16 %v874
      %v959 = vunpack.c.l.b16 %v875
      %v960 = vunpack.c.h.b16 %v875
      %v961 = vunpack.c.l.b16 %v876
      %v962 = vunpack.c.h.b16 %v876
      %v963 = vunpack.c.l.b16 %v877
      %v964 = vunpack.c.h.b16 %v877
      %v965 = vunpack.c.l.b16 %v878
      %v966 = vunpack.c.h.b16 %v878
      %v967 = vunpack.c.l.b16 %v879
      %v968 = vunpack.c.h.b16 %v879
      %v969 = vunpack.c.l.b16 %v880
      %v970 = vunpack.c.h.b16 %v880
      %v971 = vunpack.c.l.b16 %v881
      %v972 = vunpack.c.h.b16 %v881
      %v973 = vunpack.c.l.b16 %v882
      %v974 = vunpack.c.h.b16 %v882
      %v975 = vunpack.c.l.b16 %v883
      %v976 = vunpack.c.h.b16 %v883
      %v977 = vunpack.c.l.b16 %v884
      %v978 = vunpack.c.h.b16 %v884
      %v979 = vunpack.c.l.b16 %v885
      %v980 = vunpack.c.h.b16 %v885
      %v981 = vunpack.c.l.b16 %v886
      %v982 = vunpack.c.h.b16 %v886
      %v983 = vpack.c.b16 %v919, %v919
      %v984 = vpack.c.b16 %v920, %v920
      %v985 = vpack.c.b16 %v921, %v921
      %v986 = vpack.c.b16 %v922, %v922
      %v987 = vpack.c.b16 %v923, %v923
      %v988 = vpack.c.b16 %v924, %v924
      %v989 = vpack.c.b16 %v925, %v925
      %v990 = vpack.c.b16 %v926, %v926
      %v991 = vpack.c.b16 %v927, %v927
      %v992 = vpack.c.b16 %v928, %v928
      %v993 = vpack.c.b16 %v929, %v929
      %v994 = vpack.c.b16 %v930, %v930
      %v995 = vpack.c.b16 %v931, %v931
      %v996 = vpack.c.b16 %v932, %v932
      %v997 = vpack.c.b16 %v933, %v933
      %v998 = vpack.c.b16 %v934, %v934
      %v999 = vpack.c.b16 %v935, %v935
      %v1000 = vpack.c.b16 %v936, %v936
      %v1001 = vpack.c.b16 %v937, %v937
      %v1002 = vpack.c.b16 %v938, %v938
      %v1003 = vpack.c.b16 %v939, %v939
      %v1004 = vpack.c.b16 %v940, %v940
      %v1005 = vpack.c.b16 %v941, %v941
      %v1006 = vpack.c.b16 %v942, %v942
      %v1007 = vpack.c.b16 %v943, %v943
      %v1008 = vpack.c.b16 %v944, %v944
      %v1009 = vpack.c.b16 %v945, %v945
      %v1010 = vpack.c.b16 %v946, %v946
      %v1011 = vpack.c.b16 %v947, %v947
      %v1012 = vpack.c.b16 %v948, %v948
      %v1013 = vpack.c.b16 %v949, %v949
      %v1014 = vpack.c.b16 %v950, %v950
      %v1015 = vpack.c.b16 %v951, %v951
      %v1016 = vpack.c.b16 %v952, %v952
      %v1017 = vpack.c.b16 %v953, %v953
      %v1018 = vpack.c.b16 %v954, %v954
      %v1019 = vpack.c.b16 %v955, %v955
      %v1020 = vpack.c.b16 %v956, %v956
      %v1021 = vpack.c.b16 %v957, %v957
      %v1022 = vpack.c.b16 %v958, %v958
      %v1023 = vpack.c.b16 %v959, %v959
      %v1024 = vpack.c.b16 %v960, %v960
      %v1025 = vpack.c.b16 %v961, %v961
      %v1026 = vpack.c.b16 %v962, %v962
      %v1027 = vpack.c.b16 %v963, %v963
      %v1028 = vpack.c.b16 %v964, %v964
      %v1029 = vpack.c.b16 %v965, %v965
      %v1030 = vpack.c.b16 %v966, %v966
      %v1031 = vpack.c.b16 %v967, %v967
      %v1032 = vpack.c.b16 %v968, %v968
      %v1033 = vpack.c.b16 %v969, %v969
      %v1034 = vpack.c.b16 %v970, %v970
      %v1035 = vpack.c.b16 %v971, %v971
      %v1036 = vpack.c.b16 %v972, %v972
      %v1037 = vpack.c.b16 %v973, %v973
      %v1038 = vpack.c.b16 %v974, %v974
      %v1039 = vpack.c.b16 %v975, %v975
      %v1040 = vpack.c.b16 %v976, %v976
      %v1041 = vpack.c.b16 %v977, %v977
      %v1042 = vpack.c.b16 %v978, %v978
      %v1043 = vpack.c.b16 %v979, %v979
      %v1044 = vpack.c.b16 %v980, %v980
      %v1045 = vpack.c.b16 %v981, %v981
      %v1046 = vpack.c.b16 %v982, %v982
      %1111 = vst [vmem:[%s172] sm:$0xf] %v983
      %1112 = vst [vmem:[%s172 + $0x4] sm:$0xf] %v984
      %1113 = vst [vmem:[%s172 + $0x8] sm:$0xf] %v985
      %1114 = vst [vmem:[%s172 + $0xc] sm:$0xf] %v986
      %1115 = vst [vmem:[%s172 + $0x10] sm:$0xf] %v987
      %1116 = vst [vmem:[%s172 + $0x14] sm:$0xf] %v988
      %1117 = vst [vmem:[%s172 + $0x18] sm:$0xf] %v989
      %1118 = vst [vmem:[%s172 + $0x1c] sm:$0xf] %v990
      %1119 = vst [vmem:[%s172 + $0x20] sm:$0xf] %v991
      %1120 = vst [vmem:[%s172 + $0x24] sm:$0xf] %v992
      %1121 = vst [vmem:[%s172 + $0x28] sm:$0xf] %v993
      %1122 = vst [vmem:[%s172 + $0x2c] sm:$0xf] %v994
      %1123 = vst [vmem:[%s172 + $0x30] sm:$0xf] %v995
      %1124 = vst [vmem:[%s172 + $0x34] sm:$0xf] %v996
      %1125 = vst [vmem:[%s172 + $0x38] sm:$0xf] %v997
      %1126 = vst [vmem:[%s172 + $0x3c] sm:$0xf] %v998
      %1127 = vst [vmem:[%s172 + $0x40] sm:$0xf] %v999
      %1128 = vst [vmem:[%s172 + $0x44] sm:$0xf] %v1000
      %1129 = vst [vmem:[%s172 + $0x48] sm:$0xf] %v1001
      %1130 = vst [vmem:[%s172 + $0x4c] sm:$0xf] %v1002
      %1131 = vst [vmem:[%s172 + $0x50] sm:$0xf] %v1003
      %1132 = vst [vmem:[%s172 + $0x54] sm:$0xf] %v1004
      %1133 = vst [vmem:[%s172 + $0x58] sm:$0xf] %v1005
      %1134 = vst [vmem:[%s172 + $0x5c] sm:$0xf] %v1006
      %1135 = vst [vmem:[%s172 + $0x60] sm:$0xf] %v1007
      %1136 = vst [vmem:[%s172 + $0x64] sm:$0xf] %v1008
      %1137 = vst [vmem:[%s172 + $0x68] sm:$0xf] %v1009
      %1138 = vst [vmem:[%s172 + $0x6c] sm:$0xf] %v1010
      %1139 = vst [vmem:[%s172 + $0x70] sm:$0xf] %v1011
      %1140 = vst [vmem:[%s172 + $0x74] sm:$0xf] %v1012
      %1141 = vst [vmem:[%s172 + $0x78] sm:$0xf] %v1013
      %1142 = vst [vmem:[%s172 + $0x7c] sm:$0xf] %v1014
      %1143 = vst [vmem:[%s172 + $0x80] sm:$0xf] %v1015
      %1144 = vst [vmem:[%s172 + $0x84] sm:$0xf] %v1016
      %1145 = vst [vmem:[%s172 + $0x88] sm:$0xf] %v1017
      %1146 = vst [vmem:[%s172 + $0x8c] sm:$0xf] %v1018
      %1147 = vst [vmem:[%s172 + $0x90] sm:$0xf] %v1019
      %1148 = vst [vmem:[%s172 + $0x94] sm:$0xf] %v1020
      %1149 = vst [vmem:[%s172 + $0x98] sm:$0xf] %v1021
      %1150 = vst [vmem:[%s172 + $0x9c] sm:$0xf] %v1022
      %1151 = vst [vmem:[%s172 + $0xa0] sm:$0xf] %v1023
      %1152 = vst [vmem:[%s172 + $0xa4] sm:$0xf] %v1024
      %1153 = vst [vmem:[%s172 + $0xa8] sm:$0xf] %v1025
      %1154 = vst [vmem:[%s172 + $0xac] sm:$0xf] %v1026
      %1155 = vst [vmem:[%s172 + $0xb0] sm:$0xf] %v1027
      %1156 = vst [vmem:[%s172 + $0xb4] sm:$0xf] %v1028
      %1157 = vst [vmem:[%s172 + $0xb8] sm:$0xf] %v1029
      %1158 = vst [vmem:[%s172 + $0xbc] sm:$0xf] %v1030
      %1159 = vst [vmem:[%s172 + $0xc0] sm:$0xf] %v1031
      %1160 = vst [vmem:[%s172 + $0xc4] sm:$0xf] %v1032
      %1161 = vst [vmem:[%s172 + $0xc8] sm:$0xf] %v1033
      %1162 = vst [vmem:[%s172 + $0xcc] sm:$0xf] %v1034
      %1163 = vst [vmem:[%s172 + $0xd0] sm:$0xf] %v1035
      %1164 = vst [vmem:[%s172 + $0xd4] sm:$0xf] %v1036
      %1165 = vst [vmem:[%s172 + $0xd8] sm:$0xf] %v1037
      %1166 = vst [vmem:[%s172 + $0xdc] sm:$0xf] %v1038
      %1167 = vst [vmem:[%s172 + $0xe0] sm:$0xf] %v1039
      %1168 = vst [vmem:[%s172 + $0xe4] sm:$0xf] %v1040
      %1169 = vst [vmem:[%s172 + $0xe8] sm:$0xf] %v1041
      %1170 = vst [vmem:[%s172 + $0xec] sm:$0xf] %v1042
      %1171 = vst [vmem:[%s172 + $0xf0] sm:$0xf] %v1043
      %1172 = vst [vmem:[%s172 + $0xf4] sm:$0xf] %v1044
      %1173 = vst [vmem:[%s172 + $0xf8] sm:$0xf] %v1045
      %1174 = vst [vmem:[%s172 + $0xfc] sm:$0xf] %v1046
      %s1175 = smul.u32 64, %s14
      %p1176 = scmp.lt.s32.totalorder %s1175, 255
      %s1177 = scalar_select %p1176, %s1175, 255
      %s1178 = smul.addr %s1177, 4
      %s1179 = scalar_lea.vmem %s3, %s1178
      // Predicated region
      $region33: #{cnn_classifier_forward.5} parent=31 // pred_check
        %p1180 = pneg %p100
      $region34: #{cnn_classifier_forward.5} parent=31 // pred_check_branch
        %1182 = sbr.rel (%p1180) target = $region36
      $region35: #{cnn_classifier_forward.5} parent=31 // pred_region
        %s1183 = smul.u32 64, %s14
      $region36: #{cnn_classifier_forward.5} parent=31 // pred_fallthru
        _
    $region32: #{cnn_classifier_forward.5} parent=5 // pred_fallthru
      _
    %p1184 = scmp.le.s32.totalorder 2, %s9
    // Predicated region
    $region37: #{cnn_classifier_forward.5} parent=5 // pred_check
      %p1185 = pneg %p1184
    $region38: #{cnn_classifier_forward.5} parent=5 // pred_check_branch
      %1187 = sbr.rel (%p1185) target = $region40
    $region39: #{cnn_classifier_forward.5} parent=5 // pred_region
      %s1188 = ssub.s32 %s9, 2
      // Predicated region
      $region41: #{cnn_classifier_forward.5} parent=39 // pred_check
        %p1189 = pneg %p106
      $region42: #{cnn_classifier_forward.5} parent=39 // pred_check_branch
        %1191 = sbr.rel (%p1189) target = $region44
      $region43: #{cnn_classifier_forward.5} parent=39 // pred_region
        %s1192 = smul.u32 64, %s15
        %p1193 = scmp.lt.s32.totalorder %s1192, 255
        %s1194 = scalar_select %p1193, %s1192, 255
        %s1195 = smul.addr %s1194, 4
        %s1196 = scalar_lea.vmem %s3, %s1195
      $region44: #{cnn_classifier_forward.5} parent=39 // pred_fallthru
        _
    $region40: #{cnn_classifier_forward.5} parent=5 // pred_fallthru
      _
  $region6: #{cnn_classifier_forward.5} parent=0 // loop_footer
    %s13 = sadd.s32 1, %s9
  $region7: #{cnn_classifier_forward.5} parent=0 // loop_footer_branch
    %8 = sbr.rel target = $region3
  $region8: #{cnn_classifier_forward.5} parent=0 // loop_exit
    _

// kernel: squeeze.10
$region0: #{squeeze.10}
  %s0 = inlined_call_operand.vmem [shape: bf16[2,14,14,128], index: 0, kind: input, shape index: {}]
  %s1 = inlined_call_operand.vmem [shape: bf16[392,128], index: 1, kind: output, shape index: {}]
  $region1: #{squeeze.10} parent=0
    #allocation0 [shape = 'u8[200704]{0}', space=vmem, size = 0x31000, scoped, tag = 'scoped mem for output reshape']
    #allocation1 [shape = 'u8[229376]{0}', space=vmem, size = 0x38000, scoped, tag = 'scoped mem for input reshape']
    %s3 = smul.u32 4, 2
    %s4 = sshll.u32 1, %s3
    %s5 = ssub.s32 %s4, 1
    %s6 = smul.addr 4, 55
    %s7 = scalar_lea.vmem %s0, %s6
    %s8 = sshrl.u32 %s5, 1
    %s9 = sor.u32 %s5, %s8
    %s10 = sand.u32 %s9, 85
    %s11 = sshrl.u32 %s10, 1
    %s12 = sor.u32 %s10, %s11
    %s13 = sand.u32 51, %s12
    %s14 = sshrl.u32 %s13, 2
    %s15 = sor.u32 %s13, %s14
    %s16 = sand.u32 15, %s15
    %v17 = vld [vmem:[%s7] sm:%s16]
    %v18 = vunpack.c.l.bf16 %v17
    %v19 = vunpack.c.h.bf16 %v17
    %s20 = scalar_lea.vmem [#allocation1], 440
    %21 = vst [vmem:[%s20] sm:%s5] %v18
    %s22 = smul.addr 4, 54
    %s23 = scalar_lea.vmem %s0, %s22
    %s24 = sshrl.u32 %s5, 1
    %s25 = sor.u32 %s5, %s24
    %s26 = sand.u32 %s25, 85
    %s27 = sshrl.u32 %s26, 1
    %s28 = sor.u32 %s26, %s27
    %s29 = sand.u32 51, %s28
    %s30 = sshrl.u32 %s29, 2
    %s31 = sor.u32 %s29, %s30
    %s32 = sand.u32 15, %s31
    %v33 = vld [vmem:[%s23] sm:%s32]
    %v34 = vunpack.c.l.bf16 %v33
    %v35 = vunpack.c.h.bf16 %v33
    %s36 = scalar_lea.vmem [#allocation1], 432
    %37 = vst [vmem:[%s36] sm:%s5] %v34
    %s38 = smul.addr 4, 53
    %s39 = scalar_lea.vmem %s0, %s38
    %s40 = sshrl.u32 %s5, 1
    %s41 = sor.u32 %s5, %s40
    %s42 = sand.u32 %s41, 85
    %s43 = sshrl.u32 %s42, 1
    %s44 = sor.u32 %s42, %s43
    %s45 = sand.u32 51, %s44
    %s46 = sshrl.u32 %s45, 2
    %s47 = sor.u32 %s45, %s46
    %s48 = sand.u32 15, %s47
    %v49 = vld [vmem:[%s39] sm:%s48]
    %v50 = vunpack.c.l.bf16 %v49
    %v51 = vunpack.c.h.bf16 %v49
    %s52 = scalar_lea.vmem [#allocation1], 424
    %53 = vst [vmem:[%s52] sm:%s5] %v50
    %s54 = smul.addr 4, 52
    %s55 = scalar_lea.vmem %s0, %s54
    %s56 = sshrl.u32 %s5, 1
    %s57 = sor.u32 %s5, %s56
    %s58 = sand.u32 %s57, 85
    %s59 = sshrl.u32 %s58, 1
    %s60 = sor.u32 %s58, %s59
    %s61 = sand.u32 51, %s60
    %s62 = sshrl.u32 %s61, 2
    %s63 = sor.u32 %s61, %s62
    %s64 = sand.u32 15, %s63
    %v65 = vld [vmem:[%s55] sm:%s64]
    %v66 = vunpack.c.l.bf16 %v65
    %v67 = vunpack.c.h.bf16 %v65
    %s68 = scalar_lea.vmem [#allocation1], 416
    %69 = vst [vmem:[%s68] sm:%s5] %v66
    %s70 = smul.addr 4, 51
    %s71 = scalar_lea.vmem %s0, %s70
    %s72 = sshrl.u32 %s5, 1
    %s73 = sor.u32 %s5, %s72
    %s74 = sand.u32 %s73, 85
    %s75 = sshrl.u32 %s74, 1
    %s76 = sor.u32 %s74, %s75
    %s77 = sand.u32 51, %s76
    %s78 = sshrl.u32 %s77, 2
    %s79 = sor.u32 %s77, %s78
    %s80 = sand.u32 15, %s79
    %v81 = vld [vmem:[%s71] sm:%s80]
    %v82 = vunpack.c.l.bf16 %v81
    %v83 = vunpack.c.h.bf16 %v81
    %s84 = scalar_lea.vmem [#allocation1], 408
    %85 = vst [vmem:[%s84] sm:%s5] %v82
    %s86 = smul.addr 4, 50
    %s87 = scalar_lea.vmem %s0, %s86
    %s88 = sshrl.u32 %s5, 1
    %s89 = sor.u32 %s5, %s88
    %s90 = sand.u32 %s89, 85
    %s91 = sshrl.u32 %s90, 1
    %s92 = sor.u32 %s90, %s91
    %s93 = sand.u32 51, %s92
    %s94 = sshrl.u32 %s93, 2
    %s95 = sor.u32 %s93, %s94
    %s96 = sand.u32 15, %s95
    %v97 = vld [vmem:[%s87] sm:%s96]
    %v98 = vunpack.c.l.bf16 %v97
    %v99 = vunpack.c.h.bf16 %v97
    %s100 = scalar_lea.vmem [#allocation1], 400
    %101 = vst [vmem:[%s100] sm:%s5] %v98
    %s102 = smul.addr 4, 49
    %s103 = scalar_lea.vmem %s0, %s102
    %s104 = sshrl.u32 %s5, 1
    %s105 = sor.u32 %s5, %s104
    %s106 = sand.u32 %s105, 85
    %s107 = sshrl.u32 %s106, 1
    %s108 = sor.u32 %s106, %s107
    %s109 = sand.u32 51, %s108
    %s110 = sshrl.u32 %s109, 2
    %s111 = sor.u32 %s109, %s110
    %s112 = sand.u32 15, %s111
    %v113 = vld [vmem:[%s103] sm:%s112]
    %v114 = vunpack.c.l.bf16 %v113
    %v115 = vunpack.c.h.bf16 %v113
    %s116 = scalar_lea.vmem [#allocation1], 392
    %117 = vst [vmem:[%s116] sm:%s5] %v114
    %s118 = smul.addr 4, 48
    %s119 = scalar_lea.vmem %s0, %s118
    %s120 = sshrl.u32 %s5, 1
    %s121 = sor.u32 %s5, %s120
    %s122 = sand.u32 %s121, 85
    %s123 = sshrl.u32 %s122, 1
    %s124 = sor.u32 %s122, %s123
    %s125 = sand.u32 51, %s124
    %s126 = sshrl.u32 %s125, 2
    %s127 = sor.u32 %s125, %s126
    %s128 = sand.u32 15, %s127
    %v129 = vld [vmem:[%s119] sm:%s128]
    %v130 = vunpack.c.l.bf16 %v129
    %v131 = vunpack.c.h.bf16 %v129
    %s132 = scalar_lea.vmem [#allocation1], 384
    %133 = vst [vmem:[%s132] sm:%s5] %v130
    %s134 = smul.addr 4, 47
    %s135 = scalar_lea.vmem %s0, %s134
    %s136 = sshrl.u32 %s5, 1
    %s137 = sor.u32 %s5, %s136
    %s138 = sand.u32 %s137, 85
    %s139 = sshrl.u32 %s138, 1
    %s140 = sor.u32 %s138, %s139
    %s141 = sand.u32 51, %s140
    %s142 = sshrl.u32 %s141, 2
    %s143 = sor.u32 %s141, %s142
    %s144 = sand.u32 15, %s143
    %v145 = vld [vmem:[%s135] sm:%s144]
    %v146 = vunpack.c.l.bf16 %v145
    %v147 = vunpack.c.h.bf16 %v145
    %s148 = scalar_lea.vmem [#allocation1], 376
    %149 = vst [vmem:[%s148] sm:%s5] %v146
    %s150 = smul.addr 4, 46
    %s151 = scalar_lea.vmem %s0, %s150
    %s152 = sshrl.u32 %s5, 1
    %s153 = sor.u32 %s5, %s152
    %s154 = sand.u32 %s153, 85
    %s155 = sshrl.u32 %s154, 1
    %s156 = sor.u32 %s154, %s155
    %s157 = sand.u32 51, %s156
    %s158 = sshrl.u32 %s157, 2
    %s159 = sor.u32 %s157, %s158
    %s160 = sand.u32 15, %s159
    %v161 = vld [vmem:[%s151] sm:%s160]
    %v162 = vunpack.c.l.bf16 %v161
    %v163 = vunpack.c.h.bf16 %v161
    %s164 = scalar_lea.vmem [#allocation1], 368
    %165 = vst [vmem:[%s164] sm:%s5] %v162
    %s166 = smul.addr 4, 45
    %s167 = scalar_lea.vmem %s0, %s166
    %s168 = sshrl.u32 %s5, 1
    %s169 = sor.u32 %s5, %s168
    %s170 = sand.u32 %s169, 85
    %s171 = sshrl.u32 %s170, 1
    %s172 = sor.u32 %s170, %s171
    %s173 = sand.u32 51, %s172
    %s174 = sshrl.u32 %s173, 2
    %s175 = sor.u32 %s173, %s174
    %s176 = sand.u32 15, %s175
    %v177 = vld [vmem:[%s167] sm:%s176]
    %v178 = vunpack.c.l.bf16 %v177
    %v179 = vunpack.c.h.bf16 %v177
    %s180 = scalar_lea.vmem [#allocation1], 360
    %181 = vst [vmem:[%s180] sm:%s5] %v178
    %s182 = smul.addr 4, 44
    %s183 = scalar_lea.vmem %s0, %s182
    %s184 = sshrl.u32 %s5, 1
    %s185 = sor.u32 %s5, %s184
    %s186 = sand.u32 %s185, 85
    %s187 = sshrl.u32 %s186, 1
    %s188 = sor.u32 %s186, %s187
    %s189 = sand.u32 51, %s188
    %s190 = sshrl.u32 %s189, 2
    %s191 = sor.u32 %s189, %s190
    %s192 = sand.u32 15, %s191
    %v193 = vld [vmem:[%s183] sm:%s192]
    %v194 = vunpack.c.l.bf16 %v193
    %v195 = vunpack.c.h.bf16 %v193
    %s196 = scalar_lea.vmem [#allocation1], 352
    %197 = vst [vmem:[%s196] sm:%s5] %v194
    %s198 = smul.addr 4, 43
    %s199 = scalar_lea.vmem %s0, %s198
    %s200 = sshrl.u32 %s5, 1
    %s201 = sor.u32 %s5, %s200
    %s202 = sand.u32 %s201, 85
    %s203 = sshrl.u32 %s202, 1
    %s204 = sor.u32 %s202, %s203
    %s205 = sand.u32 51, %s204
    %s206 = sshrl.u32 %s205, 2
    %s207 = sor.u32 %s205, %s206
    %s208 = sand.u32 15, %s207
    %v209 = vld [vmem:[%s199] sm:%s208]
    %v210 = vunpack.c.l.bf16 %v209
    %v211 = vunpack.c.h.bf16 %v209
    %s212 = scalar_lea.vmem [#allocation1], 344
    %213 = vst [vmem:[%s212] sm:%s5] %v210
    %s214 = smul.addr 4, 42
    %s215 = scalar_lea.vmem %s0, %s214
    %s216 = sshrl.u32 %s5, 1
    %s217 = sor.u32 %s5, %s216
    %s218 = sand.u32 %s217, 85
    %s219 = sshrl.u32 %s218, 1
    %s220 = sor.u32 %s218, %s219
    %s221 = sand.u32 51, %s220
    %s222 = sshrl.u32 %s221, 2
    %s223 = sor.u32 %s221, %s222
    %s224 = sand.u32 15, %s223
    %v225 = vld [vmem:[%s215] sm:%s224]
    %v226 = vunpack.c.l.bf16 %v225
    %v227 = vunpack.c.h.bf16 %v225
    %s228 = scalar_lea.vmem [#allocation1], 336
    %229 = vst [vmem:[%s228] sm:%s5] %v226
    %s230 = smul.addr 4, 41
    %s231 = scalar_lea.vmem %s0, %s230
    %s232 = sshrl.u32 %s5, 1
    %s233 = sor.u32 %s5, %s232
    %s234 = sand.u32 %s233, 85
    %s235 = sshrl.u32 %s234, 1
    %s236 = sor.u32 %s234, %s235
    %s237 = sand.u32 51, %s236
    %s238 = sshrl.u32 %s237, 2
    %s239 = sor.u32 %s237, %s238
    %s240 = sand.u32 15, %s239
    %v241 = vld [vmem:[%s231] sm:%s240]
    %v242 = vunpack.c.l.bf16 %v241
    %v243 = vunpack.c.h.bf16 %v241
    %s244 = scalar_lea.vmem [#allocation1], 328
    %245 = vst [vmem:[%s244] sm:%s5] %v242
    %s246 = smul.addr 4, 40
    %s247 = scalar_lea.vmem %s0, %s246
    %s248 = sshrl.u32 %s5, 1
    %s249 = sor.u32 %s5, %s248
    %s250 = sand.u32 %s249, 85
    %s251 = sshrl.u32 %s250, 1
    %s252 = sor.u32 %s250, %s251
    %s253 = sand.u32 51, %s252
    %s254 = sshrl.u32 %s253, 2
    %s255 = sor.u32 %s253, %s254
    %s256 = sand.u32 15, %s255
    %v257 = vld [vmem:[%s247] sm:%s256]
    %v258 = vunpack.c.l.bf16 %v257
    %v259 = vunpack.c.h.bf16 %v257
    %s260 = scalar_lea.vmem [#allocation1], 320
    %261 = vst [vmem:[%s260] sm:%s5] %v258
    %s262 = smul.addr 4, 39
    %s263 = scalar_lea.vmem %s0, %s262
    %s264 = sshrl.u32 %s5, 1
    %s265 = sor.u32 %s5, %s264
    %s266 = sand.u32 %s265, 85
    %s267 = sshrl.u32 %s266, 1
    %s268 = sor.u32 %s266, %s267
    %s269 = sand.u32 51, %s268
    %s270 = sshrl.u32 %s269, 2
    %s271 = sor.u32 %s269, %s270
    %s272 = sand.u32 15, %s271
    %v273 = vld [vmem:[%s263] sm:%s272]
    %v274 = vunpack.c.l.bf16 %v273
    %v275 = vunpack.c.h.bf16 %v273
    %s276 = scalar_lea.vmem [#allocation1], 312
    %277 = vst [vmem:[%s276] sm:%s5] %v274
    %s278 = smul.addr 4, 38
    %s279 = scalar_lea.vmem %s0, %s278
    %s280 = sshrl.u32 %s5, 1
    %s281 = sor.u32 %s5, %s280
    %s282 = sand.u32 %s281, 85
    %s283 = sshrl.u32 %s282, 1
    %s284 = sor.u32 %s282, %s283
    %s285 = sand.u32 51, %s284
    %s286 = sshrl.u32 %s285, 2
    %s287 = sor.u32 %s285, %s286
    %s288 = sand.u32 15, %s287
    %v289 = vld [vmem:[%s279] sm:%s288]
    %v290 = vunpack.c.l.bf16 %v289
    %v291 = vunpack.c.h.bf16 %v289
    %s292 = scalar_lea.vmem [#allocation1], 304
    %293 = vst [vmem:[%s292] sm:%s5] %v290
    %s294 = smul.addr 4, 37
    %s295 = scalar_lea.vmem %s0, %s294
    %s296 = sshrl.u32 %s5, 1
    %s297 = sor.u32 %s5, %s296
    %s298 = sand.u32 %s297, 85
    %s299 = sshrl.u32 %s298, 1
    %s300 = sor.u32 %s298, %s299
    %s301 = sand.u32 51, %s300
    %s302 = sshrl.u32 %s301, 2
    %s303 = sor.u32 %s301, %s302
    %s304 = sand.u32 15, %s303
    %v305 = vld [vmem:[%s295] sm:%s304]
    %v306 = vunpack.c.l.bf16 %v305
    %v307 = vunpack.c.h.bf16 %v305
    %s308 = scalar_lea.vmem [#allocation1], 296
    %309 = vst [vmem:[%s308] sm:%s5] %v306
    %s310 = smul.addr 4, 36
    %s311 = scalar_lea.vmem %s0, %s310
    %s312 = sshrl.u32 %s5, 1
    %s313 = sor.u32 %s5, %s312
    %s314 = sand.u32 %s313, 85
    %s315 = sshrl.u32 %s314, 1
    %s316 = sor.u32 %s314, %s315
    %s317 = sand.u32 51, %s316
    %s318 = sshrl.u32 %s317, 2
    %s319 = sor.u32 %s317, %s318
    %s320 = sand.u32 15, %s319
    %v321 = vld [vmem:[%s311] sm:%s320]
    %v322 = vunpack.c.l.bf16 %v321
    %v323 = vunpack.c.h.bf16 %v321
    %s324 = scalar_lea.vmem [#allocation1], 288
    %325 = vst [vmem:[%s324] sm:%s5] %v322
    %s326 = smul.addr 4, 35
    %s327 = scalar_lea.vmem %s0, %s326
    %s328 = sshrl.u32 %s5, 1
    %s329 = sor.u32 %s5, %s328
    %s330 = sand.u32 %s329, 85
    %s331 = sshrl.u32 %s330, 1
    %s332 = sor.u32 %s330, %s331
    %s333 = sand.u32 51, %s332
    %s334 = sshrl.u32 %s333, 2
    %s335 = sor.u32 %s333, %s334
    %s336 = sand.u32 15, %s335
    %v337 = vld [vmem:[%s327] sm:%s336]
    %v338 = vunpack.c.l.bf16 %v337
    %v339 = vunpack.c.h.bf16 %v337
    %s340 = scalar_lea.vmem [#allocation1], 280
    %341 = vst [vmem:[%s340] sm:%s5] %v338
    %s342 = smul.addr 4, 34
    %s343 = scalar_lea.vmem %s0, %s342
    %s344 = sshrl.u32 %s5, 1
    %s345 = sor.u32 %s5, %s344
    %s346 = sand.u32 %s345, 85
    %s347 = sshrl.u32 %s346, 1
    %s348 = sor.u32 %s346, %s347
    %s349 = sand.u32 51, %s348
    %s350 = sshrl.u32 %s349, 2
    %s351 = sor.u32 %s349, %s350
    %s352 = sand.u32 15, %s351
    %v353 = vld [vmem:[%s343] sm:%s352]
    %v354 = vunpack.c.l.bf16 %v353
    %v355 = vunpack.c.h.bf16 %v353
    %s356 = scalar_lea.vmem [#allocation1], 272
    %357 = vst [vmem:[%s356] sm:%s5] %v354
    %s358 = smul.addr 4, 33
    %s359 = scalar_lea.vmem %s0, %s358
    %s360 = sshrl.u32 %s5, 1
    %s361 = sor.u32 %s5, %s360
    %s362 = sand.u32 %s361, 85
    %s363 = sshrl.u32 %s362, 1
    %s364 = sor.u32 %s362, %s363
    %s365 = sand.u32 51, %s364
    %s366 = sshrl.u32 %s365, 2
    %s367 = sor.u32 %s365, %s366
    %s368 = sand.u32 15, %s367
    %v369 = vld [vmem:[%s359] sm:%s368]
    %v370 = vunpack.c.l.bf16 %v369
    %v371 = vunpack.c.h.bf16 %v369
    %s372 = scalar_lea.vmem [#allocation1], 264
    %373 = vst [vmem:[%s372] sm:%s5] %v370
    %s374 = smul.addr 4, 32
    %s375 = scalar_lea.vmem %s0, %s374
    %s376 = sshrl.u32 %s5, 1
    %s377 = sor.u32 %s5, %s376
    %s378 = sand.u32 %s377, 85
    %s379 = sshrl.u32 %s378, 1
    %s380 = sor.u32 %s378, %s379
    %s381 = sand.u32 51, %s380
    %s382 = sshrl.u32 %s381, 2
    %s383 = sor.u32 %s381, %s382
    %s384 = sand.u32 15, %s383
    %v385 = vld [vmem:[%s375] sm:%s384]
    %v386 = vunpack.c.l.bf16 %v385
    %v387 = vunpack.c.h.bf16 %v385
    %s388 = scalar_lea.vmem [#allocation1], 256
    %389 = vst [vmem:[%s388] sm:%s5] %v386
    %s390 = smul.addr 4, 31
    %s391 = scalar_lea.vmem %s0, %s390
    %s392 = sshrl.u32 %s5, 1
    %s393 = sor.u32 %s5, %s392
    %s394 = sand.u32 %s393, 85
    %s395 = sshrl.u32 %s394, 1
    %s396 = sor.u32 %s394, %s395
    %s397 = sand.u32 51, %s396
    %s398 = sshrl.u32 %s397, 2
    %s399 = sor.u32 %s397, %s398
    %s400 = sand.u32 15, %s399
    %v401 = vld [vmem:[%s391] sm:%s400]
    %v402 = vunpack.c.l.bf16 %v401
    %v403 = vunpack.c.h.bf16 %v401
    %s404 = scalar_lea.vmem [#allocation1], 248
    %405 = vst [vmem:[%s404] sm:%s5] %v402
    %s406 = smul.addr 4, 30
    %s407 = scalar_lea.vmem %s0, %s406
    %s408 = sshrl.u32 %s5, 1
    %s409 = sor.u32 %s5, %s408
    %s410 = sand.u32 %s409, 85
    %s411 = sshrl.u32 %s410, 1
    %s412 = sor.u32 %s410, %s411
    %s413 = sand.u32 51, %s412
    %s414 = sshrl.u32 %s413, 2
    %s415 = sor.u32 %s413, %s414
    %s416 = sand.u32 15, %s415
    %v417 = vld [vmem:[%s407] sm:%s416]
    %v418 = vunpack.c.l.bf16 %v417
    %v419 = vunpack.c.h.bf16 %v417
    %s420 = scalar_lea.vmem [#allocation1], 240
    %421 = vst [vmem:[%s420] sm:%s5] %v418
    %s422 = smul.addr 4, 29
    %s423 = scalar_lea.vmem %s0, %s422
    %s424 = sshrl.u32 %s5, 1
    %s425 = sor.u32 %s5, %s424
    %s426 = sand.u32 %s425, 85
    %s427 = sshrl.u32 %s426, 1
    %s428 = sor.u32 %s426, %s427
    %s429 = sand.u32 51, %s428
    %s430 = sshrl.u32 %s429, 2
    %s431 = sor.u32 %s429, %s430
    %s432 = sand.u32 15, %s431
    %v433 = vld [vmem:[%s423] sm:%s432]
    %v434 = vunpack.c.l.bf16 %v433
    %v435 = vunpack.c.h.bf16 %v433
    %s436 = scalar_lea.vmem [#allocation1], 232
    %437 = vst [vmem:[%s436] sm:%s5] %v434
    %s438 = smul.addr 4, 28
    %s439 = scalar_lea.vmem %s0, %s438
    %s440 = sshrl.u32 %s5, 1
    %s441 = sor.u32 %s5, %s440
    %s442 = sand.u32 %s441, 85
    %s443 = sshrl.u32 %s442, 1
    %s444 = sor.u32 %s442, %s443
    %s445 = sand.u32 51, %s444
    %s446 = sshrl.u32 %s445, 2
    %s447 = sor.u32 %s445, %s446
    %s448 = sand.u32 15, %s447
    %v449 = vld [vmem:[%s439] sm:%s448]
    %v450 = vunpack.c.l.bf16 %v449
    %v451 = vunpack.c.h.bf16 %v449
    %s452 = scalar_lea.vmem [#allocation1], 224
    %453 = vst [vmem:[%s452] sm:%s5] %v450
    %s454 = smul.addr 4, 27
    %s455 = scalar_lea.vmem %s0, %s454
    %s456 = sshrl.u32 %s5, 1
    %s457 = sor.u32 %s5, %s456
    %s458 = sand.u32 %s457, 85
    %s459 = sshrl.u32 %s458, 1
    %s460 = sor.u32 %s458, %s459
    %s461 = sand.u32 51, %s460
    %s462 = sshrl.u32 %s461, 2
    %s463 = sor.u32 %s461, %s462
    %s464 = sand.u32 15, %s463
    %v465 = vld [vmem:[%s455] sm:%s464]
    %v466 = vunpack.c.l.bf16 %v465
    %v467 = vunpack.c.h.bf16 %v465
    %s468 = scalar_lea.vmem [#allocation1], 216
    %469 = vst [vmem:[%s468] sm:%s5] %v466
    %s470 = smul.addr 4, 26
    %s471 = scalar_lea.vmem %s0, %s470
    %s472 = sshrl.u32 %s5, 1
    %s473 = sor.u32 %s5, %s472
    %s474 = sand.u32 %s473, 85
    %s475 = sshrl.u32 %s474, 1
    %s476 = sor.u32 %s474, %s475
    %s477 = sand.u32 51, %s476
    %s478 = sshrl.u32 %s477, 2
    %s479 = sor.u32 %s477, %s478
    %s480 = sand.u32 15, %s479
    %v481 = vld [vmem:[%s471] sm:%s480]
    %v482 = vunpack.c.l.bf16 %v481
    %v483 = vunpack.c.h.bf16 %v481
    %s484 = scalar_lea.vmem [#allocation1], 208
    %485 = vst [vmem:[%s484] sm:%s5] %v482
    %s486 = smul.addr 4, 25
    %s487 = scalar_lea.vmem %s0, %s486
    %s488 = sshrl.u32 %s5, 1
    %s489 = sor.u32 %s5, %s488
    %s490 = sand.u32 %s489, 85
    %s491 = sshrl.u32 %s490, 1
    %s492 = sor.u32 %s490, %s491
    %s493 = sand.u32 51, %s492
    %s494 = sshrl.u32 %s493, 2
    %s495 = sor.u32 %s493, %s494
    %s496 = sand.u32 15, %s495
    %v497 = vld [vmem:[%s487] sm:%s496]
    %v498 = vunpack.c.l.bf16 %v497
    %v499 = vunpack.c.h.bf16 %v497
    %s500 = scalar_lea.vmem [#allocation1], 200
    %501 = vst [vmem:[%s500] sm:%s5] %v498
    %s502 = smul.addr 4, 24
    %s503 = scalar_lea.vmem %s0, %s502
    %s504 = sshrl.u32 %s5, 1
    %s505 = sor.u32 %s5, %s504
    %s506 = sand.u32 %s505, 85
    %s507 = sshrl.u32 %s506, 1
    %s508 = sor.u32 %s506, %s507
    %s509 = sand.u32 51, %s508
    %s510 = sshrl.u32 %s509, 2
    %s511 = sor.u32 %s509, %s510
    %s512 = sand.u32 15, %s511
    %v513 = vld [vmem:[%s503] sm:%s512]
    %v514 = vunpack.c.l.bf16 %v513
    %v515 = vunpack.c.h.bf16 %v513
    %s516 = scalar_lea.vmem [#allocation1], 192
    %517 = vst [vmem:[%s516] sm:%s5] %v514
    %s518 = smul.addr 4, 23
    %s519 = scalar_lea.vmem %s0, %s518
    %s520 = sshrl.u32 %s5, 1
    %s521 = sor.u32 %s5, %s520
    %s522 = sand.u32 %s521, 85
    %s523 = sshrl.u32 %s522, 1
    %s524 = sor.u32 %s522, %s523
    %s525 = sand.u32 51, %s524
    %s526 = sshrl.u32 %s525, 2
    %s527 = sor.u32 %s525, %s526
    %s528 = sand.u32 15, %s527
    %v529 = vld [vmem:[%s519] sm:%s528]
    %v530 = vunpack.c.l.bf16 %v529
    %v531 = vunpack.c.h.bf16 %v529
    %s532 = scalar_lea.vmem [#allocation1], 184
    %533 = vst [vmem:[%s532] sm:%s5] %v530
    %s534 = smul.addr 4, 22
    %s535 = scalar_lea.vmem %s0, %s534
    %s536 = sshrl.u32 %s5, 1
    %s537 = sor.u32 %s5, %s536
    %s538 = sand.u32 %s537, 85
    %s539 = sshrl.u32 %s538, 1
    %s540 = sor.u32 %s538, %s539
    %s541 = sand.u32 51, %s540
    %s542 = sshrl.u32 %s541, 2
    %s543 = sor.u32 %s541, %s542
    %s544 = sand.u32 15, %s543
    %v545 = vld [vmem:[%s535] sm:%s544]
    %v546 = vunpack.c.l.bf16 %v545
    %v547 = vunpack.c.h.bf16 %v545
    %s548 = scalar_lea.vmem [#allocation1], 176
    %549 = vst [vmem:[%s548] sm:%s5] %v546
    %s550 = smul.addr 4, 21
    %s551 = scalar_lea.vmem %s0, %s550
    %s552 = sshrl.u32 %s5, 1
    %s553 = sor.u32 %s5, %s552
    %s554 = sand.u32 %s553, 85
    %s555 = sshrl.u32 %s554, 1
    %s556 = sor.u32 %s554, %s555
    %s557 = sand.u32 51, %s556
    %s558 = sshrl.u32 %s557, 2
    %s559 = sor.u32 %s557, %s558
    %s560 = sand.u32 15, %s559
    %v561 = vld [vmem:[%s551] sm:%s560]
    %v562 = vunpack.c.l.bf16 %v561
    %v563 = vunpack.c.h.bf16 %v561
    %s564 = scalar_lea.vmem [#allocation1], 168
    %565 = vst [vmem:[%s564] sm:%s5] %v562
    %s566 = smul.addr 4, 20
    %s567 = scalar_lea.vmem %s0, %s566
    %s568 = sshrl.u32 %s5, 1
    %s569 = sor.u32 %s5, %s568
    %s570 = sand.u32 %s569, 85
    %s571 = sshrl.u32 %s570, 1
    %s572 = sor.u32 %s570, %s571
    %s573 = sand.u32 51, %s572
    %s574 = sshrl.u32 %s573, 2
    %s575 = sor.u32 %s573, %s574
    %s576 = sand.u32 15, %s575
    %v577 = vld [vmem:[%s567] sm:%s576]
    %v578 = vunpack.c.l.bf16 %v577
    %v579 = vunpack.c.h.bf16 %v577
    %s580 = scalar_lea.vmem [#allocation1], 160
    %581 = vst [vmem:[%s580] sm:%s5] %v578
    %s582 = smul.addr 4, 19
    %s583 = scalar_lea.vmem %s0, %s582
    %s584 = sshrl.u32 %s5, 1
    %s585 = sor.u32 %s5, %s584
    %s586 = sand.u32 %s585, 85
    %s587 = sshrl.u32 %s586, 1
    %s588 = sor.u32 %s586, %s587
    %s589 = sand.u32 51, %s588
    %s590 = sshrl.u32 %s589, 2
    %s591 = sor.u32 %s589, %s590
    %s592 = sand.u32 15, %s591
    %v593 = vld [vmem:[%s583] sm:%s592]
    %v594 = vunpack.c.l.bf16 %v593
    %v595 = vunpack.c.h.bf16 %v593
    %s596 = scalar_lea.vmem [#allocation1], 152
    %597 = vst [vmem:[%s596] sm:%s5] %v594
    %s598 = smul.addr 4, 18
    %s599 = scalar_lea.vmem %s0, %s598
    %s600 = sshrl.u32 %s5, 1
    %s601 = sor.u32 %s5, %s600
    %s602 = sand.u32 %s601, 85
    %s603 = sshrl.u32 %s602, 1
    %s604 = sor.u32 %s602, %s603
    %s605 = sand.u32 51, %s604
    %s606 = sshrl.u32 %s605, 2
    %s607 = sor.u32 %s605, %s606
    %s608 = sand.u32 15, %s607
    %v609 = vld [vmem:[%s599] sm:%s608]
    %v610 = vunpack.c.l.bf16 %v609
    %v611 = vunpack.c.h.bf16 %v609
    %s612 = scalar_lea.vmem [#allocation1], 144
    %613 = vst [vmem:[%s612] sm:%s5] %v610
    %s614 = smul.addr 4, 17
    %s615 = scalar_lea.vmem %s0, %s614
    %s616 = sshrl.u32 %s5, 1
    %s617 = sor.u32 %s5, %s616
    %s618 = sand.u32 %s617, 85
    %s619 = sshrl.u32 %s618, 1
    %s620 = sor.u32 %s618, %s619
    %s621 = sand.u32 51, %s620
    %s622 = sshrl.u32 %s621, 2
    %s623 = sor.u32 %s621, %s622
    %s624 = sand.u32 15, %s623
    %v625 = vld [vmem:[%s615] sm:%s624]
    %v626 = vunpack.c.l.bf16 %v625
    %v627 = vunpack.c.h.bf16 %v625
    %s628 = scalar_lea.vmem [#allocation1], 136
    %629 = vst [vmem:[%s628] sm:%s5] %v626
    %s630 = smul.addr 4, 16
    %s631 = scalar_lea.vmem %s0, %s630
    %s632 = sshrl.u32 %s5, 1
    %s633 = sor.u32 %s5, %s632
    %s634 = sand.u32 %s633, 85
    %s635 = sshrl.u32 %s634, 1
    %s636 = sor.u32 %s634, %s635
    %s637 = sand.u32 51, %s636
    %s638 = sshrl.u32 %s637, 2
    %s639 = sor.u32 %s637, %s638
    %s640 = sand.u32 15, %s639
    %v641 = vld [vmem:[%s631] sm:%s640]
    %v642 = vunpack.c.l.bf16 %v641
    %v643 = vunpack.c.h.bf16 %v641
    %s644 = scalar_lea.vmem [#allocation1], 128
    %645 = vst [vmem:[%s644] sm:%s5] %v642
    %s646 = smul.addr 4, 15
    %s647 = scalar_lea.vmem %s0, %s646
    %s648 = sshrl.u32 %s5, 1
    %s649 = sor.u32 %s5, %s648
    %s650 = sand.u32 %s649, 85
    %s651 = sshrl.u32 %s650, 1
    %s652 = sor.u32 %s650, %s651
    %s653 = sand.u32 51, %s652
    %s654 = sshrl.u32 %s653, 2
    %s655 = sor.u32 %s653, %s654
    %s656 = sand.u32 15, %s655
    %v657 = vld [vmem:[%s647] sm:%s656]
    %v658 = vunpack.c.l.bf16 %v657
    %v659 = vunpack.c.h.bf16 %v657
    %s660 = scalar_lea.vmem [#allocation1], 120
    %661 = vst [vmem:[%s660] sm:%s5] %v658
    %s662 = smul.addr 4, 14
    %s663 = scalar_lea.vmem %s0, %s662
    %s664 = sshrl.u32 %s5, 1
    %s665 = sor.u32 %s5, %s664
    %s666 = sand.u32 %s665, 85
    %s667 = sshrl.u32 %s666, 1
    %s668 = sor.u32 %s666, %s667
    %s669 = sand.u32 51, %s668
    %s670 = sshrl.u32 %s669, 2
    %s671 = sor.u32 %s669, %s670
    %s672 = sand.u32 15, %s671
    %v673 = vld [vmem:[%s663] sm:%s672]
    %v674 = vunpack.c.l.bf16 %v673
    %v675 = vunpack.c.h.bf16 %v673
    %s676 = scalar_lea.vmem [#allocation1], 112
    %677 = vst [vmem:[%s676] sm:%s5] %v674
    %s678 = smul.addr 4, 13
    %s679 = scalar_lea.vmem %s0, %s678
    %s680 = sshrl.u32 %s5, 1
    %s681 = sor.u32 %s5, %s680
    %s682 = sand.u32 %s681, 85
    %s683 = sshrl.u32 %s682, 1
    %s684 = sor.u32 %s682, %s683
    %s685 = sand.u32 51, %s684
    %s686 = sshrl.u32 %s685, 2
    %s687 = sor.u32 %s685, %s686
    %s688 = sand.u32 15, %s687
    %v689 = vld [vmem:[%s679] sm:%s688]
    %v690 = vunpack.c.l.bf16 %v689
    %v691 = vunpack.c.h.bf16 %v689
    %s692 = scalar_lea.vmem [#allocation1], 104
    %693 = vst [vmem:[%s692] sm:%s5] %v690
    %s694 = smul.addr 4, 12
    %s695 = scalar_lea.vmem %s0, %s694
    %s696 = sshrl.u32 %s5, 1
    %s697 = sor.u32 %s5, %s696
    %s698 = sand.u32 %s697, 85
    %s699 = sshrl.u32 %s698, 1
    %s700 = sor.u32 %s698, %s699
    %s701 = sand.u32 51, %s700
    %s702 = sshrl.u32 %s701, 2
    %s703 = sor.u32 %s701, %s702
    %s704 = sand.u32 15, %s703
    %v705 = vld [vmem:[%s695] sm:%s704]
    %v706 = vunpack.c.l.bf16 %v705
    %v707 = vunpack.c.h.bf16 %v705
    %s708 = scalar_lea.vmem [#allocation1], 96
    %709 = vst [vmem:[%s708] sm:%s5] %v706
    %s710 = smul.addr 4, 11
    %s711 = scalar_lea.vmem %s0, %s710
    %s712 = sshrl.u32 %s5, 1
    %s713 = sor.u32 %s5, %s712
    %s714 = sand.u32 %s713, 85
    %s715 = sshrl.u32 %s714, 1
    %s716 = sor.u32 %s714, %s715
    %s717 = sand.u32 51, %s716
    %s718 = sshrl.u32 %s717, 2
    %s719 = sor.u32 %s717, %s718
    %s720 = sand.u32 15, %s719
    %v721 = vld [vmem:[%s711] sm:%s720]
    %v722 = vunpack.c.l.bf16 %v721
    %v723 = vunpack.c.h.bf16 %v721
    %s724 = scalar_lea.vmem [#allocation1], 88
    %725 = vst [vmem:[%s724] sm:%s5] %v722
    %s726 = smul.addr 4, 10
    %s727 = scalar_lea.vmem %s0, %s726
    %s728 = sshrl.u32 %s5, 1
    %s729 = sor.u32 %s5, %s728
    %s730 = sand.u32 %s729, 85
    %s731 = sshrl.u32 %s730, 1
    %s732 = sor.u32 %s730, %s731
    %s733 = sand.u32 51, %s732
    %s734 = sshrl.u32 %s733, 2
    %s735 = sor.u32 %s733, %s734
    %s736 = sand.u32 15, %s735
    %v737 = vld [vmem:[%s727] sm:%s736]
    %v738 = vunpack.c.l.bf16 %v737
    %v739 = vunpack.c.h.bf16 %v737
    %s740 = scalar_lea.vmem [#allocation1], 80
    %741 = vst [vmem:[%s740] sm:%s5] %v738
    %s742 = smul.addr 4, 9
    %s743 = scalar_lea.vmem %s0, %s742
    %s744 = sshrl.u32 %s5, 1
    %s745 = sor.u32 %s5, %s744
    %s746 = sand.u32 %s745, 85
    %s747 = sshrl.u32 %s746, 1
    %s748 = sor.u32 %s746, %s747
    %s749 = sand.u32 51, %s748
    %s750 = sshrl.u32 %s749, 2
    %s751 = sor.u32 %s749, %s750
    %s752 = sand.u32 15, %s751
    %v753 = vld [vmem:[%s743] sm:%s752]
    %v754 = vunpack.c.l.bf16 %v753
    %v755 = vunpack.c.h.bf16 %v753
    %s756 = scalar_lea.vmem [#allocation1], 72
    %757 = vst [vmem:[%s756] sm:%s5] %v754
    %s758 = smul.addr 4, 8
    %s759 = scalar_lea.vmem %s0, %s758
    %s760 = sshrl.u32 %s5, 1
    %s761 = sor.u32 %s5, %s760
    %s762 = sand.u32 %s761, 85
    %s763 = sshrl.u32 %s762, 1
    %s764 = sor.u32 %s762, %s763
    %s765 = sand.u32 51, %s764
    %s766 = sshrl.u32 %s765, 2
    %s767 = sor.u32 %s765, %s766
    %s768 = sand.u32 15, %s767
    %v769 = vld [vmem:[%s759] sm:%s768]
    %v770 = vunpack.c.l.bf16 %v769
    %v771 = vunpack.c.h.bf16 %v769
    %s772 = scalar_lea.vmem [#allocation1], 64
    %773 = vst [vmem:[%s772] sm:%s5] %v770
    %s774 = smul.addr 4, 7
    %s775 = scalar_lea.vmem %s0, %s774
    %s776 = sshrl.u32 %s5, 1
    %s777 = sor.u32 %s5, %s776
    %s778 = sand.u32 %s777, 85
    %s779 = sshrl.u32 %s778, 1
    %s780 = sor.u32 %s778, %s779
    %s781 = sand.u32 51, %s780
    %s782 = sshrl.u32 %s781, 2
    %s783 = sor.u32 %s781, %s782
    %s784 = sand.u32 15, %s783
    %v785 = vld [vmem:[%s775] sm:%s784]
    %v786 = vunpack.c.l.bf16 %v785
    %v787 = vunpack.c.h.bf16 %v785
    %s788 = scalar_lea.vmem [#allocation1], 56
    %789 = vst [vmem:[%s788] sm:%s5] %v786
    %s790 = smul.addr 4, 6
    %s791 = scalar_lea.vmem %s0, %s790
    %s792 = sshrl.u32 %s5, 1
    %s793 = sor.u32 %s5, %s792
    %s794 = sand.u32 %s793, 85
    %s795 = sshrl.u32 %s794, 1
    %s796 = sor.u32 %s794, %s795
    %s797 = sand.u32 51, %s796
    %s798 = sshrl.u32 %s797, 2
    %s799 = sor.u32 %s797, %s798
    %s800 = sand.u32 15, %s799
    %v801 = vld [vmem:[%s791] sm:%s800]
    %v802 = vunpack.c.l.bf16 %v801
    %v803 = vunpack.c.h.bf16 %v801
    %s804 = scalar_lea.vmem [#allocation1], 48
    %805 = vst [vmem:[%s804] sm:%s5] %v802
    %s806 = smul.addr 4, 5
    %s807 = scalar_lea.vmem %s0, %s806
    %s808 = sshrl.u32 %s5, 1
    %s809 = sor.u32 %s5, %s808
    %s810 = sand.u32 %s809, 85
    %s811 = sshrl.u32 %s810, 1
    %s812 = sor.u32 %s810, %s811
    %s813 = sand.u32 51, %s812
    %s814 = sshrl.u32 %s813, 2
    %s815 = sor.u32 %s813, %s814
    %s816 = sand.u32 15, %s815
    %v817 = vld [vmem:[%s807] sm:%s816]
    %v818 = vunpack.c.l.bf16 %v817
    %v819 = vunpack.c.h.bf16 %v817
    %s820 = scalar_lea.vmem [#allocation1], 40
    %821 = vst [vmem:[%s820] sm:%s5] %v818
    %s822 = smul.addr 4, 4
    %s823 = scalar_lea.vmem %s0, %s822
    %s824 = sshrl.u32 %s5, 1
    %s825 = sor.u32 %s5, %s824
    %s826 = sand.u32 %s825, 85
    %s827 = sshrl.u32 %s826, 1
    %s828 = sor.u32 %s826, %s827
    %s829 = sand.u32 51, %s828
    %s830 = sshrl.u32 %s829, 2
    %s831 = sor.u32 %s829, %s830
    %s832 = sand.u32 15, %s831
    %v833 = vld [vmem:[%s823] sm:%s832]
    %v834 = vunpack.c.l.bf16 %v833
    %v835 = vunpack.c.h.bf16 %v833
    %s836 = scalar_lea.vmem [#allocation1], 32
    %837 = vst [vmem:[%s836] sm:%s5] %v834
    %s838 = smul.addr 4, 3
    %s839 = scalar_lea.vmem %s0, %s838
    %s840 = sshrl.u32 %s5, 1
    %s841 = sor.u32 %s5, %s840
    %s842 = sand.u32 %s841, 85
    %s843 = sshrl.u32 %s842, 1
    %s844 = sor.u32 %s842, %s843
    %s845 = sand.u32 51, %s844
    %s846 = sshrl.u32 %s845, 2
    %s847 = sor.u32 %s845, %s846
    %s848 = sand.u32 15, %s847
    %v849 = vld [vmem:[%s839] sm:%s848]
    %v850 = vunpack.c.l.bf16 %v849
    %v851 = vunpack.c.h.bf16 %v849
    %s852 = scalar_lea.vmem [#allocation1], 24
    %853 = vst [vmem:[%s852] sm:%s5] %v850
    %s854 = smul.addr 4, 2
    %s855 = scalar_lea.vmem %s0, %s854
    %s856 = sshrl.u32 %s5, 1
    %s857 = sor.u32 %s5, %s856
    %s858 = sand.u32 %s857, 85
    %s859 = sshrl.u32 %s858, 1
    %s860 = sor.u32 %s858, %s859
    %s861 = sand.u32 51, %s860
    %s862 = sshrl.u32 %s861, 2
    %s863 = sor.u32 %s861, %s862
    %s864 = sand.u32 15, %s863
    %v865 = vld [vmem:[%s855] sm:%s864]
    %v866 = vunpack.c.l.bf16 %v865
    %v867 = vunpack.c.h.bf16 %v865
    %s868 = scalar_lea.vmem [#allocation1], 16
    %869 = vst [vmem:[%s868] sm:%s5] %v866
    %s870 = scalar_lea.vmem %s0, 4
    %s871 = sshrl.u32 %s5, 1
    %s872 = sor.u32 %s5, %s871
    %s873 = sand.u32 %s872, 85
    %s874 = sshrl.u32 %s873, 1
    %s875 = sor.u32 %s873, %s874
    %s876 = sand.u32 51, %s875
    %s877 = sshrl.u32 %s876, 2
    %s878 = sor.u32 %s876, %s877
    %s879 = sand.u32 15, %s878
    %v880 = vld [vmem:[%s870] sm:%s879]
    %v881 = vunpack.c.l.bf16 %v880
    %v882 = vunpack.c.h.bf16 %v880
    %s883 = scalar_lea.vmem [#allocation1], 8
    %884 = vst [vmem:[%s883] sm:%s5] %v881
    %s885 = sshrl.u32 %s5, 1
    %s886 = sor.u32 %s5, %s885
    %s887 = sand.u32 %s886, 85
    %s888 = sshrl.u32 %s887, 1
    %s889 = sor.u32 %s887, %s888
    %s890 = sand.u32 51, %s889
    %s891 = sshrl.u32 %s890, 2
    %s892 = sor.u32 %s890, %s891
    %s893 = sand.u32 15, %s892
    %v894 = vld [vmem:[%s0] sm:%s893]
    %v895 = vunpack.c.l.bf16 %v894
    %v896 = vunpack.c.h.bf16 %v894
    %897 = vst [vmem:[#allocation1] sm:%s5] %v895
    %v898 = vld [vmem:[#allocation1] sm:$0xff]
    %899 = vst [vmem:[#allocation0] sm:$0xff] %v898
    %s900 = scalar_lea.vmem [#allocation1], 8
    %v901 = vld [vmem:[%s900] sm:$0x3f]
    %s902 = scalar_lea.vmem [#allocation0], 8
    %903 = vst [vmem:[%s902] sm:$0x3f] %v901
    %s904 = scalar_lea.vmem [#allocation1], 16
    %v905 = vld [vmem:[%s904] sm:$0xff]
    %s906 = scalar_lea.vmem [#allocation0], 14
    %907 = vst [vmem:[%s906] sm:$0xff] %v905
    %s908 = scalar_lea.vmem [#allocation1], 24
    %v909 = vld [vmem:[%s908] sm:$0x3f]
    %s910 = scalar_lea.vmem [#allocation0], 22
    %911 = vst [vmem:[%s910] sm:$0x3f] %v909
    %s912 = scalar_lea.vmem [#allocation1], 32
    %v913 = vld [vmem:[%s912] sm:$0xff]
    %s914 = scalar_lea.vmem [#allocation0], 28
    %915 = vst [vmem:[%s914] sm:$0xff] %v913
    %s916 = scalar_lea.vmem [#allocation1], 40
    %v917 = vld [vmem:[%s916] sm:$0x3f]
    %s918 = scalar_lea.vmem [#allocation0], 36
    %919 = vst [vmem:[%s918] sm:$0x3f] %v917
    %s920 = scalar_lea.vmem [#allocation1], 48
    %v921 = vld [vmem:[%s920] sm:$0xff]
    %s922 = scalar_lea.vmem [#allocation0], 42
    %923 = vst [vmem:[%s922] sm:$0xff] %v921
    %s924 = scalar_lea.vmem [#allocation1], 56
    %v925 = vld [vmem:[%s924] sm:$0x3f]
    %s926 = scalar_lea.vmem [#allocation0], 50
    %927 = vst [vmem:[%s926] sm:$0x3f] %v925
    %s928 = scalar_lea.vmem [#allocation1], 64
    %v929 = vld [vmem:[%s928] sm:$0xff]
    %s930 = scalar_lea.vmem [#allocation0], 56
    %931 = vst [vmem:[%s930] sm:$0xff] %v929
    %s932 = scalar_lea.vmem [#allocation1], 72
    %v933 = vld [vmem:[%s932] sm:$0x3f]
    %s934 = scalar_lea.vmem [#allocation0], 64
    %935 = vst [vmem:[%s934] sm:$0x3f] %v933
    %s936 = scalar_lea.vmem [#allocation1], 80
    %v937 = vld [vmem:[%s936] sm:$0xff]
    %s938 = scalar_lea.vmem [#allocation0], 70
    %939 = vst [vmem:[%s938] sm:$0xff] %v937
    %s940 = scalar_lea.vmem [#allocation1], 88
    %v941 = vld [vmem:[%s940] sm:$0x3f]
    %s942 = scalar_lea.vmem [#allocation0], 78
    %943 = vst [vmem:[%s942] sm:$0x3f] %v941
    %s944 = scalar_lea.vmem [#allocation1], 96
    %v945 = vld [vmem:[%s944] sm:$0xff]
    %s946 = scalar_lea.vmem [#allocation0], 84
    %947 = vst [vmem:[%s946] sm:$0xff] %v945
    %s948 = scalar_lea.vmem [#allocation1], 104
    %v949 = vld [vmem:[%s948] sm:$0x3f]
    %s950 = scalar_lea.vmem [#allocation0], 92
    %951 = vst [vmem:[%s950] sm:$0x3f] %v949
    %s952 = scalar_lea.vmem [#allocation1], 112
    %v953 = vld [vmem:[%s952] sm:$0xff]
    %s954 = scalar_lea.vmem [#allocation0], 98
    %955 = vst [vmem:[%s954] sm:$0xff] %v953
    %s956 = scalar_lea.vmem [#allocation1], 120
    %v957 = vld [vmem:[%s956] sm:$0x3f]
    %s958 = scalar_lea.vmem [#allocation0], 106
    %959 = vst [vmem:[%s958] sm:$0x3f] %v957
    %s960 = scalar_lea.vmem [#allocation1], 128
    %v961 = vld [vmem:[%s960] sm:$0xff]
    %s962 = scalar_lea.vmem [#allocation0], 112
    %963 = vst [vmem:[%s962] sm:$0xff] %v961
    %s964 = scalar_lea.vmem [#allocation1], 136
    %v965 = vld [vmem:[%s964] sm:$0x3f]
    %s966 = scalar_lea.vmem [#allocation0], 120
    %967 = vst [vmem:[%s966] sm:$0x3f] %v965
    %s968 = scalar_lea.vmem [#allocation1], 144
    %v969 = vld [vmem:[%s968] sm:$0xff]
    %s970 = scalar_lea.vmem [#allocation0], 126
    %971 = vst [vmem:[%s970] sm:$0xff] %v969
    %s972 = scalar_lea.vmem [#allocation1], 152
    %v973 = vld [vmem:[%s972] sm:$0x3f]
    %s974 = scalar_lea.vmem [#allocation0], 134
    %975 = vst [vmem:[%s974] sm:$0x3f] %v973
    %s976 = scalar_lea.vmem [#allocation1], 160
    %v977 = vld [vmem:[%s976] sm:$0xff]
    %s978 = scalar_lea.vmem [#allocation0], 140
    %979 = vst [vmem:[%s978] sm:$0xff] %v977
    %s980 = scalar_lea.vmem [#allocation1], 168
    %v981 = vld [vmem:[%s980] sm:$0x3f]
    %s982 = scalar_lea.vmem [#allocation0], 148
    %983 = vst [vmem:[%s982] sm:$0x3f] %v981
    %s984 = scalar_lea.vmem [#allocation1], 176
    %v985 = vld [vmem:[%s984] sm:$0xff]
    %s986 = scalar_lea.vmem [#allocation0], 154
    %987 = vst [vmem:[%s986] sm:$0xff] %v985
    %s988 = scalar_lea.vmem [#allocation1], 184
    %v989 = vld [vmem:[%s988] sm:$0x3f]
    %s990 = scalar_lea.vmem [#allocation0], 162
    %991 = vst [vmem:[%s990] sm:$0x3f] %v989
    %s992 = scalar_lea.vmem [#allocation1], 192
    %v993 = vld [vmem:[%s992] sm:$0xff]
    %s994 = scalar_lea.vmem [#allocation0], 168
    %995 = vst [vmem:[%s994] sm:$0xff] %v993
    %s996 = scalar_lea.vmem [#allocation1], 200
    %v997 = vld [vmem:[%s996] sm:$0x3f]
    %s998 = scalar_lea.vmem [#allocation0], 176
    %999 = vst [vmem:[%s998] sm:$0x3f] %v997
    %s1000 = scalar_lea.vmem [#allocation1], 208
    %v1001 = vld [vmem:[%s1000] sm:$0xff]
    %s1002 = scalar_lea.vmem [#allocation0], 182
    %1003 = vst [vmem:[%s1002] sm:$0xff] %v1001
    %s1004 = scalar_lea.vmem [#allocation1], 216
    %v1005 = vld [vmem:[%s1004] sm:$0x3f]
    %s1006 = scalar_lea.vmem [#allocation0], 190
    %1007 = vst [vmem:[%s1006] sm:$0x3f] %v1005
    %s1008 = scalar_lea.vmem [#allocation1], 224
    %v1009 = vld [vmem:[%s1008] sm:$0xff]
    %s1010 = scalar_lea.vmem [#allocation0], 196
    %1011 = vst [vmem:[%s1010] sm:$0xff] %v1009
    %s1012 = scalar_lea.vmem [#allocation1], 232
    %v1013 = vld [vmem:[%s1012] sm:$0x3f]
    %s1014 = scalar_lea.vmem [#allocation0], 204
    %1015 = vst [vmem:[%s1014] sm:$0x3f] %v1013
    %s1016 = scalar_lea.vmem [#allocation1], 240
    %v1017 = vld [vmem:[%s1016] sm:$0xff]
    %s1018 = scalar_lea.vmem [#allocation0], 210
    %1019 = vst [vmem:[%s1018] sm:$0xff] %v1017
    %s1020 = scalar_lea.vmem [#allocation1], 248
    %v1021 = vld [vmem:[%s1020] sm:$0x3f]
    %s1022 = scalar_lea.vmem [#allocation0], 218
    %1023 = vst [vmem:[%s1022] sm:$0x3f] %v1021
    %s1024 = scalar_lea.vmem [#allocation1], 256
    %v1025 = vld [vmem:[%s1024] sm:$0xff]
    %s1026 = scalar_lea.vmem [#allocation0], 224
    %1027 = vst [vmem:[%s1026] sm:$0xff] %v1025
    %s1028 = scalar_lea.vmem [#allocation1], 264
    %v1029 = vld [vmem:[%s1028] sm:$0x3f]
    %s1030 = scalar_lea.vmem [#allocation0], 232
    %1031 = vst [vmem:[%s1030] sm:$0x3f] %v1029
    %s1032 = scalar_lea.vmem [#allocation1], 272
    %v1033 = vld [vmem:[%s1032] sm:$0xff]
    %s1034 = scalar_lea.vmem [#allocation0], 238
    %1035 = vst [vmem:[%s1034] sm:$0xff] %v1033
    %s1036 = scalar_lea.vmem [#allocation1], 280
    %v1037 = vld [vmem:[%s1036] sm:$0x3f]
    %s1038 = scalar_lea.vmem [#allocation0], 246
    %1039 = vst [vmem:[%s1038] sm:$0x3f] %v1037
    %s1040 = scalar_lea.vmem [#allocation1], 288
    %v1041 = vld [vmem:[%s1040] sm:$0xff]
    %s1042 = scalar_lea.vmem [#allocation0], 252
    %1043 = vst [vmem:[%s1042] sm:$0xff] %v1041
    %s1044 = scalar_lea.vmem [#allocation1], 296
    %v1045 = vld [vmem:[%s1044] sm:$0x3f]
    %s1046 = scalar_lea.vmem [#allocation0], 260
    %1047 = vst [vmem:[%s1046] sm:$0x3f] %v1045
    %s1048 = scalar_lea.vmem [#allocation1], 304
    %v1049 = vld [vmem:[%s1048] sm:$0xff]
    %s1050 = scalar_lea.vmem [#allocation0], 266
    %1051 = vst [vmem:[%s1050] sm:$0xff] %v1049
    %s1052 = scalar_lea.vmem [#allocation1], 312
    %v1053 = vld [vmem:[%s1052] sm:$0x3f]
    %s1054 = scalar_lea.vmem [#allocation0], 274
    %1055 = vst [vmem:[%s1054] sm:$0x3f] %v1053
    %s1056 = scalar_lea.vmem [#allocation1], 320
    %v1057 = vld [vmem:[%s1056] sm:$0xff]
    %s1058 = scalar_lea.vmem [#allocation0], 280
    %1059 = vst [vmem:[%s1058] sm:$0xff] %v1057
    %s1060 = scalar_lea.vmem [#allocation1], 328
    %v1061 = vld [vmem:[%s1060] sm:$0x3f]
    %s1062 = scalar_lea.vmem [#allocation0], 288
    %1063 = vst [vmem:[%s1062] sm:$0x3f] %v1061
    %s1064 = scalar_lea.vmem [#allocation1], 336
    %v1065 = vld [vmem:[%s1064] sm:$0xff]
    %s1066 = scalar_lea.vmem [#allocation0], 294
    %1067 = vst [vmem:[%s1066] sm:$0xff] %v1065
    %s1068 = scalar_lea.vmem [#allocation1], 344
    %v1069 = vld [vmem:[%s1068] sm:$0x3f]
    %s1070 = scalar_lea.vmem [#allocation0], 302
    %1071 = vst [vmem:[%s1070] sm:$0x3f] %v1069
    %s1072 = scalar_lea.vmem [#allocation1], 352
    %v1073 = vld [vmem:[%s1072] sm:$0xff]
    %s1074 = scalar_lea.vmem [#allocation0], 308
    %1075 = vst [vmem:[%s1074] sm:$0xff] %v1073
    %s1076 = scalar_lea.vmem [#allocation1], 360
    %v1077 = vld [vmem:[%s1076] sm:$0x3f]
    %s1078 = scalar_lea.vmem [#allocation0], 316
    %1079 = vst [vmem:[%s1078] sm:$0x3f] %v1077
    %s1080 = scalar_lea.vmem [#allocation1], 368
    %v1081 = vld [vmem:[%s1080] sm:$0xff]
    %s1082 = scalar_lea.vmem [#allocation0], 322
    %1083 = vst [vmem:[%s1082] sm:$0xff] %v1081
    %s1084 = scalar_lea.vmem [#allocation1], 376
    %v1085 = vld [vmem:[%s1084] sm:$0x3f]
    %s1086 = scalar_lea.vmem [#allocation0], 330
    %1087 = vst [vmem:[%s1086] sm:$0x3f] %v1085
    %s1088 = scalar_lea.vmem [#allocation1], 384
    %v1089 = vld [vmem:[%s1088] sm:$0xff]
    %s1090 = scalar_lea.vmem [#allocation0], 336
    %1091 = vst [vmem:[%s1090] sm:$0xff] %v1089
    %s1092 = scalar_lea.vmem [#allocation1], 392
    %v1093 = vld [vmem:[%s1092] sm:$0x3f]
    %s1094 = scalar_lea.vmem [#allocation0], 344
    %1095 = vst [vmem:[%s1094] sm:$0x3f] %v1093
    %s1096 = scalar_lea.vmem [#allocation1], 400
    %v1097 = vld [vmem:[%s1096] sm:$0xff]
    %s1098 = scalar_lea.vmem [#allocation0], 350
    %1099 = vst [vmem:[%s1098] sm:$0xff] %v1097
    %s1100 = scalar_lea.vmem [#allocation1], 408
    %v1101 = vld [vmem:[%s1100] sm:$0x3f]
    %s1102 = scalar_lea.vmem [#allocation0], 358
    %1103 = vst [vmem:[%s1102] sm:$0x3f] %v1101
    %s1104 = scalar_lea.vmem [#allocation1], 416
    %v1105 = vld [vmem:[%s1104] sm:$0xff]
    %s1106 = scalar_lea.vmem [#allocation0], 364
    %1107 = vst [vmem:[%s1106] sm:$0xff] %v1105
    %s1108 = scalar_lea.vmem [#allocation1], 424
    %v1109 = vld [vmem:[%s1108] sm:$0x3f]
    %s1110 = scalar_lea.vmem [#allocation0], 372
    %1111 = vst [vmem:[%s1110] sm:$0x3f] %v1109
    %s1112 = scalar_lea.vmem [#allocation1], 432
    %v1113 = vld [vmem:[%s1112] sm:$0xff]
    %s1114 = scalar_lea.vmem [#allocation0], 378
    %1115 = vst [vmem:[%s1114] sm:$0xff] %v1113
    %s1116 = scalar_lea.vmem [#allocation1], 440
    %v1117 = vld [vmem:[%s1116] sm:$0x3f]
    %s1118 = scalar_lea.vmem [#allocation0], 386
    %1119 = vst [vmem:[%s1118] sm:$0x3f] %v1117
    %s1121 = smul.u32 4, 2
    %s1122 = sshll.u32 1, %s1121
    %s1123 = ssub.s32 %s1122, 1
    %s1124 = sshrl.u32 %s1121, 1
    %v1125 = vld [vmem:[#allocation0] sm:%s1123]
    %v1126 = vpack.c.bf16 0.0, %v1125
    %s1127 = sshll.u32 1, %s1124
    %s1128 = ssub.s32 %s1127, 1
    %1129 = vst [vmem:[%s1] sm:%s1128] %v1126
    %s1130 = scalar_lea.vmem [#allocation0], 8
    %v1131 = vld [vmem:[%s1130] sm:%s1123]
    %v1132 = vpack.c.bf16 0.0, %v1131
    %s1133 = sshll.u32 1, %s1124
    %s1134 = ssub.s32 %s1133, 1
    %s1135 = scalar_lea.vmem %s1, 4
    %1136 = vst [vmem:[%s1135] sm:%s1134] %v1132
    %s1137 = scalar_lea.vmem [#allocation0], 16
    %v1138 = vld [vmem:[%s1137] sm:%s1123]
    %v1139 = vpack.c.bf16 0.0, %v1138
    %s1140 = sshll.u32 1, %s1124
    %s1141 = ssub.s32 %s1140, 1
    %s1142 = smul.addr 4, 2
    %s1143 = scalar_lea.vmem %s1, %s1142
    %1144 = vst [vmem:[%s1143] sm:%s1141] %v1139
    %s1145 = scalar_lea.vmem [#allocation0], 24
    %v1146 = vld [vmem:[%s1145] sm:%s1123]
    %v1147 = vpack.c.bf16 0.0, %v1146
    %s1148 = sshll.u32 1, %s1124
    %s1149 = ssub.s32 %s1148, 1
    %s1150 = smul.addr 4, 3
    %s1151 = scalar_lea.vmem %s1, %s1150
    %1152 = vst [vmem:[%s1151] sm:%s1149] %v1147
    %s1153 = scalar_lea.vmem [#allocation0], 32
    %v1154 = vld [vmem:[%s1153] sm:%s1123]
    %v1155 = vpack.c.bf16 0.0, %v1154
    %s1156 = sshll.u32 1, %s1124
    %s1157 = ssub.s32 %s1156, 1
    %s1158 = smul.addr 4, 4
    %s1159 = scalar_lea.vmem %s1, %s1158
    %1160 = vst [vmem:[%s1159] sm:%s1157] %v1155
    %s1161 = scalar_lea.vmem [#allocation0], 40
    %v1162 = vld [vmem:[%s1161] sm:%s1123]
    %v1163 = vpack.c.bf16 0.0, %v1162
    %s1164 = sshll.u32 1, %s1124
    %s1165 = ssub.s32 %s1164, 1
    %s1166 = smul.addr 4, 5
    %s1167 = scalar_lea.vmem %s1, %s1166
    %1168 = vst [vmem:[%s1167] sm:%s1165] %v1163
    %s1169 = scalar_lea.vmem [#allocation0], 48
    %v1170 = vld [vmem:[%s1169] sm:%s1123]
    %v1171 = vpack.c.bf16 0.0, %v1170
    %s1172 = sshll.u32 1, %s1124
    %s1173 = ssub.s32 %s1172, 1
    %s1174 = smul.addr 4, 6
    %s1175 = scalar_lea.vmem %s1, %s1174
    %1176 = vst [vmem:[%s1175] sm:%s1173] %v1171
    %s1177 = scalar_lea.vmem [#allocation0], 56
    %v1178 = vld [vmem:[%s1177] sm:%s1123]
    %v1179 = vpack.c.bf16 0.0, %v1178
    %s1180 = sshll.u32 1, %s1124
    %s1181 = ssub.s32 %s1180, 1
    %s1182 = smul.addr 4, 7
    %s1183 = scalar_lea.vmem %s1, %s1182
    %1184 = vst [vmem:[%s1183] sm:%s1181] %v1179
    %s1185 = scalar_lea.vmem [#allocation0], 64
    %v1186 = vld [vmem:[%s1185] sm:%s1123]
    %v1187 = vpack.c.bf16 0.0, %v1186
    %s1188 = sshll.u32 1, %s1124
    %s1189 = ssub.s32 %s1188, 1
    %s1190 = smul.addr 4, 8
    %s1191 = scalar_lea.vmem %s1, %s1190
    %1192 = vst [vmem:[%s1191] sm:%s1189] %v1187
    %s1193 = scalar_lea.vmem [#allocation0], 72
    %v1194 = vld [vmem:[%s1193] sm:%s1123]
    %v1195 = vpack.c.bf16 0.0, %v1194
    %s1196 = sshll.u32 1, %s1124
    %s1197 = ssub.s32 %s1196, 1
    %s1198 = smul.addr 4, 9
    %s1199 = scalar_lea.vmem %s1, %s1198
    %1200 = vst [vmem:[%s1199] sm:%s1197] %v1195
    %s1201 = scalar_lea.vmem [#allocation0], 80
    %v1202 = vld [vmem:[%s1201] sm:%s1123]
    %v1203 = vpack.c.bf16 0.0, %v1202
    %s1204 = sshll.u32 1, %s1124
    %s1205 = ssub.s32 %s1204, 1
    %s1206 = smul.addr 4, 10
    %s1207 = scalar_lea.vmem %s1, %s1206
    %1208 = vst [vmem:[%s1207] sm:%s1205] %v1203
    %s1209 = scalar_lea.vmem [#allocation0], 88
    %v1210 = vld [vmem:[%s1209] sm:%s1123]
    %v1211 = vpack.c.bf16 0.0, %v1210
    %s1212 = sshll.u32 1, %s1124
    %s1213 = ssub.s32 %s1212, 1
    %s1214 = smul.addr 4, 11
    %s1215 = scalar_lea.vmem %s1, %s1214
    %1216 = vst [vmem:[%s1215] sm:%s1213] %v1211
    %s1217 = scalar_lea.vmem [#allocation0], 96
    %v1218 = vld [vmem:[%s1217] sm:%s1123]
    %v1219 = vpack.c.bf16 0.0, %v1218
    %s1220 = sshll.u32 1, %s1124
    %s1221 = ssub.s32 %s1220, 1
    %s1222 = smul.addr 4, 12
    %s1223 = scalar_lea.vmem %s1, %s1222
    %1224 = vst [vmem:[%s1223] sm:%s1221] %v1219
    %s1225 = scalar_lea.vmem [#allocation0], 104
    %v1226 = vld [vmem:[%s1225] sm:%s1123]
    %v1227 = vpack.c.bf16 0.0, %v1226
    %s1228 = sshll.u32 1, %s1124
    %s1229 = ssub.s32 %s1228, 1
    %s1230 = smul.addr 4, 13
    %s1231 = scalar_lea.vmem %s1, %s1230
    %1232 = vst [vmem:[%s1231] sm:%s1229] %v1227
    %s1233 = scalar_lea.vmem [#allocation0], 112
    %v1234 = vld [vmem:[%s1233] sm:%s1123]
    %v1235 = vpack.c.bf16 0.0, %v1234
    %s1236 = sshll.u32 1, %s1124
    %s1237 = ssub.s32 %s1236, 1
    %s1238 = smul.addr 4, 14
    %s1239 = scalar_lea.vmem %s1, %s1238
    %1240 = vst [vmem:[%s1239] sm:%s1237] %v1235
    %s1241 = scalar_lea.vmem [#allocation0], 120
    %v1242 = vld [vmem:[%s1241] sm:%s1123]
    %v1243 = vpack.c.bf16 0.0, %v1242
    %s1244 = sshll.u32 1, %s1124
    %s1245 = ssub.s32 %s1244, 1
    %s1246 = smul.addr 4, 15
    %s1247 = scalar_lea.vmem %s1, %s1246
    %1248 = vst [vmem:[%s1247] sm:%s1245] %v1243
    %s1249 = scalar_lea.vmem [#allocation0], 128
    %v1250 = vld [vmem:[%s1249] sm:%s1123]
    %v1251 = vpack.c.bf16 0.0, %v1250
    %s1252 = sshll.u32 1, %s1124
    %s1253 = ssub.s32 %s1252, 1
    %s1254 = smul.addr 4, 16
    %s1255 = scalar_lea.vmem %s1, %s1254
    %1256 = vst [vmem:[%s1255] sm:%s1253] %v1251
    %s1257 = scalar_lea.vmem [#allocation0], 136
    %v1258 = vld [vmem:[%s1257] sm:%s1123]
    %v1259 = vpack.c.bf16 0.0, %v1258
    %s1260 = sshll.u32 1, %s1124
    %s1261 = ssub.s32 %s1260, 1
    %s1262 = smul.addr 4, 17
    %s1263 = scalar_lea.vmem %s1, %s1262
    %1264 = vst [vmem:[%s1263] sm:%s1261] %v1259
    %s1265 = scalar_lea.vmem [#allocation0], 144
    %v1266 = vld [vmem:[%s1265] sm:%s1123]
    %v1267 = vpack.c.bf16 0.0, %v1266
    %s1268 = sshll.u32 1, %s1124
    %s1269 = ssub.s32 %s1268, 1
    %s1270 = smul.addr 4, 18
    %s1271 = scalar_lea.vmem %s1, %s1270
    %1272 = vst [vmem:[%s1271] sm:%s1269] %v1267
    %s1273 = scalar_lea.vmem [#allocation0], 152
    %v1274 = vld [vmem:[%s1273] sm:%s1123]
    %v1275 = vpack.c.bf16 0.0, %v1274
    %s1276 = sshll.u32 1, %s1124
    %s1277 = ssub.s32 %s1276, 1
    %s1278 = smul.addr 4, 19
    %s1279 = scalar_lea.vmem %s1, %s1278
    %1280 = vst [vmem:[%s1279] sm:%s1277] %v1275
    %s1281 = scalar_lea.vmem [#allocation0], 160
    %v1282 = vld [vmem:[%s1281] sm:%s1123]
    %v1283 = vpack.c.bf16 0.0, %v1282
    %s1284 = sshll.u32 1, %s1124
    %s1285 = ssub.s32 %s1284, 1
    %s1286 = smul.addr 4, 20
    %s1287 = scalar_lea.vmem %s1, %s1286
    %1288 = vst [vmem:[%s1287] sm:%s1285] %v1283
    %s1289 = scalar_lea.vmem [#allocation0], 168
    %v1290 = vld [vmem:[%s1289] sm:%s1123]
    %v1291 = vpack.c.bf16 0.0, %v1290
    %s1292 = sshll.u32 1, %s1124
    %s1293 = ssub.s32 %s1292, 1
    %s1294 = smul.addr 4, 21
    %s1295 = scalar_lea.vmem %s1, %s1294
    %1296 = vst [vmem:[%s1295] sm:%s1293] %v1291
    %s1297 = scalar_lea.vmem [#allocation0], 176
    %v1298 = vld [vmem:[%s1297] sm:%s1123]
    %v1299 = vpack.c.bf16 0.0, %v1298
    %s1300 = sshll.u32 1, %s1124
    %s1301 = ssub.s32 %s1300, 1
    %s1302 = smul.addr 4, 22
    %s1303 = scalar_lea.vmem %s1, %s1302
    %1304 = vst [vmem:[%s1303] sm:%s1301] %v1299
    %s1305 = scalar_lea.vmem [#allocation0], 184
    %v1306 = vld [vmem:[%s1305] sm:%s1123]
    %v1307 = vpack.c.bf16 0.0, %v1306
    %s1308 = sshll.u32 1, %s1124
    %s1309 = ssub.s32 %s1308, 1
    %s1310 = smul.addr 4, 23
    %s1311 = scalar_lea.vmem %s1, %s1310
    %1312 = vst [vmem:[%s1311] sm:%s1309] %v1307
    %s1313 = scalar_lea.vmem [#allocation0], 192
    %v1314 = vld [vmem:[%s1313] sm:%s1123]
    %v1315 = vpack.c.bf16 0.0, %v1314
    %s1316 = sshll.u32 1, %s1124
    %s1317 = ssub.s32 %s1316, 1
    %s1318 = smul.addr 4, 24
    %s1319 = scalar_lea.vmem %s1, %s1318
    %1320 = vst [vmem:[%s1319] sm:%s1317] %v1315
    %s1321 = scalar_lea.vmem [#allocation0], 200
    %v1322 = vld [vmem:[%s1321] sm:%s1123]
    %v1323 = vpack.c.bf16 0.0, %v1322
    %s1324 = sshll.u32 1, %s1124
    %s1325 = ssub.s32 %s1324, 1
    %s1326 = smul.addr 4, 25
    %s1327 = scalar_lea.vmem %s1, %s1326
    %1328 = vst [vmem:[%s1327] sm:%s1325] %v1323
    %s1329 = scalar_lea.vmem [#allocation0], 208
    %v1330 = vld [vmem:[%s1329] sm:%s1123]
    %v1331 = vpack.c.bf16 0.0, %v1330
    %s1332 = sshll.u32 1, %s1124
    %s1333 = ssub.s32 %s1332, 1
    %s1334 = smul.addr 4, 26
    %s1335 = scalar_lea.vmem %s1, %s1334
    %1336 = vst [vmem:[%s1335] sm:%s1333] %v1331
    %s1337 = scalar_lea.vmem [#allocation0], 216
    %v1338 = vld [vmem:[%s1337] sm:%s1123]
    %v1339 = vpack.c.bf16 0.0, %v1338
    %s1340 = sshll.u32 1, %s1124
    %s1341 = ssub.s32 %s1340, 1
    %s1342 = smul.addr 4, 27
    %s1343 = scalar_lea.vmem %s1, %s1342
    %1344 = vst [vmem:[%s1343] sm:%s1341] %v1339
    %s1345 = scalar_lea.vmem [#allocation0], 224
    %v1346 = vld [vmem:[%s1345] sm:%s1123]
    %v1347 = vpack.c.bf16 0.0, %v1346
    %s1348 = sshll.u32 1, %s1124
    %s1349 = ssub.s32 %s1348, 1
    %s1350 = smul.addr 4, 28
    %s1351 = scalar_lea.vmem %s1, %s1350
    %1352 = vst [vmem:[%s1351] sm:%s1349] %v1347
    %s1353 = scalar_lea.vmem [#allocation0], 232
    %v1354 = vld [vmem:[%s1353] sm:%s1123]
    %v1355 = vpack.c.bf16 0.0, %v1354
    %s1356 = sshll.u32 1, %s1124
    %s1357 = ssub.s32 %s1356, 1
    %s1358 = smul.addr 4, 29
    %s1359 = scalar_lea.vmem %s1, %s1358
    %1360 = vst [vmem:[%s1359] sm:%s1357] %v1355
    %s1361 = scalar_lea.vmem [#allocation0], 240
    %v1362 = vld [vmem:[%s1361] sm:%s1123]
    %v1363 = vpack.c.bf16 0.0, %v1362
    %s1364 = sshll.u32 1, %s1124
    %s1365 = ssub.s32 %s1364, 1
    %s1366 = smul.addr 4, 30
    %s1367 = scalar_lea.vmem %s1, %s1366
    %1368 = vst [vmem:[%s1367] sm:%s1365] %v1363
    %s1369 = scalar_lea.vmem [#allocation0], 248
    %v1370 = vld [vmem:[%s1369] sm:%s1123]
    %v1371 = vpack.c.bf16 0.0, %v1370
    %s1372 = sshll.u32 1, %s1124
    %s1373 = ssub.s32 %s1372, 1
    %s1374 = smul.addr 4, 31
    %s1375 = scalar_lea.vmem %s1, %s1374
    %1376 = vst [vmem:[%s1375] sm:%s1373] %v1371
    %s1377 = scalar_lea.vmem [#allocation0], 256
    %v1378 = vld [vmem:[%s1377] sm:%s1123]
    %v1379 = vpack.c.bf16 0.0, %v1378
    %s1380 = sshll.u32 1, %s1124
    %s1381 = ssub.s32 %s1380, 1
    %s1382 = smul.addr 4, 32
    %s1383 = scalar_lea.vmem %s1, %s1382
    %1384 = vst [vmem:[%s1383] sm:%s1381] %v1379
    %s1385 = scalar_lea.vmem [#allocation0], 264
    %v1386 = vld [vmem:[%s1385] sm:%s1123]
    %v1387 = vpack.c.bf16 0.0, %v1386
    %s1388 = sshll.u32 1, %s1124
    %s1389 = ssub.s32 %s1388, 1
    %s1390 = smul.addr 4, 33
    %s1391 = scalar_lea.vmem %s1, %s1390
    %1392 = vst [vmem:[%s1391] sm:%s1389] %v1387
    %s1393 = scalar_lea.vmem [#allocation0], 272
    %v1394 = vld [vmem:[%s1393] sm:%s1123]
    %v1395 = vpack.c.bf16 0.0, %v1394
    %s1396 = sshll.u32 1, %s1124
    %s1397 = ssub.s32 %s1396, 1
    %s1398 = smul.addr 4, 34
    %s1399 = scalar_lea.vmem %s1, %s1398
    %1400 = vst [vmem:[%s1399] sm:%s1397] %v1395
    %s1401 = scalar_lea.vmem [#allocation0], 280
    %v1402 = vld [vmem:[%s1401] sm:%s1123]
    %v1403 = vpack.c.bf16 0.0, %v1402
    %s1404 = sshll.u32 1, %s1124
    %s1405 = ssub.s32 %s1404, 1
    %s1406 = smul.addr 4, 35
    %s1407 = scalar_lea.vmem %s1, %s1406
    %1408 = vst [vmem:[%s1407] sm:%s1405] %v1403
    %s1409 = scalar_lea.vmem [#allocation0], 288
    %v1410 = vld [vmem:[%s1409] sm:%s1123]
    %v1411 = vpack.c.bf16 0.0, %v1410
    %s1412 = sshll.u32 1, %s1124
    %s1413 = ssub.s32 %s1412, 1
    %s1414 = smul.addr 4, 36
    %s1415 = scalar_lea.vmem %s1, %s1414
    %1416 = vst [vmem:[%s1415] sm:%s1413] %v1411
    %s1417 = scalar_lea.vmem [#allocation0], 296
    %v1418 = vld [vmem:[%s1417] sm:%s1123]
    %v1419 = vpack.c.bf16 0.0, %v1418
    %s1420 = sshll.u32 1, %s1124
    %s1421 = ssub.s32 %s1420, 1
    %s1422 = smul.addr 4, 37
    %s1423 = scalar_lea.vmem %s1, %s1422
    %1424 = vst [vmem:[%s1423] sm:%s1421] %v1419
    %s1425 = scalar_lea.vmem [#allocation0], 304
    %v1426 = vld [vmem:[%s1425] sm:%s1123]
    %v1427 = vpack.c.bf16 0.0, %v1426
    %s1428 = sshll.u32 1, %s1124
    %s1429 = ssub.s32 %s1428, 1
    %s1430 = smul.addr 4, 38
    %s1431 = scalar_lea.vmem %s1, %s1430
    %1432 = vst [vmem:[%s1431] sm:%s1429] %v1427
    %s1433 = scalar_lea.vmem [#allocation0], 312
    %v1434 = vld [vmem:[%s1433] sm:%s1123]
    %v1435 = vpack.c.bf16 0.0, %v1434
    %s1436 = sshll.u32 1, %s1124
    %s1437 = ssub.s32 %s1436, 1
    %s1438 = smul.addr 4, 39
    %s1439 = scalar_lea.vmem %s1, %s1438
    %1440 = vst [vmem:[%s1439] sm:%s1437] %v1435
    %s1441 = scalar_lea.vmem [#allocation0], 320
    %v1442 = vld [vmem:[%s1441] sm:%s1123]
    %v1443 = vpack.c.bf16 0.0, %v1442
    %s1444 = sshll.u32 1, %s1124
    %s1445 = ssub.s32 %s1444, 1
    %s1446 = smul.addr 4, 40
    %s1447 = scalar_lea.vmem %s1, %s1446
    %1448 = vst [vmem:[%s1447] sm:%s1445] %v1443
    %s1449 = scalar_lea.vmem [#allocation0], 328
    %v1450 = vld [vmem:[%s1449] sm:%s1123]
    %v1451 = vpack.c.bf16 0.0, %v1450
    %s1452 = sshll.u32 1, %s1124
    %s1453 = ssub.s32 %s1452, 1
    %s1454 = smul.addr 4, 41
    %s1455 = scalar_lea.vmem %s1, %s1454
    %1456 = vst [vmem:[%s1455] sm:%s1453] %v1451
    %s1457 = scalar_lea.vmem [#allocation0], 336
    %v1458 = vld [vmem:[%s1457] sm:%s1123]
    %v1459 = vpack.c.bf16 0.0, %v1458
    %s1460 = sshll.u32 1, %s1124
    %s1461 = ssub.s32 %s1460, 1
    %s1462 = smul.addr 4, 42
    %s1463 = scalar_lea.vmem %s1, %s1462
    %1464 = vst [vmem:[%s1463] sm:%s1461] %v1459
    %s1465 = scalar_lea.vmem [#allocation0], 344
    %v1466 = vld [vmem:[%s1465] sm:%s1123]
    %v1467 = vpack.c.bf16 0.0, %v1466
    %s1468 = sshll.u32 1, %s1124
    %s1469 = ssub.s32 %s1468, 1
    %s1470 = smul.addr 4, 43
    %s1471 = scalar_lea.vmem %s1, %s1470
    %1472 = vst [vmem:[%s1471] sm:%s1469] %v1467
    %s1473 = scalar_lea.vmem [#allocation0], 352
    %v1474 = vld [vmem:[%s1473] sm:%s1123]
    %v1475 = vpack.c.bf16 0.0, %v1474
    %s1476 = sshll.u32 1, %s1124
    %s1477 = ssub.s32 %s1476, 1
    %s1478 = smul.addr 4, 44
    %s1479 = scalar_lea.vmem %s1, %s1478
    %1480 = vst [vmem:[%s1479] sm:%s1477] %v1475
    %s1481 = scalar_lea.vmem [#allocation0], 360
    %v1482 = vld [vmem:[%s1481] sm:%s1123]
    %v1483 = vpack.c.bf16 0.0, %v1482
    %s1484 = sshll.u32 1, %s1124
    %s1485 = ssub.s32 %s1484, 1
    %s1486 = smul.addr 4, 45
    %s1487 = scalar_lea.vmem %s1, %s1486
    %1488 = vst [vmem:[%s1487] sm:%s1485] %v1483
    %s1489 = scalar_lea.vmem [#allocation0], 368
    %v1490 = vld [vmem:[%s1489] sm:%s1123]
    %v1491 = vpack.c.bf16 0.0, %v1490
    %s1492 = sshll.u32 1, %s1124
    %s1493 = ssub.s32 %s1492, 1
    %s1494 = smul.addr 4, 46
    %s1495 = scalar_lea.vmem %s1, %s1494
    %1496 = vst [vmem:[%s1495] sm:%s1493] %v1491
    %s1497 = scalar_lea.vmem [#allocation0], 376
    %v1498 = vld [vmem:[%s1497] sm:%s1123]
    %v1499 = vpack.c.bf16 0.0, %v1498
    %s1500 = sshll.u32 1, %s1124
    %s1501 = ssub.s32 %s1500, 1
    %s1502 = smul.addr 4, 47
    %s1503 = scalar_lea.vmem %s1, %s1502
    %1504 = vst [vmem:[%s1503] sm:%s1501] %v1499
    %s1505 = scalar_lea.vmem [#allocation0], 384
    %v1506 = vld [vmem:[%s1505] sm:%s1123]
    %v1507 = vpack.c.bf16 0.0, %v1506
    %s1508 = sshll.u32 1, %s1124
    %s1509 = ssub.s32 %s1508, 1
    %s1510 = smul.addr 4, 48
    %s1511 = scalar_lea.vmem %s1, %s1510
    %1512 = vst [vmem:[%s1511] sm:%s1509] %v1507

// kernel: cnn_classifier_forward.6
$region0: #{cnn_classifier_forward.6}
  #allocation0 [shape = 'u32[]', space=smem, size = 0x4, offset = 0x4, fixed_abs, tag = 'smem constant byte address 0x4 - core index']
  #allocation1 [shape = 'u32[144,128]{1,0:T(1,128)}', space=vmem, size = 0x12000, scoped, tag = 'internal scratch']
  %s0 = inlined_call_operand.vmem [shape: bf16[512,128], index: 0, kind: input, shape index: {}]
  %s1 = inlined_call_operand.vmem [shape: bf16[512,128], index: 1, kind: input, shape index: {}]
  %s2 = inlined_call_operand.vmem [shape: bf16[512,128], index: 2, kind: input, shape index: {}]
  %s3 = inlined_call_operand.vmem [shape: bf16[512,128], index: 3, kind: input, shape index: {}]
  %s4 = inlined_call_operand.vmem [shape: bf16[512,128], index: 4, kind: output, shape index: {}]
  %s5 = sld [smem:[#allocation0]]
  $region49: #{cnn_classifier_forward.6} parent=0
    _
  %s7 = ssub.s32 1, %s5
  %s8 = scalar_select 0, %s7, %s5
  loop: start=0, step=1, limit=4
  $region2: #{cnn_classifier_forward.6} parent=0 // loop_pre_header
    _
  $region3: #{cnn_classifier_forward.6} parent=0 // loop_header
    %s10 = sphi 0, %s14
    %p11 = scmp.ge.s32.totalorder %s10, 4
    %s20 = sphi 0, %s22
    %s23 = sphi 0, %s20
    %s24 = sphi 0, %s23
    %s40 = sphi 0, %s24
    %s46 = sphi 0, %s48
    %s49 = sphi 0, %s46
    %s50 = sphi 0, %s49
    %s66 = sphi 0, %s50
    %s72 = sphi 0, %s74
    %s75 = sphi 0, %s72
    %s76 = sphi 0, %s75
    %s92 = sphi 0, %s76
    %s98 = sphi 0, %s100
    %s101 = sphi 0, %s98
    %s102 = sphi 0, %s101
    %s118 = sphi 0, %s102
    %s124 = sphi 0, %s126
    %s127 = sphi 0, %s124
    %s128 = sphi 0, %s127
    %s144 = sphi 0, %s128
  $region4: #{cnn_classifier_forward.6} parent=0 // loop_header_branch
    %13 = sbr.rel (%p11) target = $region8
  $region5: #{cnn_classifier_forward.6} parent=0 // loop_body
    %s15 = ssub.s32 %s10, 1
    %s16 = ssub.s32 %s10, 2
    %s17 = sadd.s32 %s10, 1
    %s18 = ssub.s32 %s10, %s17
    %p19 = scmp.eq.s32.totalorder %s18, 0
    %s21 = sadd.s32 %s20, 1
    %s22 = scalar_select %p19, %s20, %s21
    %p25 = pneg %p19
    %p26 = scmp.eq.s32.totalorder %s10, 1
    %p27 = por %p25, %p26
    %p28 = scmp.ne.s32.totalorder %s20, %s23
    %p29 = scmp.eq.s32.totalorder %s10, 0
    %p30 = por %p28, %p29
    %p31 = scmp.ne.s32.totalorder %s20, %s23
    %p32 = scmp.eq.s32.totalorder %s15, 1
    %p33 = por %p31, %p32
    %p34 = scmp.ne.s32.totalorder %s23, %s24
    %p35 = scmp.eq.s32.totalorder %s15, 0
    %p36 = por %p34, %p35
    %p37 = scmp.ne.s32.totalorder %s23, %s24
    %p38 = scmp.eq.s32.totalorder %s16, 1
    %p39 = por %p37, %p38
    %p41 = scmp.ne.s32.totalorder %s24, %s40
    %p42 = scmp.eq.s32.totalorder %s16, 0
    %p43 = por %p41, %p42
    %s44 = ssub.s32 %s10, %s17
    %p45 = scmp.eq.s32.totalorder %s44, 0
    %s47 = sadd.s32 %s46, 1
    %s48 = scalar_select %p45, %s46, %s47
    %p51 = pneg %p45
    %p52 = scmp.eq.s32.totalorder %s10, 1
    %p53 = por %p51, %p52
    %p54 = scmp.ne.s32.totalorder %s46, %s49
    %p55 = scmp.eq.s32.totalorder %s10, 0
    %p56 = por %p54, %p55
    %p57 = scmp.ne.s32.totalorder %s46, %s49
    %p58 = scmp.eq.s32.totalorder %s15, 1
    %p59 = por %p57, %p58
    %p60 = scmp.ne.s32.totalorder %s49, %s50
    %p61 = scmp.eq.s32.totalorder %s15, 0
    %p62 = por %p60, %p61
    %p63 = scmp.ne.s32.totalorder %s49, %s50
    %p64 = scmp.eq.s32.totalorder %s16, 1
    %p65 = por %p63, %p64
    %p67 = scmp.ne.s32.totalorder %s50, %s66
    %p68 = scmp.eq.s32.totalorder %s16, 0
    %p69 = por %p67, %p68
    %s70 = ssub.s32 %s10, %s17
    %p71 = scmp.eq.s32.totalorder %s70, 0
    %s73 = sadd.s32 %s72, 1
    %s74 = scalar_select %p71, %s72, %s73
    %p77 = pneg %p71
    %p78 = scmp.eq.s32.totalorder %s10, 1
    %p79 = por %p77, %p78
    %p80 = scmp.ne.s32.totalorder %s72, %s75
    %p81 = scmp.eq.s32.totalorder %s10, 0
    %p82 = por %p80, %p81
    %p83 = scmp.ne.s32.totalorder %s72, %s75
    %p84 = scmp.eq.s32.totalorder %s15, 1
    %p85 = por %p83, %p84
    %p86 = scmp.ne.s32.totalorder %s75, %s76
    %p87 = scmp.eq.s32.totalorder %s15, 0
    %p88 = por %p86, %p87
    %p89 = scmp.ne.s32.totalorder %s75, %s76
    %p90 = scmp.eq.s32.totalorder %s16, 1
    %p91 = por %p89, %p90
    %p93 = scmp.ne.s32.totalorder %s76, %s92
    %p94 = scmp.eq.s32.totalorder %s16, 0
    %p95 = por %p93, %p94
    %s96 = ssub.s32 %s10, %s17
    %p97 = scmp.eq.s32.totalorder %s96, 0
    %s99 = sadd.s32 %s98, 1
    %s100 = scalar_select %p97, %s98, %s99
    %p103 = pneg %p97
    %p104 = scmp.eq.s32.totalorder %s10, 1
    %p105 = por %p103, %p104
    %p106 = scmp.ne.s32.totalorder %s98, %s101
    %p107 = scmp.eq.s32.totalorder %s10, 0
    %p108 = por %p106, %p107
    %p109 = scmp.ne.s32.totalorder %s98, %s101
    %p110 = scmp.eq.s32.totalorder %s15, 1
    %p111 = por %p109, %p110
    %p112 = scmp.ne.s32.totalorder %s101, %s102
    %p113 = scmp.eq.s32.totalorder %s15, 0
    %p114 = por %p112, %p113
    %p115 = scmp.ne.s32.totalorder %s101, %s102
    %p116 = scmp.eq.s32.totalorder %s16, 1
    %p117 = por %p115, %p116
    %p119 = scmp.ne.s32.totalorder %s102, %s118
    %p120 = scmp.eq.s32.totalorder %s16, 0
    %p121 = por %p119, %p120
    %s122 = ssub.s32 %s10, %s17
    %p123 = scmp.eq.s32.totalorder %s122, 0
    %s125 = sadd.s32 %s124, 1
    %s126 = scalar_select %p123, %s124, %s125
    %p129 = pneg %p123
    %p130 = scmp.eq.s32.totalorder %s10, 1
    %p131 = por %p129, %p130
    %p132 = scmp.ne.s32.totalorder %s124, %s127
    %p133 = scmp.eq.s32.totalorder %s10, 0
    %p134 = por %p132, %p133
    %p135 = scmp.ne.s32.totalorder %s124, %s127
    %p136 = scmp.eq.s32.totalorder %s15, 1
    %p137 = por %p135, %p136
    %p138 = scmp.ne.s32.totalorder %s127, %s128
    %p139 = scmp.eq.s32.totalorder %s15, 0
    %p140 = por %p138, %p139
    %p141 = scmp.ne.s32.totalorder %s127, %s128
    %p142 = scmp.eq.s32.totalorder %s16, 1
    %p143 = por %p141, %p142
    %p145 = scmp.ne.s32.totalorder %s128, %s144
    %p146 = scmp.eq.s32.totalorder %s16, 0
    %p147 = por %p145, %p146
    %p148 = scmp.le.s32.totalorder 1, %s10
    %p149 = scmp.lt.s32.totalorder %s10, 3
    %p150 = pnand %p148, %p149
    %p151 = pneg %p150
    // Predicated region
    $region9: #{cnn_classifier_forward.6} parent=5 // pred_check
      _
    $region10: #{cnn_classifier_forward.6} parent=5 // pred_check_branch
      %153 = sbr.rel (%p150) target = $region12
    $region11: #{cnn_classifier_forward.6} parent=5 // pred_region
      %s154 = ssub.s32 %s10, 1
    $region12: #{cnn_classifier_forward.6} parent=5 // pred_fallthru
      _
    %p155 = scmp.lt.s32.totalorder %s10, 2
    // Predicated region
    $region13: #{cnn_classifier_forward.6} parent=5 // pred_check
      %p156 = pneg %p155
    $region14: #{cnn_classifier_forward.6} parent=5 // pred_check_branch
      %158 = sbr.rel (%p156) target = $region16
    $region15: #{cnn_classifier_forward.6} parent=5 // pred_region
      // Predicated region
      $region17: #{cnn_classifier_forward.6} parent=15 // pred_check
        %p159 = pneg %p30
      $region18: #{cnn_classifier_forward.6} parent=15 // pred_check_branch
        %161 = sbr.rel (%p159) target = $region20
      $region19: #{cnn_classifier_forward.6} parent=15 // pred_region
        %s162 = smul.u32 32, %s10
        %p163 = scmp.lt.s32.totalorder %s162, 63
        %s164 = scalar_select %p163, %s162, 63
        %s165 = smul.addr %s164, 4
        %s166 = scalar_lea.vmem %s0, %s165
        %s167 = smul.u32 32, %s10
      $region20: #{cnn_classifier_forward.6} parent=15 // pred_fallthru
        _
      // Predicated region
      $region21: #{cnn_classifier_forward.6} parent=15 // pred_check
        %p168 = pneg %p56
      $region22: #{cnn_classifier_forward.6} parent=15 // pred_check_branch
        %170 = sbr.rel (%p168) target = $region24
      $region23: #{cnn_classifier_forward.6} parent=15 // pred_region
        %s171 = smul.u32 32, %s10
        %p172 = scmp.lt.s32.totalorder %s171, 63
        %s173 = scalar_select %p172, %s171, 63
        %s174 = smul.addr %s173, 4
        %s175 = scalar_lea.vmem %s1, %s174
        %s176 = smul.u32 32, %s10
      $region24: #{cnn_classifier_forward.6} parent=15 // pred_fallthru
        _
      // Predicated region
      $region25: #{cnn_classifier_forward.6} parent=15 // pred_check
        %p177 = pneg %p82
      $region26: #{cnn_classifier_forward.6} parent=15 // pred_check_branch
        %179 = sbr.rel (%p177) target = $region28
      $region27: #{cnn_classifier_forward.6} parent=15 // pred_region
        %s180 = smul.u32 32, %s10
        %p181 = scmp.lt.s32.totalorder %s180, 63
        %s182 = scalar_select %p181, %s180, 63
        %s183 = smul.addr %s182, 4
        %s184 = scalar_lea.vmem %s2, %s183
        %s185 = smul.u32 32, %s10
      $region28: #{cnn_classifier_forward.6} parent=15 // pred_fallthru
        _
      // Predicated region
      $region29: #{cnn_classifier_forward.6} parent=15 // pred_check
        %p186 = pneg %p108
      $region30: #{cnn_classifier_forward.6} parent=15 // pred_check_branch
        %188 = sbr.rel (%p186) target = $region32
      $region31: #{cnn_classifier_forward.6} parent=15 // pred_region
        %s189 = smul.u32 32, %s10
        %p190 = scmp.lt.s32.totalorder %s189, 63
        %s191 = scalar_select %p190, %s189, 63
        %s192 = smul.addr %s191, 4
        %s193 = scalar_lea.vmem %s3, %s192
        %s194 = smul.u32 32, %s10
      $region32: #{cnn_classifier_forward.6} parent=15 // pred_fallthru
        _
    $region16: #{cnn_classifier_forward.6} parent=5 // pred_fallthru
      _
    %p195 = scmp.le.s32.totalorder 1, %s10
    %p196 = scmp.lt.s32.totalorder %s10, 3
    %p197 = pnand %p195, %p196
    %p198 = pneg %p197
    // Predicated region
    $region33: #{cnn_classifier_forward.6} parent=5 // pred_check
      _
    $region34: #{cnn_classifier_forward.6} parent=5 // pred_check_branch
      %200 = sbr.rel (%p197) target = $region36
    $region35: #{cnn_classifier_forward.6} parent=5 // pred_region
      %s201 = ssub.s32 %s10, 1
      %s202 = smul.u32 32, %s15
      %p203 = scmp.lt.s32.totalorder %s202, 63
      %s204 = scalar_select %p203, %s202, 63
      %s205 = smul.addr %s204, 4
      %s206 = scalar_lea.vmem %s0, %s205
      %p207 = pneg %p36
      %p208 = pneg %p33
      %s209 = smul.u32 32, %s15
      %p210 = scmp.lt.s32.totalorder %s209, 63
      %s211 = scalar_select %p210, %s209, 63
      %s212 = smul.addr %s211, 4
      %s213 = scalar_lea.vmem %s1, %s212
      %p214 = pneg %p62
      %p215 = pneg %p59
      %s216 = smul.u32 32, %s15
      %p217 = scmp.lt.s32.totalorder %s216, 63
      %s218 = scalar_select %p217, %s216, 63
      %s219 = smul.addr %s218, 4
      %s220 = scalar_lea.vmem %s2, %s219
      %p221 = pneg %p88
      %p222 = pneg %p85
      %s223 = smul.u32 32, %s15
      %p224 = scmp.lt.s32.totalorder %s223, 63
      %s225 = scalar_select %p224, %s223, 63
      %s226 = smul.addr %s225, 4
      %s227 = scalar_lea.vmem %s3, %s226
      %p228 = pneg %p114
      %p229 = pneg %p111
      %p230 = pneg %p140
      %p231 = pneg %p137
      %s232 = smul.u32 32, %s15
      %p233 = scmp.lt.s32.totalorder %s232, 63
      %s234 = scalar_select %p233, %s232, 63
      %s235 = smul.addr %s234, 4
      %s236 = scalar_lea.vmem %s4, %s235
      %s237 = smul.u32 32, %s15
      %p238 = scmp.lt.s32.totalorder %s237, 63
      %s239 = scalar_select %p238, %s237, 63
      %s240 = smul.addr %s239, 4
      %s241 = scalar_lea.vmem %s0, %s240
      %s242 = smul.u32 32, %s15
      %s243 = smul.u32 32, %s15
      %p244 = scmp.lt.s32.totalorder %s243, 63
      %s245 = scalar_select %p244, %s243, 63
      %s246 = smul.addr %s245, 4
      %s247 = scalar_lea.vmem %s1, %s246
      %s248 = smul.u32 32, %s15
      %s249 = smul.u32 32, %s15
      %p250 = scmp.lt.s32.totalorder %s249, 63
      %s251 = scalar_select %p250, %s249, 63
      %s252 = smul.addr %s251, 4
      %s253 = scalar_lea.vmem %s2, %s252
      %s254 = smul.u32 32, %s15
      %s255 = smul.u32 32, %s15
      %p256 = scmp.lt.s32.totalorder %s255, 63
      %s257 = scalar_select %p256, %s255, 63
      %s258 = smul.addr %s257, 4
      %s259 = scalar_lea.vmem %s3, %s258
      %s260 = smul.u32 32, %s15
      %s261 = smul.u32 32, %s15
      %p262 = scmp.lt.s32.totalorder %s261, 63
      %s263 = scalar_select %p262, %s261, 63
      %s264 = smul.addr %s263, 4
      %s265 = scalar_lea.vmem %s4, %s264
      %s266 = smul.u32 32, %s15
      %v267 = vld [vmem:[%s241] sm:$0xf]
      %v268 = vld [vmem:[%s241 + $0x4] sm:$0xf]
      %v269 = vld [vmem:[%s241 + $0x8] sm:$0xf]
      %v270 = vld [vmem:[%s241 + $0xc] sm:$0xf]
      %v271 = vld [vmem:[%s241 + $0x10] sm:$0xf]
      %v272 = vld [vmem:[%s241 + $0x14] sm:$0xf]
      %v273 = vld [vmem:[%s241 + $0x18] sm:$0xf]
      %v274 = vld [vmem:[%s241 + $0x1c] sm:$0xf]
      %v275 = vld [vmem:[%s241 + $0x20] sm:$0xf]
      %v276 = vld [vmem:[%s241 + $0x24] sm:$0xf]
      %v277 = vld [vmem:[%s241 + $0x28] sm:$0xf]
      %v278 = vld [vmem:[%s241 + $0x2c] sm:$0xf]
      %v279 = vld [vmem:[%s241 + $0x30] sm:$0xf]
      %v280 = vld [vmem:[%s241 + $0x34] sm:$0xf]
      %v281 = vld [vmem:[%s241 + $0x38] sm:$0xf]
      %v282 = vld [vmem:[%s241 + $0x3c] sm:$0xf]
      %v283 = vld [vmem:[%s241 + $0x40] sm:$0xf]
      %v284 = vld [vmem:[%s241 + $0x44] sm:$0xf]
      %v285 = vld [vmem:[%s241 + $0x48] sm:$0xf]
      %v286 = vld [vmem:[%s241 + $0x4c] sm:$0xf]
      %v287 = vld [vmem:[%s241 + $0x50] sm:$0xf]
      %v288 = vld [vmem:[%s241 + $0x54] sm:$0xf]
      %v289 = vld [vmem:[%s241 + $0x58] sm:$0xf]
      %v290 = vld [vmem:[%s241 + $0x5c] sm:$0xf]
      %v291 = vld [vmem:[%s241 + $0x60] sm:$0xf]
      %v292 = vld [vmem:[%s241 + $0x64] sm:$0xf]
      %v293 = vld [vmem:[%s241 + $0x68] sm:$0xf]
      %v294 = vld [vmem:[%s241 + $0x6c] sm:$0xf]
      %v295 = vld [vmem:[%s241 + $0x70] sm:$0xf]
      %v296 = vld [vmem:[%s241 + $0x74] sm:$0xf]
      %v297 = vld [vmem:[%s241 + $0x78] sm:$0xf]
      %v298 = vld [vmem:[%s241 + $0x7c] sm:$0xf]
      %v299 = vld [vmem:[%s247] sm:$0xf]
      %v300 = vld [vmem:[%s247 + $0x4] sm:$0xf]
      %v301 = vld [vmem:[%s247 + $0x8] sm:$0xf]
      %v302 = vld [vmem:[%s247 + $0xc] sm:$0xf]
      %v303 = vld [vmem:[%s247 + $0x10] sm:$0xf]
      %v304 = vld [vmem:[%s247 + $0x14] sm:$0xf]
      %v305 = vld [vmem:[%s247 + $0x18] sm:$0xf]
      %v306 = vld [vmem:[%s247 + $0x1c] sm:$0xf]
      %v307 = vld [vmem:[%s247 + $0x20] sm:$0xf]
      %v308 = vld [vmem:[%s247 + $0x24] sm:$0xf]
      %v309 = vld [vmem:[%s247 + $0x28] sm:$0xf]
      %v310 = vld [vmem:[%s247 + $0x2c] sm:$0xf]
      %v311 = vld [vmem:[%s247 + $0x30] sm:$0xf]
      %v312 = vld [vmem:[%s247 + $0x34] sm:$0xf]
      %v313 = vld [vmem:[%s247 + $0x38] sm:$0xf]
      %v314 = vld [vmem:[%s247 + $0x3c] sm:$0xf]
      %v315 = vld [vmem:[%s247 + $0x40] sm:$0xf]
      %v316 = vld [vmem:[%s247 + $0x44] sm:$0xf]
      %v317 = vld [vmem:[%s247 + $0x48] sm:$0xf]
      %v318 = vld [vmem:[%s247 + $0x4c] sm:$0xf]
      %v319 = vld [vmem:[%s247 + $0x50] sm:$0xf]
      %v320 = vld [vmem:[%s247 + $0x54] sm:$0xf]
      %v321 = vld [vmem:[%s247 + $0x58] sm:$0xf]
      %v322 = vld [vmem:[%s247 + $0x5c] sm:$0xf]
      %v323 = vld [vmem:[%s247 + $0x60] sm:$0xf]
      %v324 = vld [vmem:[%s247 + $0x64] sm:$0xf]
      %v325 = vld [vmem:[%s247 + $0x68] sm:$0xf]
      %v326 = vld [vmem:[%s247 + $0x6c] sm:$0xf]
      %v327 = vld [vmem:[%s247 + $0x70] sm:$0xf]
      %v328 = vld [vmem:[%s247 + $0x74] sm:$0xf]
      %v329 = vld [vmem:[%s247 + $0x78] sm:$0xf]
      %v330 = vld [vmem:[%s247 + $0x7c] sm:$0xf]
      %v331 = vmax.bf16 %v267, %v299
      %v332 = vmax.bf16 %v268, %v300
      %v333 = vmax.bf16 %v269, %v301
      %v334 = vmax.bf16 %v270, %v302
      %v335 = vmax.bf16 %v271, %v303
      %v336 = vmax.bf16 %v272, %v304
      %v337 = vmax.bf16 %v273, %v305
      %v338 = vmax.bf16 %v274, %v306
      %v339 = vmax.bf16 %v275, %v307
      %v340 = vmax.bf16 %v276, %v308
      %v341 = vmax.bf16 %v277, %v309
      %v342 = vmax.bf16 %v278, %v310
      %v343 = vmax.bf16 %v279, %v311
      %v344 = vmax.bf16 %v280, %v312
      %v345 = vmax.bf16 %v281, %v313
      %v346 = vmax.bf16 %v282, %v314
      %v347 = vmax.bf16 %v283, %v315
      %v348 = vmax.bf16 %v284, %v316
      %v349 = vmax.bf16 %v285, %v317
      %v350 = vmax.bf16 %v286, %v318
      %v351 = vmax.bf16 %v287, %v319
      %v352 = vmax.bf16 %v288, %v320
      %v353 = vmax.bf16 %v289, %v321
      %v354 = vmax.bf16 %v290, %v322
      %v355 = vmax.bf16 %v291, %v323
      %v356 = vmax.bf16 %v292, %v324
      %v357 = vmax.bf16 %v293, %v325
      %v358 = vmax.bf16 %v294, %v326
      %v359 = vmax.bf16 %v295, %v327
      %v360 = vmax.bf16 %v296, %v328
      %v361 = vmax.bf16 %v297, %v329
      %v362 = vmax.bf16 %v298, %v330
      %v363 = vld [vmem:[%s253] sm:$0xf]
      %v364 = vld [vmem:[%s253 + $0x4] sm:$0xf]
      %v365 = vld [vmem:[%s253 + $0x8] sm:$0xf]
      %v366 = vld [vmem:[%s253 + $0xc] sm:$0xf]
      %v367 = vld [vmem:[%s253 + $0x10] sm:$0xf]
      %v368 = vld [vmem:[%s253 + $0x14] sm:$0xf]
      %v369 = vld [vmem:[%s253 + $0x18] sm:$0xf]
      %v370 = vld [vmem:[%s253 + $0x1c] sm:$0xf]
      %v371 = vld [vmem:[%s253 + $0x20] sm:$0xf]
      %v372 = vld [vmem:[%s253 + $0x24] sm:$0xf]
      %v373 = vld [vmem:[%s253 + $0x28] sm:$0xf]
      %v374 = vld [vmem:[%s253 + $0x2c] sm:$0xf]
      %v375 = vld [vmem:[%s253 + $0x30] sm:$0xf]
      %v376 = vld [vmem:[%s253 + $0x34] sm:$0xf]
      %v377 = vld [vmem:[%s253 + $0x38] sm:$0xf]
      %v378 = vld [vmem:[%s253 + $0x3c] sm:$0xf]
      %v379 = vld [vmem:[%s253 + $0x40] sm:$0xf]
      %v380 = vld [vmem:[%s253 + $0x44] sm:$0xf]
      %v381 = vld [vmem:[%s253 + $0x48] sm:$0xf]
      %v382 = vld [vmem:[%s253 + $0x4c] sm:$0xf]
      %v383 = vld [vmem:[%s253 + $0x50] sm:$0xf]
      %v384 = vld [vmem:[%s253 + $0x54] sm:$0xf]
      %v385 = vld [vmem:[%s253 + $0x58] sm:$0xf]
      %v386 = vld [vmem:[%s253 + $0x5c] sm:$0xf]
      %v387 = vld [vmem:[%s253 + $0x60] sm:$0xf]
      %v388 = vld [vmem:[%s253 + $0x64] sm:$0xf]
      %v389 = vld [vmem:[%s253 + $0x68] sm:$0xf]
      %v390 = vld [vmem:[%s253 + $0x6c] sm:$0xf]
      %v391 = vld [vmem:[%s253 + $0x70] sm:$0xf]
      %v392 = vld [vmem:[%s253 + $0x74] sm:$0xf]
      %v393 = vld [vmem:[%s253 + $0x78] sm:$0xf]
      %v394 = vld [vmem:[%s253 + $0x7c] sm:$0xf]
      %v395 = vld [vmem:[%s259] sm:$0xf]
      %v396 = vld [vmem:[%s259 + $0x4] sm:$0xf]
      %v397 = vld [vmem:[%s259 + $0x8] sm:$0xf]
      %v398 = vld [vmem:[%s259 + $0xc] sm:$0xf]
      %v399 = vld [vmem:[%s259 + $0x10] sm:$0xf]
      %v400 = vld [vmem:[%s259 + $0x14] sm:$0xf]
      %v401 = vld [vmem:[%s259 + $0x18] sm:$0xf]
      %v402 = vld [vmem:[%s259 + $0x1c] sm:$0xf]
      %v403 = vld [vmem:[%s259 + $0x20] sm:$0xf]
      %v404 = vld [vmem:[%s259 + $0x24] sm:$0xf]
      %v405 = vld [vmem:[%s259 + $0x28] sm:$0xf]
      %v406 = vld [vmem:[%s259 + $0x2c] sm:$0xf]
      %v407 = vld [vmem:[%s259 + $0x30] sm:$0xf]
      %v408 = vld [vmem:[%s259 + $0x34] sm:$0xf]
      %v409 = vld [vmem:[%s259 + $0x38] sm:$0xf]
      %v410 = vld [vmem:[%s259 + $0x3c] sm:$0xf]
      %v411 = vld [vmem:[%s259 + $0x40] sm:$0xf]
      %v412 = vld [vmem:[%s259 + $0x44] sm:$0xf]
      %v413 = vld [vmem:[%s259 + $0x48] sm:$0xf]
      %v414 = vld [vmem:[%s259 + $0x4c] sm:$0xf]
      %v415 = vld [vmem:[%s259 + $0x50] sm:$0xf]
      %v416 = vld [vmem:[%s259 + $0x54] sm:$0xf]
      %v417 = vld [vmem:[%s259 + $0x58] sm:$0xf]
      %v418 = vld [vmem:[%s259 + $0x5c] sm:$0xf]
      %v419 = vld [vmem:[%s259 + $0x60] sm:$0xf]
      %v420 = vld [vmem:[%s259 + $0x64] sm:$0xf]
      %v421 = vld [vmem:[%s259 + $0x68] sm:$0xf]
      %v422 = vld [vmem:[%s259 + $0x6c] sm:$0xf]
      %v423 = vld [vmem:[%s259 + $0x70] sm:$0xf]
      %v424 = vld [vmem:[%s259 + $0x74] sm:$0xf]
      %v425 = vld [vmem:[%s259 + $0x78] sm:$0xf]
      %v426 = vld [vmem:[%s259 + $0x7c] sm:$0xf]
      %v427 = vmax.bf16 %v363, %v395
      %v428 = vmax.bf16 %v364, %v396
      %v429 = vmax.bf16 %v365, %v397
      %v430 = vmax.bf16 %v366, %v398
      %v431 = vmax.bf16 %v367, %v399
      %v432 = vmax.bf16 %v368, %v400
      %v433 = vmax.bf16 %v369, %v401
      %v434 = vmax.bf16 %v370, %v402
      %v435 = vmax.bf16 %v371, %v403
      %v436 = vmax.bf16 %v372, %v404
      %v437 = vmax.bf16 %v373, %v405
      %v438 = vmax.bf16 %v374, %v406
      %v439 = vmax.bf16 %v375, %v407
      %v440 = vmax.bf16 %v376, %v408
      %v441 = vmax.bf16 %v377, %v409
      %v442 = vmax.bf16 %v378, %v410
      %v443 = vmax.bf16 %v379, %v411
      %v444 = vmax.bf16 %v380, %v412
      %v445 = vmax.bf16 %v381, %v413
      %v446 = vmax.bf16 %v382, %v414
      %v447 = vmax.bf16 %v383, %v415
      %v448 = vmax.bf16 %v384, %v416
      %v449 = vmax.bf16 %v385, %v417
      %v450 = vmax.bf16 %v386, %v418
      %v451 = vmax.bf16 %v387, %v419
      %v452 = vmax.bf16 %v388, %v420
      %v453 = vmax.bf16 %v389, %v421
      %v454 = vmax.bf16 %v390, %v422
      %v455 = vmax.bf16 %v391, %v423
      %v456 = vmax.bf16 %v392, %v424
      %v457 = vmax.bf16 %v393, %v425
      %v458 = vmax.bf16 %v394, %v426
      %v459 = vmax.bf16 %v331, %v427
      %v460 = vmax.bf16 %v332, %v428
      %v461 = vmax.bf16 %v333, %v429
      %v462 = vmax.bf16 %v334, %v430
      %v463 = vmax.bf16 %v335, %v431
      %v464 = vmax.bf16 %v336, %v432
      %v465 = vmax.bf16 %v337, %v433
      %v466 = vmax.bf16 %v338, %v434
      %v467 = vmax.bf16 %v339, %v435
      %v468 = vmax.bf16 %v340, %v436
      %v469 = vmax.bf16 %v341, %v437
      %v470 = vmax.bf16 %v342, %v438
      %v471 = vmax.bf16 %v343, %v439
      %v472 = vmax.bf16 %v344, %v440
      %v473 = vmax.bf16 %v345, %v441
      %v474 = vmax.bf16 %v346, %v442
      %v475 = vmax.bf16 %v347, %v443
      %v476 = vmax.bf16 %v348, %v444
      %v477 = vmax.bf16 %v349, %v445
      %v478 = vmax.bf16 %v350, %v446
      %v479 = vmax.bf16 %v351, %v447
      %v480 = vmax.bf16 %v352, %v448
      %v481 = vmax.bf16 %v353, %v449
      %v482 = vmax.bf16 %v354, %v450
      %v483 = vmax.bf16 %v355, %v451
      %v484 = vmax.bf16 %v356, %v452
      %v485 = vmax.bf16 %v357, %v453
      %v486 = vmax.bf16 %v358, %v454
      %v487 = vmax.bf16 %v359, %v455
      %v488 = vmax.bf16 %v360, %v456
      %v489 = vmax.bf16 %v361, %v457
      %v490 = vmax.bf16 %v362, %v458
      %491 = vst [vmem:[%s265] sm:$0xf] %v459
      %492 = vst [vmem:[%s265 + $0x4] sm:$0xf] %v460
      %493 = vst [vmem:[%s265 + $0x8] sm:$0xf] %v461
      %494 = vst [vmem:[%s265 + $0xc] sm:$0xf] %v462
      %495 = vst [vmem:[%s265 + $0x10] sm:$0xf] %v463
      %496 = vst [vmem:[%s265 + $0x14] sm:$0xf] %v464
      %497 = vst [vmem:[%s265 + $0x18] sm:$0xf] %v465
      %498 = vst [vmem:[%s265 + $0x1c] sm:$0xf] %v466
      %499 = vst [vmem:[%s265 + $0x20] sm:$0xf] %v467
      %500 = vst [vmem:[%s265 + $0x24] sm:$0xf] %v468
      %501 = vst [vmem:[%s265 + $0x28] sm:$0xf] %v469
      %502 = vst [vmem:[%s265 + $0x2c] sm:$0xf] %v470
      %503 = vst [vmem:[%s265 + $0x30] sm:$0xf] %v471
      %504 = vst [vmem:[%s265 + $0x34] sm:$0xf] %v472
      %505 = vst [vmem:[%s265 + $0x38] sm:$0xf] %v473
      %506 = vst [vmem:[%s265 + $0x3c] sm:$0xf] %v474
      %507 = vst [vmem:[%s265 + $0x40] sm:$0xf] %v475
      %508 = vst [vmem:[%s265 + $0x44] sm:$0xf] %v476
      %509 = vst [vmem:[%s265 + $0x48] sm:$0xf] %v477
      %510 = vst [vmem:[%s265 + $0x4c] sm:$0xf] %v478
      %511 = vst [vmem:[%s265 + $0x50] sm:$0xf] %v479
      %512 = vst [vmem:[%s265 + $0x54] sm:$0xf] %v480
      %513 = vst [vmem:[%s265 + $0x58] sm:$0xf] %v481
      %514 = vst [vmem:[%s265 + $0x5c] sm:$0xf] %v482
      %515 = vst [vmem:[%s265 + $0x60] sm:$0xf] %v483
      %516 = vst [vmem:[%s265 + $0x64] sm:$0xf] %v484
      %517 = vst [vmem:[%s265 + $0x68] sm:$0xf] %v485
      %518 = vst [vmem:[%s265 + $0x6c] sm:$0xf] %v486
      %519 = vst [vmem:[%s265 + $0x70] sm:$0xf] %v487
      %520 = vst [vmem:[%s265 + $0x74] sm:$0xf] %v488
      %521 = vst [vmem:[%s265 + $0x78] sm:$0xf] %v489
      %522 = vst [vmem:[%s265 + $0x7c] sm:$0xf] %v490
      %s523 = smul.u32 32, %s15
      %p524 = scmp.lt.s32.totalorder %s523, 63
      %s525 = scalar_select %p524, %s523, 63
      %s526 = smul.addr %s525, 4
      %s527 = scalar_lea.vmem %s4, %s526
      // Predicated region
      $region37: #{cnn_classifier_forward.6} parent=35 // pred_check
        %p528 = pneg %p137
      $region38: #{cnn_classifier_forward.6} parent=35 // pred_check_branch
        %530 = sbr.rel (%p528) target = $region40
      $region39: #{cnn_classifier_forward.6} parent=35 // pred_region
        %s531 = smul.u32 32, %s15
      $region40: #{cnn_classifier_forward.6} parent=35 // pred_fallthru
        _
    $region36: #{cnn_classifier_forward.6} parent=5 // pred_fallthru
      _
    %p532 = scmp.le.s32.totalorder 2, %s10
    // Predicated region
    $region41: #{cnn_classifier_forward.6} parent=5 // pred_check
      %p533 = pneg %p532
    $region42: #{cnn_classifier_forward.6} parent=5 // pred_check_branch
      %535 = sbr.rel (%p533) target = $region44
    $region43: #{cnn_classifier_forward.6} parent=5 // pred_region
      %s536 = ssub.s32 %s10, 2
      // Predicated region
      $region45: #{cnn_classifier_forward.6} parent=43 // pred_check
        %p537 = pneg %p143
      $region46: #{cnn_classifier_forward.6} parent=43 // pred_check_branch
        %539 = sbr.rel (%p537) target = $region48
      $region47: #{cnn_classifier_forward.6} parent=43 // pred_region
        %s540 = smul.u32 32, %s16
        %p541 = scmp.lt.s32.totalorder %s540, 63
        %s542 = scalar_select %p541, %s540, 63
        %s543 = smul.addr %s542, 4
        %s544 = scalar_lea.vmem %s4, %s543
      $region48: #{cnn_classifier_forward.6} parent=43 // pred_fallthru
        _
    $region44: #{cnn_classifier_forward.6} parent=5 // pred_fallthru
      _
  $region6: #{cnn_classifier_forward.6} parent=0 // loop_footer
    %s14 = sadd.s32 1, %s10
  $region7: #{cnn_classifier_forward.6} parent=0 // loop_footer_branch
    %9 = sbr.rel target = $region3
  $region8: #{cnn_classifier_forward.6} parent=0 // loop_exit
    _

// kernel: cnn_classifier_forward.7
$region0: #{cnn_classifier_forward.7}
  #allocation0 [shape = 'u32[]', space=smem, size = 0x4, offset = 0x4, fixed_abs, tag = 'smem constant byte address 0x4 - core index']
  #allocation1 [shape = 'u32[144,128]{1,0:T(1,128)}', space=vmem, size = 0x12000, scoped, tag = 'internal scratch']
  %s0 = inlined_call_operand.vmem [shape: bf16[208,256], index: 0, kind: input, shape index: {}]
  %s1 = inlined_call_operand.vmem [shape: bf16[256,128], index: 1, kind: input, shape index: {}]
  %s2 = inlined_call_operand.vmem [shape: f32[1,128], index: 2, kind: input, shape index: {}]
  %s3 = inlined_call_operand.vmem [shape: bf16[208,128], index: 3, kind: output, shape index: {}]
  %s4 = sld [smem:[#allocation0]]
  $region22: #{cnn_classifier_forward.7} parent=0
    _
  %s6 = ssub.s32 1, %s4
  %s7 = scalar_select 0, %s6, %s4
  // Predicated region
  $region2: #{cnn_classifier_forward.7} parent=0 // pred_check
    _
  $region3: #{cnn_classifier_forward.7} parent=0 // pred_check_branch
    %9 = sbr.rel (0) target = $region5
  $region4: #{cnn_classifier_forward.7} parent=0 // pred_region
    _
  $region5: #{cnn_classifier_forward.7} parent=0 // pred_fallthru
    _
  // Predicated region
  $region6: #{cnn_classifier_forward.7} parent=0 // pred_check
    _
  $region7: #{cnn_classifier_forward.7} parent=0 // pred_check_branch
    %11 = sbr.rel (0) target = $region9
  $region8: #{cnn_classifier_forward.7} parent=0 // pred_region
    _
  $region9: #{cnn_classifier_forward.7} parent=0 // pred_fallthru
    _
  // Predicated region
  $region10: #{cnn_classifier_forward.7} parent=0 // pred_check
    _
  $region11: #{cnn_classifier_forward.7} parent=0 // pred_check_branch
    %13 = sbr.rel (0) target = $region13
  $region12: #{cnn_classifier_forward.7} parent=0 // pred_region
    _
  $region13: #{cnn_classifier_forward.7} parent=0 // pred_fallthru
    _
  %v15 = vld [vmem:[%s0] sm:$0xff]
  %v16 = vld [vmem:[%s0 + $0x8] sm:$0xff]
  %v17 = vld [vmem:[%s0 + $0x10] sm:$0xff]
  %v18 = vld [vmem:[%s0 + $0x18] sm:$0xff]
  %v19 = vld [vmem:[%s0 + $0x20] sm:$0xff]
  %v20 = vld [vmem:[%s0 + $0x28] sm:$0xff]
  %v21 = vld [vmem:[%s0 + $0x30] sm:$0xff]
  %v22 = vld [vmem:[%s0 + $0x38] sm:$0xff]
  %v23 = vld [vmem:[%s0 + $0x40] sm:$0xff]
  %v24 = vld [vmem:[%s0 + $0x48] sm:$0xff]
  %v25 = vld [vmem:[%s0 + $0x50] sm:$0xff]
  %v26 = vld [vmem:[%s0 + $0x58] sm:$0xff]
  %v27 = vld [vmem:[%s0 + $0x60] sm:$0xff]
  %v28 = vld [vmem:[%s0 + $0x68] sm:$0xff]
  %v29 = vld [vmem:[%s0 + $0x70] sm:$0xff]
  %v30 = vld [vmem:[%s0 + $0x78] sm:$0xff]
  %v31 = vld [vmem:[%s0 + $0x80] sm:$0xff]
  %v32 = vld [vmem:[%s0 + $0x88] sm:$0xff]
  %v33 = vld [vmem:[%s0 + $0x90] sm:$0xff]
  %v34 = vld [vmem:[%s0 + $0x98] sm:$0xff]
  %v35 = vld [vmem:[%s0 + $0xa0] sm:$0xff]
  %v36 = vld [vmem:[%s0 + $0xa8] sm:$0xff]
  %v37 = vld [vmem:[%s0 + $0xb0] sm:$0xff]
  %v38 = vld [vmem:[%s0 + $0xb8] sm:$0xff]
  %v39 = vld [vmem:[%s0 + $0xc0] sm:$0xff]
  %v40 = vld [vmem:[%s0 + $0xc8] sm:$0xff]
  %v41 = vld [vmem:[%s1] sm:$0xf]
  %v42 = vld [vmem:[%s1 + $0x4] sm:$0xf]
  %v43 = vld [vmem:[%s1 + $0x8] sm:$0xf]
  %v44 = vld [vmem:[%s1 + $0xc] sm:$0xf]
  %v45 = vld [vmem:[%s1 + $0x10] sm:$0xf]
  %v46 = vld [vmem:[%s1 + $0x14] sm:$0xf]
  %v47 = vld [vmem:[%s1 + $0x18] sm:$0xf]
  %v48 = vld [vmem:[%s1 + $0x1c] sm:$0xf]
  %v49 = vld [vmem:[%s1 + $0x20] sm:$0xf]
  %v50 = vld [vmem:[%s1 + $0x24] sm:$0xf]
  %v51 = vld [vmem:[%s1 + $0x28] sm:$0xf]
  %v52 = vld [vmem:[%s1 + $0x2c] sm:$0xf]
  %v53 = vld [vmem:[%s1 + $0x30] sm:$0xf]
  %v54 = vld [vmem:[%s1 + $0x34] sm:$0xf]
  %v55 = vld [vmem:[%s1 + $0x38] sm:$0xf]
  %v56 = vld [vmem:[%s1 + $0x3c] sm:$0xf]
  %v57 = vld [vmem:[%s1 + $0x40] sm:$0xf]
  %v58 = vld [vmem:[%s1 + $0x44] sm:$0xf]
  %v59 = vld [vmem:[%s1 + $0x48] sm:$0xf]
  %v60 = vld [vmem:[%s1 + $0x4c] sm:$0xf]
  %v61 = vld [vmem:[%s1 + $0x50] sm:$0xf]
  %v62 = vld [vmem:[%s1 + $0x54] sm:$0xf]
  %v63 = vld [vmem:[%s1 + $0x58] sm:$0xf]
  %v64 = vld [vmem:[%s1 + $0x5c] sm:$0xf]
  %v65 = vld [vmem:[%s1 + $0x60] sm:$0xf]
  %v66 = vld [vmem:[%s1 + $0x64] sm:$0xf]
  %v67 = vld [vmem:[%s1 + $0x68] sm:$0xf]
  %v68 = vld [vmem:[%s1 + $0x6c] sm:$0xf]
  %v69 = vld [vmem:[%s1 + $0x70] sm:$0xf]
  %v70 = vld [vmem:[%s1 + $0x74] sm:$0xf]
  %v71 = vld [vmem:[%s1 + $0x78] sm:$0xf]
  %v72 = vld [vmem:[%s1 + $0x7c] sm:$0xf]
  %v73 = vld [vmem:[%s2] sm:$0x1]
  %v75 = vlaneseq
  %v76 = vshrl.u32 %v75, 7
  %v77 = vsub.s32 0, %v76
  %v78 = vrot.slane %v73, %v77
  %v106 = vunpack.c.l.b16 %v15
  %v107 = vunpack.c.h.b16 %v15
  %v108 = vunpack.c.l.b16 %v16
  %v109 = vunpack.c.h.b16 %v16
  %v110 = vunpack.c.l.b16 %v17
  %v111 = vunpack.c.h.b16 %v17
  %v112 = vunpack.c.l.b16 %v18
  %v113 = vunpack.c.h.b16 %v18
  %v114 = vunpack.c.l.b16 %v19
  %v115 = vunpack.c.h.b16 %v19
  %v116 = vunpack.c.l.b16 %v20
  %v117 = vunpack.c.h.b16 %v20
  %v118 = vunpack.c.l.b16 %v21
  %v119 = vunpack.c.h.b16 %v21
  %v120 = vunpack.c.l.b16 %v22
  %v121 = vunpack.c.h.b16 %v22
  %v122 = vunpack.c.l.b16 %v23
  %v123 = vunpack.c.h.b16 %v23
  %v124 = vunpack.c.l.b16 %v24
  %v125 = vunpack.c.h.b16 %v24
  %v126 = vunpack.c.l.b16 %v25
  %v127 = vunpack.c.h.b16 %v25
  %v128 = vunpack.c.l.b16 %v26
  %v129 = vunpack.c.h.b16 %v26
  %v130 = vunpack.c.l.b16 %v27
  %v131 = vunpack.c.h.b16 %v27
  %v132 = vunpack.c.l.b16 %v28
  %v133 = vunpack.c.h.b16 %v28
  %v134 = vunpack.c.l.b16 %v29
  %v135 = vunpack.c.h.b16 %v29
  %v136 = vunpack.c.l.b16 %v30
  %v137 = vunpack.c.h.b16 %v30
  %v138 = vunpack.c.l.b16 %v31
  %v139 = vunpack.c.h.b16 %v31
  %v140 = vunpack.c.l.b16 %v32
  %v141 = vunpack.c.h.b16 %v32
  %v142 = vunpack.c.l.b16 %v33
  %v143 = vunpack.c.h.b16 %v33
  %v144 = vunpack.c.l.b16 %v34
  %v145 = vunpack.c.h.b16 %v34
  %v146 = vunpack.c.l.b16 %v35
  %v147 = vunpack.c.h.b16 %v35
  %v148 = vunpack.c.l.b16 %v36
  %v149 = vunpack.c.h.b16 %v36
  %v150 = vunpack.c.l.b16 %v37
  %v151 = vunpack.c.h.b16 %v37
  %v152 = vunpack.c.l.b16 %v38
  %v153 = vunpack.c.h.b16 %v38
  %v154 = vunpack.c.l.b16 %v39
  %v155 = vunpack.c.h.b16 %v39
  %v156 = vunpack.c.l.b16 %v40
  %v157 = vunpack.c.h.b16 %v40
  %v158 = vpack.c.b16 %v108, %v106
  %v159 = vpack.c.b16 %v109, %v107
  %v160 = vpack.c.b16 %v112, %v110
  %v161 = vpack.c.b16 %v113, %v111
  %v162 = vpack.c.b16 %v116, %v114
  %v163 = vpack.c.b16 %v117, %v115
  %v164 = vpack.c.b16 %v120, %v118
  %v165 = vpack.c.b16 %v121, %v119
  %v166 = vpack.c.b16 %v124, %v122
  %v167 = vpack.c.b16 %v125, %v123
  %v168 = vpack.c.b16 %v128, %v126
  %v169 = vpack.c.b16 %v129, %v127
  %v170 = vpack.c.b16 %v132, %v130
  %v171 = vpack.c.b16 %v133, %v131
  %v172 = vpack.c.b16 %v136, %v134
  %v173 = vpack.c.b16 %v137, %v135
  %v174 = vpack.c.b16 %v140, %v138
  %v175 = vpack.c.b16 %v141, %v139
  %v176 = vpack.c.b16 %v144, %v142
  %v177 = vpack.c.b16 %v145, %v143
  %v178 = vpack.c.b16 %v148, %v146
  %v179 = vpack.c.b16 %v149, %v147
  %v180 = vpack.c.b16 %v152, %v150
  %v181 = vpack.c.b16 %v153, %v151
  %v182 = vpack.c.b16 %v156, %v154
  %v183 = vpack.c.b16 %v157, %v155
  %v242 = vunpack.c.l.b16 %v41
  %v243 = vunpack.c.l.b16 %v42
  %v244 = vunpack.c.l.b16 %v43
  %v245 = vunpack.c.l.b16 %v44
  %v246 = vunpack.c.l.b16 %v45
  %v247 = vunpack.c.l.b16 %v46
  %v248 = vunpack.c.l.b16 %v47
  %v249 = vunpack.c.l.b16 %v48
  %v250 = vunpack.c.l.b16 %v49
  %v251 = vunpack.c.l.b16 %v50
  %v252 = vunpack.c.l.b16 %v51
  %v253 = vunpack.c.l.b16 %v52
  %v254 = vunpack.c.l.b16 %v53
  %v255 = vunpack.c.l.b16 %v54
  %v256 = vunpack.c.l.b16 %v55
  %v257 = vunpack.c.l.b16 %v56
  %v258 = vunpack.c.l.b16 %v57
  %v259 = vunpack.c.l.b16 %v58
  %v260 = vunpack.c.l.b16 %v59
  %v261 = vunpack.c.l.b16 %v60
  %v262 = vunpack.c.l.b16 %v61
  %v263 = vunpack.c.l.b16 %v62
  %v264 = vunpack.c.l.b16 %v63
  %v265 = vunpack.c.l.b16 %v64
  %v266 = vunpack.c.l.b16 %v65
  %v267 = vunpack.c.l.b16 %v66
  %v268 = vunpack.c.l.b16 %v67
  %v269 = vunpack.c.l.b16 %v68
  %v270 = vunpack.c.l.b16 %v69
  %v271 = vunpack.c.l.b16 %v70
  %v272 = vunpack.c.l.b16 %v71
  %v273 = vunpack.c.l.b16 %v72
  %v274 = vpack.c.b16 %v243, %v242
  %v275 = vpack.c.b16 %v245, %v244
  %v276 = vpack.c.b16 %v247, %v246
  %v277 = vpack.c.b16 %v249, %v248
  %v278 = vpack.c.b16 %v251, %v250
  %v279 = vpack.c.b16 %v253, %v252
  %v280 = vpack.c.b16 %v255, %v254
  %v281 = vpack.c.b16 %v257, %v256
  %v282 = vpack.c.b16 %v259, %v258
  %v283 = vpack.c.b16 %v261, %v260
  %v284 = vpack.c.b16 %v263, %v262
  %v285 = vpack.c.b16 %v265, %v264
  %v286 = vpack.c.b16 %v267, %v266
  %v287 = vpack.c.b16 %v269, %v268
  %v288 = vpack.c.b16 %v271, %v270
  %v289 = vpack.c.b16 %v273, %v272
  %306 = vmatprep.subr.bf16.mxu0 0
  %307 = vmatpush1.bf16.msra.mxu0 %v281
  %308 = vmatprep.subr.bf16.mxu0 0
  %309 = vmatpush1.bf16.msra.mxu0 %v280
  %310 = vmatprep.subr.bf16.mxu0 0
  %311 = vmatpush1.bf16.msra.mxu0 %v279
  %312 = vmatprep.subr.bf16.mxu0 0
  %313 = vmatpush1.bf16.msra.mxu0 %v278
  %314 = vmatprep.subr.bf16.mxu0 0
  %315 = vmatpush1.bf16.msra.mxu0 %v277
  %316 = vmatprep.subr.bf16.mxu0 0
  %317 = vmatpush1.bf16.msra.mxu0 %v276
  %318 = vmatprep.subr.bf16.mxu0 0
  %319 = vmatpush1.bf16.msra.mxu0 %v275
  %320 = vmatprep.subr.bf16.mxu0 0
  %321 = vmatpush1.bf16.msra.mxu0 %v274
  %322 = vmatprep.subr.bf16.mxu0 0
  %323 = vmatpush2.bf16.msra.mxu0 %v289
  %324 = vmatprep.subr.bf16.mxu0 0
  %325 = vmatpush2.bf16.msra.mxu0 %v288
  %326 = vmatprep.subr.bf16.mxu0 0
  %327 = vmatpush2.bf16.msra.mxu0 %v287
  %328 = vmatprep.subr.bf16.mxu0 0
  %329 = vmatpush2.bf16.msra.mxu0 %v286
  %330 = vmatprep.subr.bf16.mxu0 0
  %331 = vmatpush2.bf16.msra.mxu0 %v285
  %332 = vmatprep.subr.bf16.mxu0 0
  %333 = vmatpush2.bf16.msra.mxu0 %v284
  %334 = vmatprep.subr.bf16.mxu0 0
  %335 = vmatpush2.bf16.msra.mxu0 %v283
  %336 = vmatprep.subr.bf16.mxu0 0
  %337 = vmatpush2.bf16.msra.mxu0 %v282
  %338 = vmatprep.mubr.bf16.mxu0 %v159
  %339 = vmatmul.mubr.bf16.gmra.mxu0 %v158
  %v340 = vpop.f32.mrf.mxu0
  %v341 = vadd.f32 %v78, %v340
  %v342 = vpop.f32.mrf.mxu0
  %v343 = vpop.f32.mrf.mxu0
  %v344 = vadd.f32 %v78, %v343
  %v345 = vpop.f32.mrf.mxu0
  %346 = vmatprep.mubr.bf16.mxu0 %v161
  %347 = vmatmul.mubr.bf16.gmra.mxu0 %v160
  %v348 = vpop.f32.mrf.mxu0
  %v349 = vadd.f32 %v78, %v348
  %v350 = vpop.f32.mrf.mxu0
  %v351 = vpop.f32.mrf.mxu0
  %v352 = vadd.f32 %v78, %v351
  %v353 = vpop.f32.mrf.mxu0
  %354 = vmatprep.mubr.bf16.mxu0 %v163
  %355 = vmatmul.mubr.bf16.gmra.mxu0 %v162
  %v356 = vpop.f32.mrf.mxu0
  %v357 = vadd.f32 %v78, %v356
  %v358 = vpop.f32.mrf.mxu0
  %v359 = vpop.f32.mrf.mxu0
  %v360 = vadd.f32 %v78, %v359
  %v361 = vpop.f32.mrf.mxu0
  %362 = vmatprep.mubr.bf16.mxu0 %v165
  %363 = vmatmul.mubr.bf16.gmra.mxu0 %v164
  %v364 = vpop.f32.mrf.mxu0
  %v365 = vadd.f32 %v78, %v364
  %v366 = vpop.f32.mrf.mxu0
  %v367 = vpop.f32.mrf.mxu0
  %v368 = vadd.f32 %v78, %v367
  %v369 = vpop.f32.mrf.mxu0
  %370 = vmatprep.mubr.bf16.mxu0 %v167
  %371 = vmatmul.mubr.bf16.gmra.mxu0 %v166
  %v372 = vpop.f32.mrf.mxu0
  %v373 = vadd.f32 %v78, %v372
  %v374 = vpop.f32.mrf.mxu0
  %v375 = vpop.f32.mrf.mxu0
  %v376 = vadd.f32 %v78, %v375
  %v377 = vpop.f32.mrf.mxu0
  %378 = vmatprep.mubr.bf16.mxu0 %v169
  %379 = vmatmul.mubr.bf16.gmra.mxu0 %v168
  %v380 = vpop.f32.mrf.mxu0
  %v381 = vadd.f32 %v78, %v380
  %v382 = vpop.f32.mrf.mxu0
  %v383 = vpop.f32.mrf.mxu0
  %v384 = vadd.f32 %v78, %v383
  %v385 = vpop.f32.mrf.mxu0
  %386 = vmatprep.mubr.bf16.mxu0 %v171
  %387 = vmatmul.mubr.bf16.gmra.mxu0 %v170
  %v388 = vpop.f32.mrf.mxu0
  %v389 = vadd.f32 %v78, %v388
  %v390 = vpop.f32.mrf.mxu0
  %v391 = vpop.f32.mrf.mxu0
  %v392 = vadd.f32 %v78, %v391
  %v393 = vpop.f32.mrf.mxu0
  %394 = vmatprep.mubr.bf16.mxu0 %v173
  %395 = vmatmul.mubr.bf16.gmra.mxu0 %v172
  %v396 = vpop.f32.mrf.mxu0
  %v397 = vadd.f32 %v78, %v396
  %v398 = vpop.f32.mrf.mxu0
  %v399 = vpop.f32.mrf.mxu0
  %v400 = vadd.f32 %v78, %v399
  %v401 = vpop.f32.mrf.mxu0
  %402 = vmatprep.mubr.bf16.mxu0 %v175
  %403 = vmatmul.mubr.bf16.gmra.mxu0 %v174
  %v404 = vpop.f32.mrf.mxu0
  %v405 = vadd.f32 %v78, %v404
  %v406 = vpop.f32.mrf.mxu0
  %v407 = vpop.f32.mrf.mxu0
  %v408 = vadd.f32 %v78, %v407
  %v409 = vpop.f32.mrf.mxu0
  %410 = vmatprep.mubr.bf16.mxu0 %v177
  %411 = vmatmul.mubr.bf16.gmra.mxu0 %v176
  %v412 = vpop.f32.mrf.mxu0
  %v413 = vadd.f32 %v78, %v412
  %v414 = vpop.f32.mrf.mxu0
  %v415 = vpop.f32.mrf.mxu0
  %v416 = vadd.f32 %v78, %v415
  %v417 = vpop.f32.mrf.mxu0
  %418 = vmatprep.mubr.bf16.mxu0 %v179
  %419 = vmatmul.mubr.bf16.gmra.mxu0 %v178
  %v420 = vpop.f32.mrf.mxu0
  %v421 = vadd.f32 %v78, %v420
  %v422 = vpop.f32.mrf.mxu0
  %v423 = vpop.f32.mrf.mxu0
  %v424 = vadd.f32 %v78, %v423
  %v425 = vpop.f32.mrf.mxu0
  %426 = vmatprep.mubr.bf16.mxu0 %v181
  %427 = vmatmul.mubr.bf16.gmra.mxu0 %v180
  %v428 = vpop.f32.mrf.mxu0
  %v429 = vadd.f32 %v78, %v428
  %v430 = vpop.f32.mrf.mxu0
  %v431 = vpop.f32.mrf.mxu0
  %v432 = vadd.f32 %v78, %v431
  %v433 = vpop.f32.mrf.mxu0
  %434 = vmatprep.mubr.bf16.mxu0 %v183
  %435 = vmatmul.mubr.bf16.gmra.mxu0 %v182
  %v436 = vpop.f32.mrf.mxu0
  %v437 = vadd.f32 %v78, %v436
  %v438 = vpop.f32.mrf.mxu0
  %v439 = vpop.f32.mrf.mxu0
  %v440 = vadd.f32 %v78, %v439
  %v441 = vpop.f32.mrf.mxu0
  %442 = vdwg.mxu0
  %v443 = vmax.f32 %v341, 0.0
  %v444 = vmax.f32 %v344, 0.0
  %v445 = vmax.f32 %v349, 0.0
  %v446 = vmax.f32 %v352, 0.0
  %v447 = vmax.f32 %v357, 0.0
  %v448 = vmax.f32 %v360, 0.0
  %v449 = vmax.f32 %v365, 0.0
  %v450 = vmax.f32 %v368, 0.0
  %v451 = vmax.f32 %v373, 0.0
  %v452 = vmax.f32 %v376, 0.0
  %v453 = vmax.f32 %v381, 0.0
  %v454 = vmax.f32 %v384, 0.0
  %v455 = vmax.f32 %v389, 0.0
  %v456 = vmax.f32 %v392, 0.0
  %v457 = vmax.f32 %v397, 0.0
  %v458 = vmax.f32 %v400, 0.0
  %v459 = vmax.f32 %v405, 0.0
  %v460 = vmax.f32 %v408, 0.0
  %v461 = vmax.f32 %v413, 0.0
  %v462 = vmax.f32 %v416, 0.0
  %v463 = vmax.f32 %v421, 0.0
  %v464 = vmax.f32 %v424, 0.0
  %v465 = vmax.f32 %v429, 0.0
  %v466 = vmax.f32 %v432, 0.0
  %v467 = vmax.f32 %v437, 0.0
  %v468 = vmax.f32 %v440, 0.0
  %v469 = vpack.c.bf16 %v444, %v443
  %v470 = vpack.c.bf16 %v446, %v445
  %v471 = vpack.c.bf16 %v448, %v447
  %v472 = vpack.c.bf16 %v450, %v449
  %v473 = vpack.c.bf16 %v452, %v451
  %v474 = vpack.c.bf16 %v454, %v453
  %v475 = vpack.c.bf16 %v456, %v455
  %v476 = vpack.c.bf16 %v458, %v457
  %v477 = vpack.c.bf16 %v460, %v459
  %v478 = vpack.c.bf16 %v462, %v461
  %v479 = vpack.c.bf16 %v464, %v463
  %v480 = vpack.c.bf16 %v466, %v465
  %v481 = vpack.c.bf16 %v468, %v467
  %v495 = vunpack.c.l.b16 %v469
  %v496 = vunpack.c.h.b16 %v469
  %v497 = vunpack.c.l.b16 %v470
  %v498 = vunpack.c.h.b16 %v470
  %v499 = vunpack.c.l.b16 %v471
  %v500 = vunpack.c.h.b16 %v471
  %v501 = vunpack.c.l.b16 %v472
  %v502 = vunpack.c.h.b16 %v472
  %v503 = vunpack.c.l.b16 %v473
  %v504 = vunpack.c.h.b16 %v473
  %v505 = vunpack.c.l.b16 %v474
  %v506 = vunpack.c.h.b16 %v474
  %v507 = vunpack.c.l.b16 %v475
  %v508 = vunpack.c.h.b16 %v475
  %v509 = vunpack.c.l.b16 %v476
  %v510 = vunpack.c.h.b16 %v476
  %v511 = vunpack.c.l.b16 %v477
  %v512 = vunpack.c.h.b16 %v477
  %v513 = vunpack.c.l.b16 %v478
  %v514 = vunpack.c.h.b16 %v478
  %v515 = vunpack.c.l.b16 %v479
  %v516 = vunpack.c.h.b16 %v479
  %v517 = vunpack.c.l.b16 %v480
  %v518 = vunpack.c.h.b16 %v480
  %v519 = vunpack.c.l.b16 %v481
  %v520 = vunpack.c.h.b16 %v481
  %v521 = vpack.c.b16 %v495, %v495
  %v522 = vpack.c.b16 %v496, %v496
  %v523 = vpack.c.b16 %v497, %v497
  %v524 = vpack.c.b16 %v498, %v498
  %v525 = vpack.c.b16 %v499, %v499
  %v526 = vpack.c.b16 %v500, %v500
  %v527 = vpack.c.b16 %v501, %v501
  %v528 = vpack.c.b16 %v502, %v502
  %v529 = vpack.c.b16 %v503, %v503
  %v530 = vpack.c.b16 %v504, %v504
  %v531 = vpack.c.b16 %v505, %v505
  %v532 = vpack.c.b16 %v506, %v506
  %v533 = vpack.c.b16 %v507, %v507
  %v534 = vpack.c.b16 %v508, %v508
  %v535 = vpack.c.b16 %v509, %v509
  %v536 = vpack.c.b16 %v510, %v510
  %v537 = vpack.c.b16 %v511, %v511
  %v538 = vpack.c.b16 %v512, %v512
  %v539 = vpack.c.b16 %v513, %v513
  %v540 = vpack.c.b16 %v514, %v514
  %v541 = vpack.c.b16 %v515, %v515
  %v542 = vpack.c.b16 %v516, %v516
  %v543 = vpack.c.b16 %v517, %v517
  %v544 = vpack.c.b16 %v518, %v518
  %v545 = vpack.c.b16 %v519, %v519
  %v546 = vpack.c.b16 %v520, %v520
  %573 = vst [vmem:[%s3] sm:$0xf] %v521
  %574 = vst [vmem:[%s3 + $0x4] sm:$0xf] %v522
  %575 = vst [vmem:[%s3 + $0x8] sm:$0xf] %v523
  %576 = vst [vmem:[%s3 + $0xc] sm:$0xf] %v524
  %577 = vst [vmem:[%s3 + $0x10] sm:$0xf] %v525
  %578 = vst [vmem:[%s3 + $0x14] sm:$0xf] %v526
  %579 = vst [vmem:[%s3 + $0x18] sm:$0xf] %v527
  %580 = vst [vmem:[%s3 + $0x1c] sm:$0xf] %v528
  %581 = vst [vmem:[%s3 + $0x20] sm:$0xf] %v529
  %582 = vst [vmem:[%s3 + $0x24] sm:$0xf] %v530
  %583 = vst [vmem:[%s3 + $0x28] sm:$0xf] %v531
  %584 = vst [vmem:[%s3 + $0x2c] sm:$0xf] %v532
  %585 = vst [vmem:[%s3 + $0x30] sm:$0xf] %v533
  %586 = vst [vmem:[%s3 + $0x34] sm:$0xf] %v534
  %587 = vst [vmem:[%s3 + $0x38] sm:$0xf] %v535
  %588 = vst [vmem:[%s3 + $0x3c] sm:$0xf] %v536
  %589 = vst [vmem:[%s3 + $0x40] sm:$0xf] %v537
  %590 = vst [vmem:[%s3 + $0x44] sm:$0xf] %v538
  %591 = vst [vmem:[%s3 + $0x48] sm:$0xf] %v539
  %592 = vst [vmem:[%s3 + $0x4c] sm:$0xf] %v540
  %593 = vst [vmem:[%s3 + $0x50] sm:$0xf] %v541
  %594 = vst [vmem:[%s3 + $0x54] sm:$0xf] %v542
  %595 = vst [vmem:[%s3 + $0x58] sm:$0xf] %v543
  %596 = vst [vmem:[%s3 + $0x5c] sm:$0xf] %v544
  %597 = vst [vmem:[%s3 + $0x60] sm:$0xf] %v545
  %598 = vst [vmem:[%s3 + $0x64] sm:$0xf] %v546
  // Predicated region
  $region14: #{cnn_classifier_forward.7} parent=0 // pred_check
    _
  $region15: #{cnn_classifier_forward.7} parent=0 // pred_check_branch
    %600 = sbr.rel (0) target = $region17
  $region16: #{cnn_classifier_forward.7} parent=0 // pred_region
    _
  $region17: #{cnn_classifier_forward.7} parent=0 // pred_fallthru
    _
  // Predicated region
  $region18: #{cnn_classifier_forward.7} parent=0 // pred_check
    _
  $region19: #{cnn_classifier_forward.7} parent=0 // pred_check_branch
    %602 = sbr.rel (0) target = $region21
  $region20: #{cnn_classifier_forward.7} parent=0 // pred_region
    _
  $region21: #{cnn_classifier_forward.7} parent=0 // pred_fallthru
    _

// kernel: squeeze.12
$region0: #{squeeze.12}
  %s0 = inlined_call_operand.vmem [shape: bf16[2,5,5,128], index: 0, kind: input, shape index: {}]
  %s1 = inlined_call_operand.vmem [shape: bf16[50,128], index: 1, kind: output, shape index: {}]
  $region1: #{squeeze.12} parent=0
    #allocation0 [shape = 'u8[28672]{0}', space=vmem, size = 0x7000, scoped, tag = 'scoped mem for output reshape']
    #allocation1 [shape = 'u8[40960]{0}', space=vmem, size = 0xa000, scoped, tag = 'scoped mem for input reshape']
    %s3 = smul.u32 4, 2
    %s4 = sshll.u32 1, %s3
    %s5 = ssub.s32 %s4, 1
    %s6 = smul.addr 4, 9
    %s7 = scalar_lea.vmem %s0, %s6
    %s8 = sshrl.u32 %s5, 1
    %s9 = sor.u32 %s5, %s8
    %s10 = sand.u32 %s9, 85
    %s11 = sshrl.u32 %s10, 1
    %s12 = sor.u32 %s10, %s11
    %s13 = sand.u32 51, %s12
    %s14 = sshrl.u32 %s13, 2
    %s15 = sor.u32 %s13, %s14
    %s16 = sand.u32 15, %s15
    %v17 = vld [vmem:[%s7] sm:%s16]
    %v18 = vunpack.c.l.bf16 %v17
    %v19 = vunpack.c.h.bf16 %v17
    %s20 = scalar_lea.vmem [#allocation1], 72
    %21 = vst [vmem:[%s20] sm:%s5] %v18
    %s22 = smul.addr 4, 8
    %s23 = scalar_lea.vmem %s0, %s22
    %s24 = sshrl.u32 %s5, 1
    %s25 = sor.u32 %s5, %s24
    %s26 = sand.u32 %s25, 85
    %s27 = sshrl.u32 %s26, 1
    %s28 = sor.u32 %s26, %s27
    %s29 = sand.u32 51, %s28
    %s30 = sshrl.u32 %s29, 2
    %s31 = sor.u32 %s29, %s30
    %s32 = sand.u32 15, %s31
    %v33 = vld [vmem:[%s23] sm:%s32]
    %v34 = vunpack.c.l.bf16 %v33
    %v35 = vunpack.c.h.bf16 %v33
    %s36 = scalar_lea.vmem [#allocation1], 64
    %37 = vst [vmem:[%s36] sm:%s5] %v34
    %s38 = smul.addr 4, 7
    %s39 = scalar_lea.vmem %s0, %s38
    %s40 = sshrl.u32 %s5, 1
    %s41 = sor.u32 %s5, %s40
    %s42 = sand.u32 %s41, 85
    %s43 = sshrl.u32 %s42, 1
    %s44 = sor.u32 %s42, %s43
    %s45 = sand.u32 51, %s44
    %s46 = sshrl.u32 %s45, 2
    %s47 = sor.u32 %s45, %s46
    %s48 = sand.u32 15, %s47
    %v49 = vld [vmem:[%s39] sm:%s48]
    %v50 = vunpack.c.l.bf16 %v49
    %v51 = vunpack.c.h.bf16 %v49
    %s52 = scalar_lea.vmem [#allocation1], 56
    %53 = vst [vmem:[%s52] sm:%s5] %v50
    %s54 = smul.addr 4, 6
    %s55 = scalar_lea.vmem %s0, %s54
    %s56 = sshrl.u32 %s5, 1
    %s57 = sor.u32 %s5, %s56
    %s58 = sand.u32 %s57, 85
    %s59 = sshrl.u32 %s58, 1
    %s60 = sor.u32 %s58, %s59
    %s61 = sand.u32 51, %s60
    %s62 = sshrl.u32 %s61, 2
    %s63 = sor.u32 %s61, %s62
    %s64 = sand.u32 15, %s63
    %v65 = vld [vmem:[%s55] sm:%s64]
    %v66 = vunpack.c.l.bf16 %v65
    %v67 = vunpack.c.h.bf16 %v65
    %s68 = scalar_lea.vmem [#allocation1], 48
    %69 = vst [vmem:[%s68] sm:%s5] %v66
    %s70 = smul.addr 4, 5
    %s71 = scalar_lea.vmem %s0, %s70
    %s72 = sshrl.u32 %s5, 1
    %s73 = sor.u32 %s5, %s72
    %s74 = sand.u32 %s73, 85
    %s75 = sshrl.u32 %s74, 1
    %s76 = sor.u32 %s74, %s75
    %s77 = sand.u32 51, %s76
    %s78 = sshrl.u32 %s77, 2
    %s79 = sor.u32 %s77, %s78
    %s80 = sand.u32 15, %s79
    %v81 = vld [vmem:[%s71] sm:%s80]
    %v82 = vunpack.c.l.bf16 %v81
    %v83 = vunpack.c.h.bf16 %v81
    %s84 = scalar_lea.vmem [#allocation1], 40
    %85 = vst [vmem:[%s84] sm:%s5] %v82
    %s86 = smul.addr 4, 4
    %s87 = scalar_lea.vmem %s0, %s86
    %s88 = sshrl.u32 %s5, 1
    %s89 = sor.u32 %s5, %s88
    %s90 = sand.u32 %s89, 85
    %s91 = sshrl.u32 %s90, 1
    %s92 = sor.u32 %s90, %s91
    %s93 = sand.u32 51, %s92
    %s94 = sshrl.u32 %s93, 2
    %s95 = sor.u32 %s93, %s94
    %s96 = sand.u32 15, %s95
    %v97 = vld [vmem:[%s87] sm:%s96]
    %v98 = vunpack.c.l.bf16 %v97
    %v99 = vunpack.c.h.bf16 %v97
    %s100 = scalar_lea.vmem [#allocation1], 32
    %101 = vst [vmem:[%s100] sm:%s5] %v98
    %s102 = smul.addr 4, 3
    %s103 = scalar_lea.vmem %s0, %s102
    %s104 = sshrl.u32 %s5, 1
    %s105 = sor.u32 %s5, %s104
    %s106 = sand.u32 %s105, 85
    %s107 = sshrl.u32 %s106, 1
    %s108 = sor.u32 %s106, %s107
    %s109 = sand.u32 51, %s108
    %s110 = sshrl.u32 %s109, 2
    %s111 = sor.u32 %s109, %s110
    %s112 = sand.u32 15, %s111
    %v113 = vld [vmem:[%s103] sm:%s112]
    %v114 = vunpack.c.l.bf16 %v113
    %v115 = vunpack.c.h.bf16 %v113
    %s116 = scalar_lea.vmem [#allocation1], 24
    %117 = vst [vmem:[%s116] sm:%s5] %v114
    %s118 = smul.addr 4, 2
    %s119 = scalar_lea.vmem %s0, %s118
    %s120 = sshrl.u32 %s5, 1
    %s121 = sor.u32 %s5, %s120
    %s122 = sand.u32 %s121, 85
    %s123 = sshrl.u32 %s122, 1
    %s124 = sor.u32 %s122, %s123
    %s125 = sand.u32 51, %s124
    %s126 = sshrl.u32 %s125, 2
    %s127 = sor.u32 %s125, %s126
    %s128 = sand.u32 15, %s127
    %v129 = vld [vmem:[%s119] sm:%s128]
    %v130 = vunpack.c.l.bf16 %v129
    %v131 = vunpack.c.h.bf16 %v129
    %s132 = scalar_lea.vmem [#allocation1], 16
    %133 = vst [vmem:[%s132] sm:%s5] %v130
    %s134 = scalar_lea.vmem %s0, 4
    %s135 = sshrl.u32 %s5, 1
    %s136 = sor.u32 %s5, %s135
    %s137 = sand.u32 %s136, 85
    %s138 = sshrl.u32 %s137, 1
    %s139 = sor.u32 %s137, %s138
    %s140 = sand.u32 51, %s139
    %s141 = sshrl.u32 %s140, 2
    %s142 = sor.u32 %s140, %s141
    %s143 = sand.u32 15, %s142
    %v144 = vld [vmem:[%s134] sm:%s143]
    %v145 = vunpack.c.l.bf16 %v144
    %v146 = vunpack.c.h.bf16 %v144
    %s147 = scalar_lea.vmem [#allocation1], 8
    %148 = vst [vmem:[%s147] sm:%s5] %v145
    %s149 = sshrl.u32 %s5, 1
    %s150 = sor.u32 %s5, %s149
    %s151 = sand.u32 %s150, 85
    %s152 = sshrl.u32 %s151, 1
    %s153 = sor.u32 %s151, %s152
    %s154 = sand.u32 51, %s153
    %s155 = sshrl.u32 %s154, 2
    %s156 = sor.u32 %s154, %s155
    %s157 = sand.u32 15, %s156
    %v158 = vld [vmem:[%s0] sm:%s157]
    %v159 = vunpack.c.l.bf16 %v158
    %v160 = vunpack.c.h.bf16 %v158
    %161 = vst [vmem:[#allocation1] sm:%s5] %v159
    %v162 = vld [vmem:[#allocation1] sm:$0x1f]
    %163 = vst [vmem:[#allocation0] sm:$0x1f] %v162
    %s164 = scalar_lea.vmem [#allocation1], 8
    %v165 = vld [vmem:[%s164] sm:$0x1f]
    %s166 = scalar_lea.vmem [#allocation0], 5
    %167 = vst [vmem:[%s166] sm:$0x1f] %v165
    %s168 = scalar_lea.vmem [#allocation1], 16
    %v169 = vld [vmem:[%s168] sm:$0x1f]
    %s170 = scalar_lea.vmem [#allocation0], 10
    %171 = vst [vmem:[%s170] sm:$0x1f] %v169
    %s172 = scalar_lea.vmem [#allocation1], 24
    %v173 = vld [vmem:[%s172] sm:$0x1f]
    %s174 = scalar_lea.vmem [#allocation0], 15
    %175 = vst [vmem:[%s174] sm:$0x1f] %v173
    %s176 = scalar_lea.vmem [#allocation1], 32
    %v177 = vld [vmem:[%s176] sm:$0x1f]
    %s178 = scalar_lea.vmem [#allocation0], 20
    %179 = vst [vmem:[%s178] sm:$0x1f] %v177
    %s180 = scalar_lea.vmem [#allocation1], 40
    %v181 = vld [vmem:[%s180] sm:$0x1f]
    %s182 = scalar_lea.vmem [#allocation0], 25
    %183 = vst [vmem:[%s182] sm:$0x1f] %v181
    %s184 = scalar_lea.vmem [#allocation1], 48
    %v185 = vld [vmem:[%s184] sm:$0x1f]
    %s186 = scalar_lea.vmem [#allocation0], 30
    %187 = vst [vmem:[%s186] sm:$0x1f] %v185
    %s188 = scalar_lea.vmem [#allocation1], 56
    %v189 = vld [vmem:[%s188] sm:$0x1f]
    %s190 = scalar_lea.vmem [#allocation0], 35
    %191 = vst [vmem:[%s190] sm:$0x1f] %v189
    %s192 = scalar_lea.vmem [#allocation1], 64
    %v193 = vld [vmem:[%s192] sm:$0x1f]
    %s194 = scalar_lea.vmem [#allocation0], 40
    %195 = vst [vmem:[%s194] sm:$0x1f] %v193
    %s196 = scalar_lea.vmem [#allocation1], 72
    %v197 = vld [vmem:[%s196] sm:$0x1f]
    %s198 = scalar_lea.vmem [#allocation0], 45
    %199 = vst [vmem:[%s198] sm:$0x1f] %v197
    %s201 = smul.u32 4, 2
    %s202 = sshll.u32 1, %s201
    %s203 = ssub.s32 %s202, 1
    %s204 = sshrl.u32 %s201, 1
    %v205 = vld [vmem:[#allocation0] sm:%s203]
    %v206 = vpack.c.bf16 0.0, %v205
    %s207 = sshll.u32 1, %s204
    %s208 = ssub.s32 %s207, 1
    %209 = vst [vmem:[%s1] sm:%s208] %v206
    %s210 = scalar_lea.vmem [#allocation0], 8
    %v211 = vld [vmem:[%s210] sm:%s203]
    %v212 = vpack.c.bf16 0.0, %v211
    %s213 = sshll.u32 1, %s204
    %s214 = ssub.s32 %s213, 1
    %s215 = scalar_lea.vmem %s1, 4
    %216 = vst [vmem:[%s215] sm:%s214] %v212
    %s217 = scalar_lea.vmem [#allocation0], 16
    %v218 = vld [vmem:[%s217] sm:%s203]
    %v219 = vpack.c.bf16 0.0, %v218
    %s220 = sshll.u32 1, %s204
    %s221 = ssub.s32 %s220, 1
    %s222 = smul.addr 4, 2
    %s223 = scalar_lea.vmem %s1, %s222
    %224 = vst [vmem:[%s223] sm:%s221] %v219
    %s225 = scalar_lea.vmem [#allocation0], 24
    %v226 = vld [vmem:[%s225] sm:%s203]
    %v227 = vpack.c.bf16 0.0, %v226
    %s228 = sshll.u32 1, %s204
    %s229 = ssub.s32 %s228, 1
    %s230 = smul.addr 4, 3
    %s231 = scalar_lea.vmem %s1, %s230
    %232 = vst [vmem:[%s231] sm:%s229] %v227
    %s233 = scalar_lea.vmem [#allocation0], 32
    %v234 = vld [vmem:[%s233] sm:%s203]
    %v235 = vpack.c.bf16 0.0, %v234
    %s236 = sshll.u32 1, %s204
    %s237 = ssub.s32 %s236, 1
    %s238 = smul.addr 4, 4
    %s239 = scalar_lea.vmem %s1, %s238
    %240 = vst [vmem:[%s239] sm:%s237] %v235
    %s241 = scalar_lea.vmem [#allocation0], 40
    %v242 = vld [vmem:[%s241] sm:%s203]
    %v243 = vpack.c.bf16 0.0, %v242
    %s244 = sshll.u32 1, %s204
    %s245 = ssub.s32 %s244, 1
    %s246 = smul.addr 4, 5
    %s247 = scalar_lea.vmem %s1, %s246
    %248 = vst [vmem:[%s247] sm:%s245] %v243
    %s249 = scalar_lea.vmem [#allocation0], 48
    %v250 = vld [vmem:[%s249] sm:%s203]
    %v251 = vpack.c.bf16 0.0, %v250
    %s252 = sshll.u32 1, %s204
    %s253 = ssub.s32 %s252, 1
    %s254 = smul.addr 4, 6
    %s255 = scalar_lea.vmem %s1, %s254
    %256 = vst [vmem:[%s255] sm:%s253] %v251

// kernel: cnn_classifier_forward.8
$region0: #{cnn_classifier_forward.8}
  #allocation0 [shape = 'u32[]', space=smem, size = 0x4, offset = 0x4, fixed_abs, tag = 'smem constant byte address 0x4 - core index']
  #allocation1 [shape = 'u32[144,128]{1,0:T(1,128)}', space=vmem, size = 0x12000, scoped, tag = 'internal scratch']
  %s0 = inlined_call_operand.vmem [shape: bf16[64,128], index: 0, kind: input, shape index: {}]
  %s1 = inlined_call_operand.vmem [shape: bf16[64,128], index: 1, kind: input, shape index: {}]
  %s2 = inlined_call_operand.vmem [shape: bf16[64,128], index: 2, kind: input, shape index: {}]
  %s3 = inlined_call_operand.vmem [shape: bf16[64,128], index: 3, kind: input, shape index: {}]
  %s4 = inlined_call_operand.vmem [shape: bf16[64,128], index: 4, kind: output, shape index: {}]
  %s5 = sld [smem:[#allocation0]]
  $region26: #{cnn_classifier_forward.8} parent=0
    _
  %s7 = ssub.s32 1, %s5
  %s8 = scalar_select 0, %s7, %s5
  // Predicated region
  $region2: #{cnn_classifier_forward.8} parent=0 // pred_check
    _
  $region3: #{cnn_classifier_forward.8} parent=0 // pred_check_branch
    %10 = sbr.rel (0) target = $region5
  $region4: #{cnn_classifier_forward.8} parent=0 // pred_region
    _
  $region5: #{cnn_classifier_forward.8} parent=0 // pred_fallthru
    _
  // Predicated region
  $region6: #{cnn_classifier_forward.8} parent=0 // pred_check
    _
  $region7: #{cnn_classifier_forward.8} parent=0 // pred_check_branch
    %12 = sbr.rel (0) target = $region9
  $region8: #{cnn_classifier_forward.8} parent=0 // pred_region
    _
  $region9: #{cnn_classifier_forward.8} parent=0 // pred_fallthru
    _
  // Predicated region
  $region10: #{cnn_classifier_forward.8} parent=0 // pred_check
    _
  $region11: #{cnn_classifier_forward.8} parent=0 // pred_check_branch
    %14 = sbr.rel (0) target = $region13
  $region12: #{cnn_classifier_forward.8} parent=0 // pred_region
    _
  $region13: #{cnn_classifier_forward.8} parent=0 // pred_fallthru
    _
  // Predicated region
  $region14: #{cnn_classifier_forward.8} parent=0 // pred_check
    _
  $region15: #{cnn_classifier_forward.8} parent=0 // pred_check_branch
    %16 = sbr.rel (0) target = $region17
  $region16: #{cnn_classifier_forward.8} parent=0 // pred_region
    _
  $region17: #{cnn_classifier_forward.8} parent=0 // pred_fallthru
    _
  %v17 = vld [vmem:[%s0] sm:$0xf]
  %v18 = vld [vmem:[%s0 + $0x4] sm:$0xf]
  %v19 = vld [vmem:[%s0 + $0x8] sm:$0xf]
  %v20 = vld [vmem:[%s0 + $0xc] sm:$0xf]
  %v21 = vld [vmem:[%s0 + $0x10] sm:$0xf]
  %v22 = vld [vmem:[%s0 + $0x14] sm:$0xf]
  %v23 = vld [vmem:[%s0 + $0x18] sm:$0xf]
  %v24 = vld [vmem:[%s0 + $0x1c] sm:$0xf]
  %v25 = vld [vmem:[%s1] sm:$0xf]
  %v26 = vld [vmem:[%s1 + $0x4] sm:$0xf]
  %v27 = vld [vmem:[%s1 + $0x8] sm:$0xf]
  %v28 = vld [vmem:[%s1 + $0xc] sm:$0xf]
  %v29 = vld [vmem:[%s1 + $0x10] sm:$0xf]
  %v30 = vld [vmem:[%s1 + $0x14] sm:$0xf]
  %v31 = vld [vmem:[%s1 + $0x18] sm:$0xf]
  %v32 = vld [vmem:[%s1 + $0x1c] sm:$0xf]
  %v33 = vmax.bf16 %v17, %v25
  %v34 = vmax.bf16 %v18, %v26
  %v35 = vmax.bf16 %v19, %v27
  %v36 = vmax.bf16 %v20, %v28
  %v37 = vmax.bf16 %v21, %v29
  %v38 = vmax.bf16 %v22, %v30
  %v39 = vmax.bf16 %v23, %v31
  %v40 = vmax.bf16 %v24, %v32
  %v41 = vld [vmem:[%s2] sm:$0xf]
  %v42 = vld [vmem:[%s2 + $0x4] sm:$0xf]
  %v43 = vld [vmem:[%s2 + $0x8] sm:$0xf]
  %v44 = vld [vmem:[%s2 + $0xc] sm:$0xf]
  %v45 = vld [vmem:[%s2 + $0x10] sm:$0xf]
  %v46 = vld [vmem:[%s2 + $0x14] sm:$0xf]
  %v47 = vld [vmem:[%s2 + $0x18] sm:$0xf]
  %v48 = vld [vmem:[%s2 + $0x1c] sm:$0xf]
  %v49 = vld [vmem:[%s3] sm:$0xf]
  %v50 = vld [vmem:[%s3 + $0x4] sm:$0xf]
  %v51 = vld [vmem:[%s3 + $0x8] sm:$0xf]
  %v52 = vld [vmem:[%s3 + $0xc] sm:$0xf]
  %v53 = vld [vmem:[%s3 + $0x10] sm:$0xf]
  %v54 = vld [vmem:[%s3 + $0x14] sm:$0xf]
  %v55 = vld [vmem:[%s3 + $0x18] sm:$0xf]
  %v56 = vld [vmem:[%s3 + $0x1c] sm:$0xf]
  %v57 = vmax.bf16 %v41, %v49
  %v58 = vmax.bf16 %v42, %v50
  %v59 = vmax.bf16 %v43, %v51
  %v60 = vmax.bf16 %v44, %v52
  %v61 = vmax.bf16 %v45, %v53
  %v62 = vmax.bf16 %v46, %v54
  %v63 = vmax.bf16 %v47, %v55
  %v64 = vmax.bf16 %v48, %v56
  %v65 = vmax.bf16 %v33, %v57
  %v66 = vmax.bf16 %v34, %v58
  %v67 = vmax.bf16 %v35, %v59
  %v68 = vmax.bf16 %v36, %v60
  %v69 = vmax.bf16 %v37, %v61
  %v70 = vmax.bf16 %v38, %v62
  %v71 = vmax.bf16 %v39, %v63
  %v72 = vmax.bf16 %v40, %v64
  %73 = vst [vmem:[%s4] sm:$0xf] %v65
  %74 = vst [vmem:[%s4 + $0x4] sm:$0xf] %v66
  %75 = vst [vmem:[%s4 + $0x8] sm:$0xf] %v67
  %76 = vst [vmem:[%s4 + $0xc] sm:$0xf] %v68
  %77 = vst [vmem:[%s4 + $0x10] sm:$0xf] %v69
  %78 = vst [vmem:[%s4 + $0x14] sm:$0xf] %v70
  %79 = vst [vmem:[%s4 + $0x18] sm:$0xf] %v71
  %80 = vst [vmem:[%s4 + $0x1c] sm:$0xf] %v72
  // Predicated region
  $region18: #{cnn_classifier_forward.8} parent=0 // pred_check
    _
  $region19: #{cnn_classifier_forward.8} parent=0 // pred_check_branch
    %82 = sbr.rel (0) target = $region21
  $region20: #{cnn_classifier_forward.8} parent=0 // pred_region
    _
  $region21: #{cnn_classifier_forward.8} parent=0 // pred_fallthru
    _
  // Predicated region
  $region22: #{cnn_classifier_forward.8} parent=0 // pred_check
    _
  $region23: #{cnn_classifier_forward.8} parent=0 // pred_check_branch
    %84 = sbr.rel (0) target = $region25
  $region24: #{cnn_classifier_forward.8} parent=0 // pred_region
    _
  $region25: #{cnn_classifier_forward.8} parent=0 // pred_fallthru
    _

// kernel: cnn_classifier_forward.9
$region0: #{cnn_classifier_forward.9}
  #allocation0 [shape = 'u32[]', space=smem, size = 0x4, offset = 0x4, fixed_abs, tag = 'smem constant byte address 0x4 - core index']
  #allocation1 [shape = 'u32[144,128]{1,0:T(1,128)}', space=vmem, size = 0x12000, scoped, tag = 'internal scratch']
  %s0 = inlined_call_operand.vmem [shape: bf16[16,512], index: 0, kind: input, shape index: {}]
  %s1 = inlined_call_operand.vmem [shape: bf16[512,128], index: 1, kind: input, shape index: {}]
  %s2 = inlined_call_operand.vmem [shape: f32[1,128], index: 2, kind: input, shape index: {}]
  %s3 = inlined_call_operand.vmem [shape: bf16[128,128], index: 3, kind: input, shape index: {}]
  %s4 = inlined_call_operand.vmem [shape: f32[1,128], index: 4, kind: input, shape index: {}]
  %s5 = inlined_call_operand.vmem [shape: bf16[128,128], index: 5, kind: input, shape index: {}]
  %s6 = inlined_call_operand.vmem [shape: f32[1,128], index: 6, kind: input, shape index: {}]
  %s7 = inlined_call_operand.vmem [shape: f32[16,128], index: 7, kind: output, shape index: {}]
  %s8 = sld [smem:[#allocation0]]
  $region38: #{cnn_classifier_forward.9} parent=0
    _
  %s10 = ssub.s32 1, %s8
  %s11 = scalar_select 0, %s10, %s8
  // Predicated region
  $region2: #{cnn_classifier_forward.9} parent=0 // pred_check
    _
  $region3: #{cnn_classifier_forward.9} parent=0 // pred_check_branch
    %13 = sbr.rel (0) target = $region5
  $region4: #{cnn_classifier_forward.9} parent=0 // pred_region
    _
  $region5: #{cnn_classifier_forward.9} parent=0 // pred_fallthru
    _
  // Predicated region
  $region6: #{cnn_classifier_forward.9} parent=0 // pred_check
    _
  $region7: #{cnn_classifier_forward.9} parent=0 // pred_check_branch
    %15 = sbr.rel (0) target = $region9
  $region8: #{cnn_classifier_forward.9} parent=0 // pred_region
    _
  $region9: #{cnn_classifier_forward.9} parent=0 // pred_fallthru
    _
  // Predicated region
  $region10: #{cnn_classifier_forward.9} parent=0 // pred_check
    _
  $region11: #{cnn_classifier_forward.9} parent=0 // pred_check_branch
    %17 = sbr.rel (0) target = $region13
  $region12: #{cnn_classifier_forward.9} parent=0 // pred_region
    _
  $region13: #{cnn_classifier_forward.9} parent=0 // pred_fallthru
    _
  // Predicated region
  $region14: #{cnn_classifier_forward.9} parent=0 // pred_check
    _
  $region15: #{cnn_classifier_forward.9} parent=0 // pred_check_branch
    %19 = sbr.rel (0) target = $region17
  $region16: #{cnn_classifier_forward.9} parent=0 // pred_region
    _
  $region17: #{cnn_classifier_forward.9} parent=0 // pred_fallthru
    _
  // Predicated region
  $region18: #{cnn_classifier_forward.9} parent=0 // pred_check
    _
  $region19: #{cnn_classifier_forward.9} parent=0 // pred_check_branch
    %21 = sbr.rel (0) target = $region21
  $region20: #{cnn_classifier_forward.9} parent=0 // pred_region
    _
  $region21: #{cnn_classifier_forward.9} parent=0 // pred_fallthru
    _
  // Predicated region
  $region22: #{cnn_classifier_forward.9} parent=0 // pred_check
    _
  $region23: #{cnn_classifier_forward.9} parent=0 // pred_check_branch
    %23 = sbr.rel (0) target = $region25
  $region24: #{cnn_classifier_forward.9} parent=0 // pred_region
    _
  $region25: #{cnn_classifier_forward.9} parent=0 // pred_fallthru
    _
  // Predicated region
  $region26: #{cnn_classifier_forward.9} parent=0 // pred_check
    _
  $region27: #{cnn_classifier_forward.9} parent=0 // pred_check_branch
    %25 = sbr.rel (0) target = $region29
  $region28: #{cnn_classifier_forward.9} parent=0 // pred_region
    _
  $region29: #{cnn_classifier_forward.9} parent=0 // pred_fallthru
    _
  %v27 = vld [vmem:[%s0] sm:$0xff]
  %v28 = vld [vmem:[%s0 + $0x8] sm:$0xff]
  %v29 = vld [vmem:[%s0 + $0x10] sm:$0xff]
  %v30 = vld [vmem:[%s0 + $0x18] sm:$0xff]
  %v31 = vld [vmem:[%s1] sm:$0xf]
  %v32 = vld [vmem:[%s1 + $0x4] sm:$0xf]
  %v33 = vld [vmem:[%s1 + $0x8] sm:$0xf]
  %v34 = vld [vmem:[%s1 + $0xc] sm:$0xf]
  %v35 = vld [vmem:[%s1 + $0x10] sm:$0xf]
  %v36 = vld [vmem:[%s1 + $0x14] sm:$0xf]
  %v37 = vld [vmem:[%s1 + $0x18] sm:$0xf]
  %v38 = vld [vmem:[%s1 + $0x1c] sm:$0xf]
  %v39 = vld [vmem:[%s1 + $0x20] sm:$0xf]
  %v40 = vld [vmem:[%s1 + $0x24] sm:$0xf]
  %v41 = vld [vmem:[%s1 + $0x28] sm:$0xf]
  %v42 = vld [vmem:[%s1 + $0x2c] sm:$0xf]
  %v43 = vld [vmem:[%s1 + $0x30] sm:$0xf]
  %v44 = vld [vmem:[%s1 + $0x34] sm:$0xf]
  %v45 = vld [vmem:[%s1 + $0x38] sm:$0xf]
  %v46 = vld [vmem:[%s1 + $0x3c] sm:$0xf]
  %v47 = vld [vmem:[%s1 + $0x40] sm:$0xf]
  %v48 = vld [vmem:[%s1 + $0x44] sm:$0xf]
  %v49 = vld [vmem:[%s1 + $0x48] sm:$0xf]
  %v50 = vld [vmem:[%s1 + $0x4c] sm:$0xf]
  %v51 = vld [vmem:[%s1 + $0x50] sm:$0xf]
  %v52 = vld [vmem:[%s1 + $0x54] sm:$0xf]
  %v53 = vld [vmem:[%s1 + $0x58] sm:$0xf]
  %v54 = vld [vmem:[%s1 + $0x5c] sm:$0xf]
  %v55 = vld [vmem:[%s1 + $0x60] sm:$0xf]
  %v56 = vld [vmem:[%s1 + $0x64] sm:$0xf]
  %v57 = vld [vmem:[%s1 + $0x68] sm:$0xf]
  %v58 = vld [vmem:[%s1 + $0x6c] sm:$0xf]
  %v59 = vld [vmem:[%s1 + $0x70] sm:$0xf]
  %v60 = vld [vmem:[%s1 + $0x74] sm:$0xf]
  %v61 = vld [vmem:[%s1 + $0x78] sm:$0xf]
  %v62 = vld [vmem:[%s1 + $0x7c] sm:$0xf]
  %v63 = vld [vmem:[%s1 + $0x80] sm:$0xf]
  %v64 = vld [vmem:[%s1 + $0x84] sm:$0xf]
  %v65 = vld [vmem:[%s1 + $0x88] sm:$0xf]
  %v66 = vld [vmem:[%s1 + $0x8c] sm:$0xf]
  %v67 = vld [vmem:[%s1 + $0x90] sm:$0xf]
  %v68 = vld [vmem:[%s1 + $0x94] sm:$0xf]
  %v69 = vld [vmem:[%s1 + $0x98] sm:$0xf]
  %v70 = vld [vmem:[%s1 + $0x9c] sm:$0xf]
  %v71 = vld [vmem:[%s1 + $0xa0] sm:$0xf]
  %v72 = vld [vmem:[%s1 + $0xa4] sm:$0xf]
  %v73 = vld [vmem:[%s1 + $0xa8] sm:$0xf]
  %v74 = vld [vmem:[%s1 + $0xac] sm:$0xf]
  %v75 = vld [vmem:[%s1 + $0xb0] sm:$0xf]
  %v76 = vld [vmem:[%s1 + $0xb4] sm:$0xf]
  %v77 = vld [vmem:[%s1 + $0xb8] sm:$0xf]
  %v78 = vld [vmem:[%s1 + $0xbc] sm:$0xf]
  %v79 = vld [vmem:[%s1 + $0xc0] sm:$0xf]
  %v80 = vld [vmem:[%s1 + $0xc4] sm:$0xf]
  %v81 = vld [vmem:[%s1 + $0xc8] sm:$0xf]
  %v82 = vld [vmem:[%s1 + $0xcc] sm:$0xf]
  %v83 = vld [vmem:[%s1 + $0xd0] sm:$0xf]
  %v84 = vld [vmem:[%s1 + $0xd4] sm:$0xf]
  %v85 = vld [vmem:[%s1 + $0xd8] sm:$0xf]
  %v86 = vld [vmem:[%s1 + $0xdc] sm:$0xf]
  %v87 = vld [vmem:[%s1 + $0xe0] sm:$0xf]
  %v88 = vld [vmem:[%s1 + $0xe4] sm:$0xf]
  %v89 = vld [vmem:[%s1 + $0xe8] sm:$0xf]
  %v90 = vld [vmem:[%s1 + $0xec] sm:$0xf]
  %v91 = vld [vmem:[%s1 + $0xf0] sm:$0xf]
  %v92 = vld [vmem:[%s1 + $0xf4] sm:$0xf]
  %v93 = vld [vmem:[%s1 + $0xf8] sm:$0xf]
  %v94 = vld [vmem:[%s1 + $0xfc] sm:$0xf]
  %v95 = vld [vmem:[%s2] sm:$0x1]
  %v97 = vlaneseq
  %v98 = vshrl.u32 %v97, 7
  %v99 = vsub.s32 0, %v98
  %v100 = vrot.slane %v95, %v99
  %v106 = vunpack.c.l.b16 %v27
  %v107 = vunpack.c.h.b16 %v27
  %v108 = vunpack.c.l.b16 %v28
  %v109 = vunpack.c.h.b16 %v28
  %v110 = vunpack.c.l.b16 %v29
  %v111 = vunpack.c.h.b16 %v29
  %v112 = vunpack.c.l.b16 %v30
  %v113 = vunpack.c.h.b16 %v30
  %v114 = vpack.c.b16 %v110, %v106
  %v115 = vpack.c.b16 %v111, %v107
  %v116 = vpack.c.b16 %v112, %v108
  %v117 = vpack.c.b16 %v113, %v109
  %v186 = vunpack.c.l.b16 %v31
  %v187 = vunpack.c.l.b16 %v32
  %v188 = vunpack.c.l.b16 %v33
  %v189 = vunpack.c.l.b16 %v34
  %v190 = vunpack.c.l.b16 %v35
  %v191 = vunpack.c.l.b16 %v36
  %v192 = vunpack.c.l.b16 %v37
  %v193 = vunpack.c.l.b16 %v38
  %v194 = vunpack.c.l.b16 %v39
  %v195 = vunpack.c.l.b16 %v40
  %v196 = vunpack.c.l.b16 %v41
  %v197 = vunpack.c.l.b16 %v42
  %v198 = vunpack.c.l.b16 %v43
  %v199 = vunpack.c.l.b16 %v44
  %v200 = vunpack.c.l.b16 %v45
  %v201 = vunpack.c.l.b16 %v46
  %v202 = vunpack.c.l.b16 %v47
  %v203 = vunpack.c.l.b16 %v48
  %v204 = vunpack.c.l.b16 %v49
  %v205 = vunpack.c.l.b16 %v50
  %v206 = vunpack.c.l.b16 %v51
  %v207 = vunpack.c.l.b16 %v52
  %v208 = vunpack.c.l.b16 %v53
  %v209 = vunpack.c.l.b16 %v54
  %v210 = vunpack.c.l.b16 %v55
  %v211 = vunpack.c.l.b16 %v56
  %v212 = vunpack.c.l.b16 %v57
  %v213 = vunpack.c.l.b16 %v58
  %v214 = vunpack.c.l.b16 %v59
  %v215 = vunpack.c.l.b16 %v60
  %v216 = vunpack.c.l.b16 %v61
  %v217 = vunpack.c.l.b16 %v62
  %v218 = vunpack.c.l.b16 %v63
  %v219 = vunpack.c.l.b16 %v64
  %v220 = vunpack.c.l.b16 %v65
  %v221 = vunpack.c.l.b16 %v66
  %v222 = vunpack.c.l.b16 %v67
  %v223 = vunpack.c.l.b16 %v68
  %v224 = vunpack.c.l.b16 %v69
  %v225 = vunpack.c.l.b16 %v70
  %v226 = vunpack.c.l.b16 %v71
  %v227 = vunpack.c.l.b16 %v72
  %v228 = vunpack.c.l.b16 %v73
  %v229 = vunpack.c.l.b16 %v74
  %v230 = vunpack.c.l.b16 %v75
  %v231 = vunpack.c.l.b16 %v76
  %v232 = vunpack.c.l.b16 %v77
  %v233 = vunpack.c.l.b16 %v78
  %v234 = vunpack.c.l.b16 %v79
  %v235 = vunpack.c.l.b16 %v80
  %v236 = vunpack.c.l.b16 %v81
  %v237 = vunpack.c.l.b16 %v82
  %v238 = vunpack.c.l.b16 %v83
  %v239 = vunpack.c.l.b16 %v84
  %v240 = vunpack.c.l.b16 %v85
  %v241 = vunpack.c.l.b16 %v86
  %v242 = vunpack.c.l.b16 %v87
  %v243 = vunpack.c.l.b16 %v88
  %v244 = vunpack.c.l.b16 %v89
  %v245 = vunpack.c.l.b16 %v90
  %v246 = vunpack.c.l.b16 %v91
  %v247 = vunpack.c.l.b16 %v92
  %v248 = vunpack.c.l.b16 %v93
  %v249 = vunpack.c.l.b16 %v94
  %v250 = vpack.c.b16 %v187, %v186
  %v251 = vpack.c.b16 %v189, %v188
  %v252 = vpack.c.b16 %v191, %v190
  %v253 = vpack.c.b16 %v193, %v192
  %v254 = vpack.c.b16 %v195, %v194
  %v255 = vpack.c.b16 %v197, %v196
  %v256 = vpack.c.b16 %v199, %v198
  %v257 = vpack.c.b16 %v201, %v200
  %v258 = vpack.c.b16 %v203, %v202
  %v259 = vpack.c.b16 %v205, %v204
  %v260 = vpack.c.b16 %v207, %v206
  %v261 = vpack.c.b16 %v209, %v208
  %v262 = vpack.c.b16 %v211, %v210
  %v263 = vpack.c.b16 %v213, %v212
  %v264 = vpack.c.b16 %v215, %v214
  %v265 = vpack.c.b16 %v217, %v216
  %v266 = vpack.c.b16 %v219, %v218
  %v267 = vpack.c.b16 %v221, %v220
  %v268 = vpack.c.b16 %v223, %v222
  %v269 = vpack.c.b16 %v225, %v224
  %v270 = vpack.c.b16 %v227, %v226
  %v271 = vpack.c.b16 %v229, %v228
  %v272 = vpack.c.b16 %v231, %v230
  %v273 = vpack.c.b16 %v233, %v232
  %v274 = vpack.c.b16 %v235, %v234
  %v275 = vpack.c.b16 %v237, %v236
  %v276 = vpack.c.b16 %v239, %v238
  %v277 = vpack.c.b16 %v241, %v240
  %v278 = vpack.c.b16 %v243, %v242
  %v279 = vpack.c.b16 %v245, %v244
  %v280 = vpack.c.b16 %v247, %v246
  %v281 = vpack.c.b16 %v249, %v248
  %314 = vmatprep.subr.bf16.mxu0 0
  %315 = vmatpush1.bf16.msra.mxu0 %v257
  %316 = vmatprep.subr.bf16.mxu0 0
  %317 = vmatpush1.bf16.msra.mxu0 %v256
  %318 = vmatprep.subr.bf16.mxu0 0
  %319 = vmatpush1.bf16.msra.mxu0 %v255
  %320 = vmatprep.subr.bf16.mxu0 0
  %321 = vmatpush1.bf16.msra.mxu0 %v254
  %322 = vmatprep.subr.bf16.mxu0 0
  %323 = vmatpush1.bf16.msra.mxu0 %v253
  %324 = vmatprep.subr.bf16.mxu0 0
  %325 = vmatpush1.bf16.msra.mxu0 %v252
  %326 = vmatprep.subr.bf16.mxu0 0
  %327 = vmatpush1.bf16.msra.mxu0 %v251
  %328 = vmatprep.subr.bf16.mxu0 0
  %329 = vmatpush1.bf16.msra.mxu0 %v250
  %330 = vmatprep.subr.bf16.mxu0 0
  %331 = vmatpush2.bf16.msra.mxu0 %v265
  %332 = vmatprep.subr.bf16.mxu0 0
  %333 = vmatpush2.bf16.msra.mxu0 %v264
  %334 = vmatprep.subr.bf16.mxu0 0
  %335 = vmatpush2.bf16.msra.mxu0 %v263
  %336 = vmatprep.subr.bf16.mxu0 0
  %337 = vmatpush2.bf16.msra.mxu0 %v262
  %338 = vmatprep.subr.bf16.mxu0 0
  %339 = vmatpush2.bf16.msra.mxu0 %v261
  %340 = vmatprep.subr.bf16.mxu0 0
  %341 = vmatpush2.bf16.msra.mxu0 %v260
  %342 = vmatprep.subr.bf16.mxu0 0
  %343 = vmatpush2.bf16.msra.mxu0 %v259
  %344 = vmatprep.subr.bf16.mxu0 0
  %345 = vmatpush2.bf16.msra.mxu0 %v258
  %346 = vmatprep.mubr.bf16.mxu0 %v115
  %347 = vmatmul.mubr.bf16.gmra.mxu0 %v114
  %v348 = vpop.f32.mrf.mxu0
  %v349 = vadd.f32 %v100, %v348
  %v350 = vpop.f32.mrf.mxu0
  %v351 = vpop.f32.mrf.mxu0
  %v352 = vadd.f32 %v100, %v351
  %v353 = vpop.f32.mrf.mxu0
  %354 = vdwg.mxu0
  %355 = vmatprep.subr.bf16.mxu0 0
  %356 = vmatpush1.bf16.msra.mxu0 %v273
  %357 = vmatprep.subr.bf16.mxu0 0
  %358 = vmatpush1.bf16.msra.mxu0 %v272
  %359 = vmatprep.subr.bf16.mxu0 0
  %360 = vmatpush1.bf16.msra.mxu0 %v271
  %361 = vmatprep.subr.bf16.mxu0 0
  %362 = vmatpush1.bf16.msra.mxu0 %v270
  %363 = vmatprep.subr.bf16.mxu0 0
  %364 = vmatpush1.bf16.msra.mxu0 %v269
  %365 = vmatprep.subr.bf16.mxu0 0
  %366 = vmatpush1.bf16.msra.mxu0 %v268
  %367 = vmatprep.subr.bf16.mxu0 0
  %368 = vmatpush1.bf16.msra.mxu0 %v267
  %369 = vmatprep.subr.bf16.mxu0 0
  %370 = vmatpush1.bf16.msra.mxu0 %v266
  %371 = vmatprep.subr.bf16.mxu0 0
  %372 = vmatpush2.bf16.msra.mxu0 %v281
  %373 = vmatprep.subr.bf16.mxu0 0
  %374 = vmatpush2.bf16.msra.mxu0 %v280
  %375 = vmatprep.subr.bf16.mxu0 0
  %376 = vmatpush2.bf16.msra.mxu0 %v279
  %377 = vmatprep.subr.bf16.mxu0 0
  %378 = vmatpush2.bf16.msra.mxu0 %v278
  %379 = vmatprep.subr.bf16.mxu0 0
  %380 = vmatpush2.bf16.msra.mxu0 %v277
  %381 = vmatprep.subr.bf16.mxu0 0
  %382 = vmatpush2.bf16.msra.mxu0 %v276
  %383 = vmatprep.subr.bf16.mxu0 0
  %384 = vmatpush2.bf16.msra.mxu0 %v275
  %385 = vmatprep.subr.bf16.mxu0 0
  %386 = vmatpush2.bf16.msra.mxu0 %v274
  %387 = vmatprep.mubr.bf16.mxu0 %v117
  %388 = vmatmul.mubr.bf16.gmra.mxu0 %v116
  %v389 = vpop.f32.mrf.mxu0
  %v390 = vadd.f32 %v349, %v389
  %v391 = vpop.f32.mrf.mxu0
  %v392 = vpop.f32.mrf.mxu0
  %v393 = vadd.f32 %v352, %v392
  %v394 = vpop.f32.mrf.mxu0
  %395 = vdwg.mxu0
  %v396 = vmax.f32 %v390, 0.0
  %v397 = vmax.f32 %v393, 0.0
  %v398 = vpack.c.bf16 %v397, %v396
  %v399 = vld [vmem:[%s3] sm:$0xf]
  %v400 = vld [vmem:[%s3 + $0x4] sm:$0xf]
  %v401 = vld [vmem:[%s3 + $0x8] sm:$0xf]
  %v402 = vld [vmem:[%s3 + $0xc] sm:$0xf]
  %v403 = vld [vmem:[%s3 + $0x10] sm:$0xf]
  %v404 = vld [vmem:[%s3 + $0x14] sm:$0xf]
  %v405 = vld [vmem:[%s3 + $0x18] sm:$0xf]
  %v406 = vld [vmem:[%s3 + $0x1c] sm:$0xf]
  %v407 = vld [vmem:[%s3 + $0x20] sm:$0xf]
  %v408 = vld [vmem:[%s3 + $0x24] sm:$0xf]
  %v409 = vld [vmem:[%s3 + $0x28] sm:$0xf]
  %v410 = vld [vmem:[%s3 + $0x2c] sm:$0xf]
  %v411 = vld [vmem:[%s3 + $0x30] sm:$0xf]
  %v412 = vld [vmem:[%s3 + $0x34] sm:$0xf]
  %v413 = vld [vmem:[%s3 + $0x38] sm:$0xf]
  %v414 = vld [vmem:[%s3 + $0x3c] sm:$0xf]
  %v415 = vld [vmem:[%s4] sm:$0x1]
  %v417 = vlaneseq
  %v418 = vshrl.u32 %v417, 7
  %v419 = vsub.s32 0, %v418
  %v420 = vrot.slane %v415, %v419
  %v438 = vunpack.c.l.b16 %v399
  %v439 = vunpack.c.l.b16 %v400
  %v440 = vunpack.c.l.b16 %v401
  %v441 = vunpack.c.l.b16 %v402
  %v442 = vunpack.c.l.b16 %v403
  %v443 = vunpack.c.l.b16 %v404
  %v444 = vunpack.c.l.b16 %v405
  %v445 = vunpack.c.l.b16 %v406
  %v446 = vunpack.c.l.b16 %v407
  %v447 = vunpack.c.l.b16 %v408
  %v448 = vunpack.c.l.b16 %v409
  %v449 = vunpack.c.l.b16 %v410
  %v450 = vunpack.c.l.b16 %v411
  %v451 = vunpack.c.l.b16 %v412
  %v452 = vunpack.c.l.b16 %v413
  %v453 = vunpack.c.l.b16 %v414
  %v454 = vpack.c.b16 %v439, %v438
  %v455 = vpack.c.b16 %v441, %v440
  %v456 = vpack.c.b16 %v443, %v442
  %v457 = vpack.c.b16 %v445, %v444
  %v458 = vpack.c.b16 %v447, %v446
  %v459 = vpack.c.b16 %v449, %v448
  %v460 = vpack.c.b16 %v451, %v450
  %v461 = vpack.c.b16 %v453, %v452
  %470 = vmatprep.subr.bf16.mxu0 0
  %471 = vmatpush1.bf16.msra.mxu0 %v461
  %472 = vmatprep.subr.bf16.mxu0 0
  %473 = vmatpush1.bf16.msra.mxu0 %v460
  %474 = vmatprep.subr.bf16.mxu0 0
  %475 = vmatpush1.bf16.msra.mxu0 %v459
  %476 = vmatprep.subr.bf16.mxu0 0
  %477 = vmatpush1.bf16.msra.mxu0 %v458
  %478 = vmatprep.subr.bf16.mxu0 0
  %479 = vmatpush1.bf16.msra.mxu0 %v457
  %480 = vmatprep.subr.bf16.mxu0 0
  %481 = vmatpush1.bf16.msra.mxu0 %v456
  %482 = vmatprep.subr.bf16.mxu0 0
  %483 = vmatpush1.bf16.msra.mxu0 %v455
  %484 = vmatprep.subr.bf16.mxu0 0
  %485 = vmatpush1.bf16.msra.mxu0 %v454
  %486 = vmatprep.subr.bf16.mxu0 0
  %487 = vmatpush2.bf16.msra.mxu0 0
  %488 = vmatprep.subr.bf16.mxu0 0
  %489 = vmatpush2.bf16.msra.mxu0 0
  %490 = vmatprep.subr.bf16.mxu0 0
  %491 = vmatpush2.bf16.msra.mxu0 0
  %492 = vmatprep.subr.bf16.mxu0 0
  %493 = vmatpush2.bf16.msra.mxu0 0
  %494 = vmatprep.subr.bf16.mxu0 0
  %495 = vmatpush2.bf16.msra.mxu0 0
  %496 = vmatprep.subr.bf16.mxu0 0
  %497 = vmatpush2.bf16.msra.mxu0 0
  %498 = vmatprep.subr.bf16.mxu0 0
  %499 = vmatpush2.bf16.msra.mxu0 0
  %500 = vmatprep.subr.bf16.mxu0 0
  %501 = vmatpush2.bf16.msra.mxu0 0
  %502 = vmatprep.mubr.bf16.mxu0 0
  %503 = vmatmul.mubr.bf16.gmra.mxu0 %v398
  %v504 = vpop.f32.mrf.mxu0
  %v505 = vadd.f32 %v420, %v504
  %v506 = vpop.f32.mrf.mxu0
  %v507 = vpop.f32.mrf.mxu0
  %v508 = vadd.f32 %v420, %v507
  %v509 = vpop.f32.mrf.mxu0
  %510 = vdwg.mxu0
  %v511 = vmax.f32 %v505, 0.0
  %v512 = vmax.f32 %v508, 0.0
  %v513 = vpack.c.bf16 %v512, %v511
  %v514 = vld [vmem:[%s5] sm:$0xf]
  %v515 = vld [vmem:[%s5 + $0x4] sm:$0xf]
  %v516 = vld [vmem:[%s5 + $0x8] sm:$0xf]
  %v517 = vld [vmem:[%s5 + $0xc] sm:$0xf]
  %v518 = vld [vmem:[%s5 + $0x10] sm:$0xf]
  %v519 = vld [vmem:[%s5 + $0x14] sm:$0xf]
  %v520 = vld [vmem:[%s5 + $0x18] sm:$0xf]
  %v521 = vld [vmem:[%s5 + $0x1c] sm:$0xf]
  %v522 = vld [vmem:[%s5 + $0x20] sm:$0xf]
  %v523 = vld [vmem:[%s5 + $0x24] sm:$0xf]
  %v524 = vld [vmem:[%s5 + $0x28] sm:$0xf]
  %v525 = vld [vmem:[%s5 + $0x2c] sm:$0xf]
  %v526 = vld [vmem:[%s5 + $0x30] sm:$0xf]
  %v527 = vld [vmem:[%s5 + $0x34] sm:$0xf]
  %v528 = vld [vmem:[%s5 + $0x38] sm:$0xf]
  %v529 = vld [vmem:[%s5 + $0x3c] sm:$0xf]
  %v530 = vld [vmem:[%s6] sm:$0x1]
  %v532 = vlaneseq
  %v533 = vshrl.u32 %v532, 7
  %v534 = vsub.s32 0, %v533
  %v535 = vrot.slane %v530, %v534
  %v553 = vunpack.c.l.b16 %v514
  %v554 = vunpack.c.l.b16 %v515
  %v555 = vunpack.c.l.b16 %v516
  %v556 = vunpack.c.l.b16 %v517
  %v557 = vunpack.c.l.b16 %v518
  %v558 = vunpack.c.l.b16 %v519
  %v559 = vunpack.c.l.b16 %v520
  %v560 = vunpack.c.l.b16 %v521
  %v561 = vunpack.c.l.b16 %v522
  %v562 = vunpack.c.l.b16 %v523
  %v563 = vunpack.c.l.b16 %v524
  %v564 = vunpack.c.l.b16 %v525
  %v565 = vunpack.c.l.b16 %v526
  %v566 = vunpack.c.l.b16 %v527
  %v567 = vunpack.c.l.b16 %v528
  %v568 = vunpack.c.l.b16 %v529
  %v569 = vpack.c.b16 %v554, %v553
  %v570 = vpack.c.b16 %v556, %v555
  %v571 = vpack.c.b16 %v558, %v557
  %v572 = vpack.c.b16 %v560, %v559
  %v573 = vpack.c.b16 %v562, %v561
  %v574 = vpack.c.b16 %v564, %v563
  %v575 = vpack.c.b16 %v566, %v565
  %v576 = vpack.c.b16 %v568, %v567
  %585 = vmatprep.subr.bf16.mxu0 0
  %586 = vmatpush1.bf16.msra.mxu0 %v576
  %587 = vmatprep.subr.bf16.mxu0 0
  %588 = vmatpush1.bf16.msra.mxu0 %v575
  %589 = vmatprep.subr.bf16.mxu0 0
  %590 = vmatpush1.bf16.msra.mxu0 %v574
  %591 = vmatprep.subr.bf16.mxu0 0
  %592 = vmatpush1.bf16.msra.mxu0 %v573
  %593 = vmatprep.subr.bf16.mxu0 0
  %594 = vmatpush1.bf16.msra.mxu0 %v572
  %595 = vmatprep.subr.bf16.mxu0 0
  %596 = vmatpush1.bf16.msra.mxu0 %v571
  %597 = vmatprep.subr.bf16.mxu0 0
  %598 = vmatpush1.bf16.msra.mxu0 %v570
  %599 = vmatprep.subr.bf16.mxu0 0
  %600 = vmatpush1.bf16.msra.mxu0 %v569
  %601 = vmatprep.subr.bf16.mxu0 0
  %602 = vmatpush2.bf16.msra.mxu0 0
  %603 = vmatprep.subr.bf16.mxu0 0
  %604 = vmatpush2.bf16.msra.mxu0 0
  %605 = vmatprep.subr.bf16.mxu0 0
  %606 = vmatpush2.bf16.msra.mxu0 0
  %607 = vmatprep.subr.bf16.mxu0 0
  %608 = vmatpush2.bf16.msra.mxu0 0
  %609 = vmatprep.subr.bf16.mxu0 0
  %610 = vmatpush2.bf16.msra.mxu0 0
  %611 = vmatprep.subr.bf16.mxu0 0
  %612 = vmatpush2.bf16.msra.mxu0 0
  %613 = vmatprep.subr.bf16.mxu0 0
  %614 = vmatpush2.bf16.msra.mxu0 0
  %615 = vmatprep.subr.bf16.mxu0 0
  %616 = vmatpush2.bf16.msra.mxu0 0
  %617 = vmatprep.mubr.bf16.mxu0 0
  %618 = vmatmul.mubr.bf16.gmra.mxu0 %v513
  %v619 = vpop.f32.mrf.mxu0
  %v620 = vadd.f32 %v535, %v619
  %v621 = vpop.f32.mrf.mxu0
  %v622 = vpop.f32.mrf.mxu0
  %v623 = vadd.f32 %v535, %v622
  %v624 = vpop.f32.mrf.mxu0
  %625 = vdwg.mxu0
  %626 = vst [vmem:[%s7] sm:$0xff] %v620
  %627 = vst [vmem:[%s7 + $0x8] sm:$0xff] %v623
  // Predicated region
  $region30: #{cnn_classifier_forward.9} parent=0 // pred_check
    _
  $region31: #{cnn_classifier_forward.9} parent=0 // pred_check_branch
    %629 = sbr.rel (0) target = $region33
  $region32: #{cnn_classifier_forward.9} parent=0 // pred_region
    _
  $region33: #{cnn_classifier_forward.9} parent=0 // pred_fallthru
    _
  // Predicated region
  $region34: #{cnn_classifier_forward.9} parent=0 // pred_check
    _
  $region35: #{cnn_classifier_forward.9} parent=0 // pred_check_branch
    %631 = sbr.rel (0) target = $region37
  $region36: #{cnn_classifier_forward.9} parent=0 // pred_region
    _
  $region37: #{cnn_classifier_forward.9} parent=0 // pred_fallthru
    _

</llo_original>
